<compile_context>
chip_gen: v6e
topology: v6e:2x2x1
jax: 0.10.0
libtpu: 0.0.40
codegen_flags: <defaults>
</compile_context>

<pallas_src>
import functools

import jax
import jax.numpy as jnp
from jax import lax
from jax.experimental import pallas as pl
from jax.experimental.pallas import tpu as pltpu

BN_EPS = 1e-5


# ------------------------------ fused kernel -------------------------------

def _fused_ir_kernel(*refs, has_expand, stride):
    """One (batch, row-block) step of the fused InvertedResidual forward.

    refs (in order):
      x_ref     : (Hpad, Wpad, Cin)    zero-padded input image (pad=2 if the
                                       expand stage exists, else pad=1)
      [wexp_ref : (Cin, Chid)          expand 1x1 weight, BN scale folded in
       sexp_ref : (1, Chid)            expand BN shift                      ]
      kdw_ref   : (9, Chid)            depthwise 3x3 weight, BN scale folded
      sdw_ref   : (1, Chid)            depthwise BN shift
      wproj_ref : (Chid, Cout)         project 1x1 weight, BN scale folded
      sproj_ref : (1, Cout)            project BN shift
      o_ref     : (Rblk, Wd + 2, Cout) core rows of the final output (incl.
                                       left / right border columns)
      h_scr     : (Nwin, Wpad, Chid)   VMEM scratch holding the hidden rows
                                       for this block (never written to HBM)
    """
    if has_expand:
        (x_ref, wexp_ref, sexp_ref, kdw_ref, sdw_ref, wproj_ref, sproj_ref,
         o_ref, h_scr) = refs
    else:
        (x_ref, kdw_ref, sdw_ref, wproj_ref, sproj_ref, o_ref, h_scr) = refs

    hpad, wpad, _ = x_ref.shape
    rblk, wd_p2, _ = o_ref.shape
    wd = wd_p2 - 2
    nwin, _, chid = h_scr.shape

    # First row (in zero-padded-hidden coordinates) needed by this row block.
    j0 = pl.program_id(1) * (rblk * stride)

    # Columns 0 / Wpad-1 belong to the depthwise zero-pad ring -> force to 0.
    col_ids = lax.broadcasted_iota(jnp.int32, (wpad, 1), 0)
    col_keep = jnp.where((col_ids == 0) | (col_ids == wpad - 1), 0.0, 1.0)

    kdw = kdw_ref[...]          # (9, Chid)   f32, BN scale folded in
    sdw = sdw_ref[...]          # (1, Chid)   f32
    wproj = wproj_ref[...]      # (Chid, Cout) native dtype
    sproj = sproj_ref[...]      # (1, Cout)   f32
    if has_expand:
        wexp = wexp_ref[...]    # (Cin, Chid) native dtype
        sexp = sexp_ref[...]    # (1, Chid)   f32

    # ---- stage 1: expand 1x1 + BN + ReLU6 for this block's row window.
    # The wrapper zero-padded x, so expand(0) == clip(shift, 0, 6) reproduces
    # the 1-pixel border of the PyTorch Conv1x1(pad=1) block exactly; only the
    # outermost ring (the depthwise zero pad) must be forced back to zero.
    for t in range(nwin):
        j = j0 + t                                   # global padded-hidden row
        xrow = x_ref[j]                              # (Wpad, Cin), native dtype
        if has_expand:
            h = jnp.dot(xrow, wexp, preferred_element_type=jnp.float32)
            h = jnp.clip(h + sexp, 0.0, 6.0)
        else:
            h = xrow.astype(jnp.float32)
        row_keep = jnp.where((j == 0) | (j == hpad - 1), 0.0, 1.0)
        h_scr[t] = h * (col_keep * row_keep)

    # ---- stages 2 + 3: depthwise 3x3 + BN + ReLU6, project 1x1 + BN + ReLU6.
    border = jnp.clip(sproj, 0.0, 6.0).astype(o_ref.dtype)      # (1, Cout)
    for t in range(rblk):
        acc = jnp.zeros((wd, chid), jnp.float32)
        for dh in range(3):
            hrow = h_scr[stride * t + dh]                       # (Wpad, Chid)
            for dc in range(3):
                if stride == 1:
                    patch = hrow[dc:dc + wd, :]
                else:
                    patch = lax.slice(hrow, (dc, 0),
                                      (dc + stride * (wd - 1) + 1, chid),
                                      (stride, 1))
                acc = acc + patch * kdw[3 * dh + dc:3 * dh + dc + 1, :]
        d = jnp.clip(acc + sdw, 0.0, 6.0)                       # (Wd, Chid)
        p = jnp.dot(d.astype(wproj.dtype), wproj,
                    preferred_element_type=jnp.float32)
        p = jnp.clip(p + sproj, 0.0, 6.0).astype(o_ref.dtype)   # (Wd, Cout)
        o_ref[t, 1:wd + 1, :] = p
        o_ref[t, 0:1, :] = border
        o_ref[t, wd + 1:wd + 2, :] = border


# --------------------------------- wrapper ---------------------------------

def _fold_bn(bn):
    scale = bn["gamma"] / jnp.sqrt(bn["var"] + BN_EPS)
    shift = bn["beta"] - bn["mean"] * scale
    return scale.astype(jnp.float32), shift.astype(jnp.float32)


def _largest_divisor_leq(n, upper):
    for cand in range(min(upper, n), 0, -1):
        if n % cand == 0:
            return cand
    return 1


def inverted_residual_forward(x_nchw, params, *, width_multiplier=1, stride=1,
                              block_rows=8):
    """Fused InvertedResidual forward.  x_nchw: (N, Cin, H, W) -> NCHW out."""
    x = jnp.transpose(x_nchw, (0, 2, 3, 1))             # NCHW -> NHWC
    n, h, w, cin = x.shape
    has_expand = width_multiplier != 1

    # Single zero pad of the small input: 2 px when the expand 1x1 exists
    # (its own pad=1 is reproduced by expand(0), plus 1 px depthwise zero pad),
    # 1 px otherwise (depthwise zero pad only).
    pad = 2 if has_expand else 1
    xp = jnp.pad(x, ((0, 0), (pad, pad), (pad, pad), (0, 0)))
    hpad, wpad = h + 2 * pad, w + 2 * pad

    hd = (hpad - 3) // stride + 1                        # depthwise out rows
    wd = (wpad - 3) // stride + 1                        # depthwise out cols
    rblk = _largest_divisor_leq(hd, block_rows)          # rows per grid step
    n_rb = hd // rblk
    nwin = stride * (rblk - 1) + 3                       # rows incl. 2-row halo

    # Fold BN scales into the conv weights; kernel only adds the shift.
    if has_expand:
        sc_e, sh_e = _fold_bn(params["expand_bn"])
        w_exp = (params["expand_w"] * sc_e[None, :]).astype(x.dtype)
        sh_exp = sh_e.reshape(1, -1)
        chid = w_exp.shape[1]
    else:
        chid = cin
    sc_d, sh_d = _fold_bn(params["dw_bn"])
    k_dw = (params["dw_w"].reshape(9, chid) * sc_d[None, :]).astype(jnp.float32)
    sh_dw = sh_d.reshape(1, -1)
    sc_p, sh_p = _fold_bn(params["proj_bn"])
    w_proj = (params["proj_w"] * sc_p[None, :]).astype(x.dtype)
    sh_proj = sh_p.reshape(1, -1)
    cout = w_proj.shape[1]

    in_specs = [pl.BlockSpec((None, hpad, wpad, cin), lambda b, r: (b, 0, 0, 0))]
    args = [xp]
    if has_expand:
        in_specs += [pl.BlockSpec((cin, chid), lambda b, r: (0, 0)),
                     pl.BlockSpec((1, chid), lambda b, r: (0, 0))]
        args += [w_exp, sh_exp]
    in_specs += [pl.BlockSpec((9, chid), lambda b, r: (0, 0)),
                 pl.BlockSpec((1, chid), lambda b, r: (0, 0)),
                 pl.BlockSpec((chid, cout), lambda b, r: (0, 0)),
                 pl.BlockSpec((1, cout), lambda b, r: (0, 0))]
    args += [k_dw, sh_dw, w_proj, sh_proj]
    # TODO(synk): the weight/shift blocks are grid-invariant; single-buffering
    # them (pipeline_mode=pl.Buffered(1)) would reclaim a little VMEM.

    kernel = functools.partial(_fused_ir_kernel,
                               has_expand=has_expand, stride=stride)
    core = pl.pallas_call(
        kernel,
        out_shape=jax.ShapeDtypeStruct((n, hd, wd + 2, cout), x.dtype),
        grid_spec=pltpu.PrefetchScalarGridSpec(
            num_scalar_prefetch=0,
            grid=(n, n_rb),
            in_specs=in_specs,
            out_specs=pl.BlockSpec((None, rblk, wd + 2, cout),
                                   lambda b, r: (b, r, 0, 0)),
            scratch_shapes=[pltpu.VMEM((nwin, wpad, chid), jnp.float32)],
        ),
        compiler_params=pltpu.CompilerParams(
            dimension_semantics=("parallel", "parallel")),
    )(*args)

    # The project 1x1 has padding=1, so the outermost ring of the final output
    # is the constant clip(shift, 0, 6); the kernel wrote the left / right
    # border columns, only the top / bottom border rows are added here.
    border = jnp.clip(sh_proj, 0.0, 6.0).astype(x.dtype).reshape(1, 1, 1, cout)
    brow = jnp.broadcast_to(border, (n, 1, wd + 2, cout))
    out_nhwc = jnp.concatenate([brow, core, brow], axis=1)

    out = jnp.transpose(out_nhwc, (0, 3, 1, 2))          # NHWC -> NCHW
    if out.shape[1:] == x_nchw.shape[1:]:                # residual, as in PyTorch
        out = out + x_nchw
    return out


# ------------------------ parameter init (synthetic) ------------------------

def _init_bn(key, c):
    k1, k2, k3, k4 = jax.random.split(key, 4)
    return dict(
        gamma=jax.random.uniform(k1, (c,), minval=0.5, maxval=1.5),
        beta=jax.random.normal(k2, (c,)) * 0.1,
        mean=jax.random.normal(k3, (c,)) * 0.1,
        var=jax.random.uniform(k4, (c,), minval=0.5, maxval=1.5),
    )


def init_inverted_residual_params(key, ch_in, ch_out, width_multiplier=1):
    hidden = width_multiplier * ch_in
    keys = jax.random.split(key, 6)
    params = {}
    if width_multiplier != 1:
        params["expand_w"] = jax.random.normal(keys[0], (ch_in, hidden)) * 0.2
        params["expand_bn"] = _init_bn(keys[1], hidden)
    params["dw_w"] = jax.random.normal(keys[2], (3, 3, hidden)) * 0.2
    params["dw_bn"] = _init_bn(keys[3], hidden)
    params["proj_w"] = jax.random.normal(keys[4], (hidden, ch_out)) * 0.2
    params["proj_bn"] = _init_bn(keys[5], ch_out)
    return params


# ------------------------------ pure-JAX reference --------------------------

def _ref_conv1x1(x, w, bn, padding=1):
    y = lax.conv_general_dilated(
        x, w.reshape(1, 1, *w.shape), (1, 1),
        [(padding, padding), (padding, padding)],
        dimension_numbers=("NHWC", "HWIO", "NHWC"))
    scale, shift = _fold_bn(bn)
    return jnp.clip(y * scale + shift, 0.0, 6.0)


def _ref_dw3x3(x, w, bn, stride=1, padding=1):
    c = x.shape[-1]
    y = lax.conv_general_dilated(
        x, w.reshape(3, 3, 1, c), (stride, stride),
        [(padding, padding), (padding, padding)],
        dimension_numbers=("NHWC", "HWIO", "NHWC"),
        feature_group_count=c)
    scale, shift = _fold_bn(bn)
    return jnp.clip(y * scale + shift, 0.0, 6.0)


def ref_forward(x_nchw, params, *, width_multiplier=1, stride=1):
    x = jnp.transpose(x_nchw, (0, 2, 3, 1))
    h = x
    if width_multiplier != 1:
        h = _ref_conv1x1(h, params["expand_w"], params["expand_bn"])
    h = _ref_dw3x3(h, params["dw_w"], params["dw_bn"], stride=stride)
    h = _ref_conv1x1(h, params["proj_w"], params["proj_bn"])
    out = jnp.transpose(h, (0, 3, 1, 2))
    if out.shape[1:] == x_nchw.shape[1:]:
        out = out + x_nchw
    return out


# ----------------------------------- main -----------------------------------

def _run_case(key, *, n, ch_in, ch_out, width_multiplier, stride, hw):
    kx, kp = jax.random.split(key)
    x = jax.random.normal(kx, (n, ch_in, hw, hw), dtype=jnp.float32)  # NCHW
    params = init_inverted_residual_params(kp, ch_in, ch_out, width_multiplier)

    fwd = jax.jit(functools.partial(inverted_residual_forward,
                                    width_multiplier=width_multiplier,
                                    stride=stride))
    out = jax.block_until_ready(fwd(x, params))
    ref = jax.block_until_ready(
        ref_forward(x, params, width_multiplier=width_multiplier, stride=stride))

    assert out.shape == ref.shape, (out.shape, ref.shape)
    err = float(jnp.max(jnp.abs(out - ref)))
    assert jnp.allclose(out, ref, atol=1e-4, rtol=1e-4), err


if __name__ == "__main__":
    key = jax.random.PRNGKey(0)
    k1, k2 = jax.random.split(key)
    # Expand path (width_multiplier != 1), stride 1.
    _run_case(k1, n=2, ch_in=4, ch_out=8, width_multiplier=2, stride=1, hw=16)
    # No-expand path (width_multiplier == 1), stride 2.
    _run_case(k2, n=2, ch_in=8, ch_out=8, width_multiplier=1, stride=2, hw=16)
    print("KERNEL_OK")
</pallas_src>

<mosaic_0001>
module attributes {stable_mosaic.version = 11 : i64} {
  func.func @_fused_ir_kernel(%arg0: i32, %arg1: i32, %arg2: memref<1x20x20x4xf32, #tpu.memory_space<vmem>>, %arg3: memref<4x8xf32, #tpu.memory_space<vmem>>, %arg4: memref<1x8xf32, #tpu.memory_space<vmem>>, %arg5: memref<9x8xf32, #tpu.memory_space<vmem>>, %arg6: memref<1x8xf32, #tpu.memory_space<vmem>>, %arg7: memref<8x8xf32, #tpu.memory_space<vmem>>, %arg8: memref<1x8xf32, #tpu.memory_space<vmem>>, %arg9: memref<1x6x20x8xf32, #tpu.memory_space<vmem>>, %arg10: memref<8x20x8xf32, #tpu.memory_space<vmem>>) attributes {dimension_semantics = [#tpu.dimension_semantics<parallel>, #tpu.dimension_semantics<parallel>], iteration_bounds = array<i64: 2, 3>, scalar_prefetch = 0 : i64, scratch_operands = 1 : i64, tpu.core_type = #tpu.core_type<tc>, window_params = [{transform_indices = @transform_0, window_bounds = array<i64: 1, 20, 20, 4>}, {pipeline_mode = #tpu.pipeline_mode<synchronous>, transform_indices = @transform_1, window_bounds = array<i64: 4, 8>}, {pipeline_mode = #tpu.pipeline_mode<synchronous>, transform_indices = @transform_2, window_bounds = array<i64: 1, 8>}, {pipeline_mode = #tpu.pipeline_mode<synchronous>, transform_indices = @transform_3, window_bounds = array<i64: 9, 8>}, {pipeline_mode = #tpu.pipeline_mode<synchronous>, transform_indices = @transform_4, window_bounds = array<i64: 1, 8>}, {pipeline_mode = #tpu.pipeline_mode<synchronous>, transform_indices = @transform_5, window_bounds = array<i64: 8, 8>}, {pipeline_mode = #tpu.pipeline_mode<synchronous>, transform_indices = @transform_6, window_bounds = array<i64: 1, 8>}, {transform_indices = @transform_7, window_bounds = array<i64: 1, 6, 20, 8>}]} {
    %c6_i32 = arith.constant 6 : i32
    %0 = arith.muli %arg1, %c6_i32 : i32
    %1 = tpu.iota {dimensions = array<i32: 0>} : vector<20x1xi32>
    %c0_i32 = arith.constant 0 : i32
    %2 = vector.broadcast %c0_i32 : i32 to vector<20x1xi32>
    %3 = arith.cmpi eq, %1, %2 : vector<20x1xi32>
    %c19_i32 = arith.constant 19 : i32
    %4 = vector.broadcast %c19_i32 : i32 to vector<20x1xi32>
    %5 = arith.cmpi eq, %1, %4 : vector<20x1xi32>
    %6 = arith.ori %3, %5 : vector<20x1xi1>
    %cst = arith.constant 0.000000e+00 : f32
    %cst_0 = arith.constant 1.000000e+00 : f32
    %7 = vector.broadcast %cst : f32 to vector<20x1xf32>
    %8 = vector.broadcast %cst_0 : f32 to vector<20x1xf32>
    %9 = arith.select %6, %7, %8 : vector<20x1xi1>, vector<20x1xf32>
    %c0 = arith.constant 0 : index
    %c0_1 = arith.constant 0 : index
    %10 = vector.load %arg5[%c0, %c0_1] : memref<9x8xf32, #tpu.memory_space<vmem>>, vector<9x8xf32>
    %c0_2 = arith.constant 0 : index
    %c0_3 = arith.constant 0 : index
    %11 = vector.load %arg6[%c0_2, %c0_3] : memref<1x8xf32, #tpu.memory_space<vmem>>, vector<1x8xf32>
    %c0_4 = arith.constant 0 : index
    %c0_5 = arith.constant 0 : index
    %12 = vector.load %arg7[%c0_4, %c0_5] : memref<8x8xf32, #tpu.memory_space<vmem>>, vector<8x8xf32>
    %c0_6 = arith.constant 0 : index
    %c0_7 = arith.constant 0 : index
    %13 = vector.load %arg8[%c0_6, %c0_7] : memref<1x8xf32, #tpu.memory_space<vmem>>, vector<1x8xf32>
    %c0_8 = arith.constant 0 : index
    %c0_9 = arith.constant 0 : index
    %14 = vector.load %arg3[%c0_8, %c0_9] : memref<4x8xf32, #tpu.memory_space<vmem>>, vector<4x8xf32>
    %c0_10 = arith.constant 0 : index
    %c0_11 = arith.constant 0 : index
    %15 = vector.load %arg4[%c0_10, %c0_11] : memref<1x8xf32, #tpu.memory_space<vmem>>, vector<1x8xf32>
    %c0_i32_12 = arith.constant 0 : i32
    %16 = arith.addi %0, %c0_i32_12 : i32
    %c0_13 = arith.constant 0 : index
    %17 = arith.index_cast %16 : i32 to index
    %c0_14 = arith.constant 0 : index
    %c0_15 = arith.constant 0 : index
    %18 = vector.load %arg2[%c0_13, %17, %c0_14, %c0_15] : memref<1x20x20x4xf32, #tpu.memory_space<vmem>>, vector<1x1x20x4xf32>
    %19 = vector.shape_cast %18 : vector<1x1x20x4xf32> to vector<20x4xf32>
    %cst_16 = arith.constant dense<0.000000e+00> : vector<20x8xf32>
    %20 = tpu.matmul %19, %14, %cst_16 {dimension_numbers = #tpu.dot_dimension_numbers<[1], [0], [0], [1], [0, 0, 1, 1], [], []>} : vector<20x4xf32>, vector<4x8xf32>, vector<20x8xf32> -> vector<20x8xf32>
    %21 = vector.broadcast %15 : vector<1x8xf32> to vector<20x8xf32>
    %22 = arith.addf %20, %21 : vector<20x8xf32>
    %cst_17 = arith.constant 0.000000e+00 : f32
    %cst_18 = arith.constant 6.000000e+00 : f32
    %23 = vector.broadcast %cst_17 : f32 to vector<20x8xf32>
    %24 = arith.maximumf %23, %22 : vector<20x8xf32>
    %25 = vector.broadcast %cst_18 : f32 to vector<20x8xf32>
    %26 = arith.minimumf %25, %24 : vector<20x8xf32>
    %c0_i32_19 = arith.constant 0 : i32
    %27 = arith.cmpi eq, %16, %c0_i32_19 : i32
    %c19_i32_20 = arith.constant 19 : i32
    %28 = arith.cmpi eq, %16, %c19_i32_20 : i32
    %29 = arith.ori %27, %28 : i1
    %cst_21 = arith.constant 0.000000e+00 : f32
    %cst_22 = arith.constant 1.000000e+00 : f32
    %30 = arith.select %29, %cst_21, %cst_22 : f32
    %31 = vector.broadcast %30 : f32 to vector<20x1xf32>
    %32 = arith.mulf %9, %31 : vector<20x1xf32>
    %33 = vector.broadcast %32 : vector<20x1xf32> to vector<20x8xf32>
    %34 = arith.mulf %26, %33 : vector<20x8xf32>
    %c0_23 = arith.constant 0 : index
    %c0_24 = arith.constant 0 : index
    %c0_25 = arith.constant 0 : index
    %35 = vector.load %arg10[%c0_23, %c0_24, %c0_25] : memref<8x20x8xf32, #tpu.memory_space<vmem>>, vector<1x20x8xf32>
    %36 = vector.shape_cast %35 : vector<1x20x8xf32> to vector<20x8xf32>
    %37 = vector.shape_cast %34 : vector<20x8xf32> to vector<1x20x8xf32>
    tpu.vector_store %arg10[%c0_23, %c0_24, %c0_25], %37 {strides = array<i32>} : memref<8x20x8xf32, #tpu.memory_space<vmem>>, vector<1x20x8xf32>,
    %c1_i32 = arith.constant 1 : i32
    %38 = arith.addi %0, %c1_i32 : i32
    %c0_26 = arith.constant 0 : index
    %39 = arith.index_cast %38 : i32 to index
    %c0_27 = arith.constant 0 : index
    %c0_28 = arith.constant 0 : index
    %40 = vector.load %arg2[%c0_26, %39, %c0_27, %c0_28] : memref<1x20x20x4xf32, #tpu.memory_space<vmem>>, vector<1x1x20x4xf32>
    %41 = vector.shape_cast %40 : vector<1x1x20x4xf32> to vector<20x4xf32>
    %cst_29 = arith.constant dense<0.000000e+00> : vector<20x8xf32>
    %42 = tpu.matmul %41, %14, %cst_29 {dimension_numbers = #tpu.dot_dimension_numbers<[1], [0], [0], [1], [0, 0, 1, 1], [], []>} : vector<20x4xf32>, vector<4x8xf32>, vector<20x8xf32> -> vector<20x8xf32>
    %43 = vector.broadcast %15 : vector<1x8xf32> to vector<20x8xf32>
    %44 = arith.addf %42, %43 : vector<20x8xf32>
    %cst_30 = arith.constant 0.000000e+00 : f32
    %cst_31 = arith.constant 6.000000e+00 : f32
    %45 = vector.broadcast %cst_30 : f32 to vector<20x8xf32>
    %46 = arith.maximumf %45, %44 : vector<20x8xf32>
    %47 = vector.broadcast %cst_31 : f32 to vector<20x8xf32>
    %48 = arith.minimumf %47, %46 : vector<20x8xf32>
    %c0_i32_32 = arith.constant 0 : i32
    %49 = arith.cmpi eq, %38, %c0_i32_32 : i32
    %c19_i32_33 = arith.constant 19 : i32
    %50 = arith.cmpi eq, %38, %c19_i32_33 : i32
    %51 = arith.ori %49, %50 : i1
    %cst_34 = arith.constant 0.000000e+00 : f32
    %cst_35 = arith.constant 1.000000e+00 : f32
    %52 = arith.select %51, %cst_34, %cst_35 : f32
    %53 = vector.broadcast %52 : f32 to vector<20x1xf32>
    %54 = arith.mulf %9, %53 : vector<20x1xf32>
    %55 = vector.broadcast %54 : vector<20x1xf32> to vector<20x8xf32>
    %56 = arith.mulf %48, %55 : vector<20x8xf32>
    %c1 = arith.constant 1 : index
    %c0_36 = arith.constant 0 : index
    %c0_37 = arith.constant 0 : index
    %57 = vector.load %arg10[%c1, %c0_36, %c0_37] : memref<8x20x8xf32, #tpu.memory_space<vmem>>, vector<1x20x8xf32>
    %58 = vector.shape_cast %57 : vector<1x20x8xf32> to vector<20x8xf32>
    %59 = vector.shape_cast %56 : vector<20x8xf32> to vector<1x20x8xf32>
    tpu.vector_store %arg10[%c1, %c0_36, %c0_37], %59 {strides = array<i32>} : memref<8x20x8xf32, #tpu.memory_space<vmem>>, vector<1x20x8xf32>,
    %c2_i32 = arith.constant 2 : i32
    %60 = arith.addi %0, %c2_i32 : i32
    %c0_38 = arith.constant 0 : index
    %61 = arith.index_cast %60 : i32 to index
    %c0_39 = arith.constant 0 : index
    %c0_40 = arith.constant 0 : index
    %62 = vector.load %arg2[%c0_38, %61, %c0_39, %c0_40] : memref<1x20x20x4xf32, #tpu.memory_space<vmem>>, vector<1x1x20x4xf32>
    %63 = vector.shape_cast %62 : vector<1x1x20x4xf32> to vector<20x4xf32>
    %cst_41 = arith.constant dense<0.000000e+00> : vector<20x8xf32>
    %64 = tpu.matmul %63, %14, %cst_41 {dimension_numbers = #tpu.dot_dimension_numbers<[1], [0], [0], [1], [0, 0, 1, 1], [], []>} : vector<20x4xf32>, vector<4x8xf32>, vector<20x8xf32> -> vector<20x8xf32>
    %65 = vector.broadcast %15 : vector<1x8xf32> to vector<20x8xf32>
    %66 = arith.addf %64, %65 : vector<20x8xf32>
    %cst_42 = arith.constant 0.000000e+00 : f32
    %cst_43 = arith.constant 6.000000e+00 : f32
    %67 = vector.broadcast %cst_42 : f32 to vector<20x8xf32>
    %68 = arith.maximumf %67, %66 : vector<20x8xf32>
    %69 = vector.broadcast %cst_43 : f32 to vector<20x8xf32>
    %70 = arith.minimumf %69, %68 : vector<20x8xf32>
    %c0_i32_44 = arith.constant 0 : i32
    %71 = arith.cmpi eq, %60, %c0_i32_44 : i32
    %c19_i32_45 = arith.constant 19 : i32
    %72 = arith.cmpi eq, %60, %c19_i32_45 : i32
    %73 = arith.ori %71, %72 : i1
    %cst_46 = arith.constant 0.000000e+00 : f32
    %cst_47 = arith.constant 1.000000e+00 : f32
    %74 = arith.select %73, %cst_46, %cst_47 : f32
    %75 = vector.broadcast %74 : f32 to vector<20x1xf32>
    %76 = arith.mulf %9, %75 : vector<20x1xf32>
    %77 = vector.broadcast %76 : vector<20x1xf32> to vector<20x8xf32>
    %78 = arith.mulf %70, %77 : vector<20x8xf32>
    %c2 = arith.constant 2 : index
    %c0_48 = arith.constant 0 : index
    %c0_49 = arith.constant 0 : index
    %79 = vector.load %arg10[%c2, %c0_48, %c0_49] : memref<8x20x8xf32, #tpu.memory_space<vmem>>, vector<1x20x8xf32>
    %80 = vector.shape_cast %79 : vector<1x20x8xf32> to vector<20x8xf32>
    %81 = vector.shape_cast %78 : vector<20x8xf32> to vector<1x20x8xf32>
    tpu.vector_store %arg10[%c2, %c0_48, %c0_49], %81 {strides = array<i32>} : memref<8x20x8xf32, #tpu.memory_space<vmem>>, vector<1x20x8xf32>,
    %c3_i32 = arith.constant 3 : i32
    %82 = arith.addi %0, %c3_i32 : i32
    %c0_50 = arith.constant 0 : index
    %83 = arith.index_cast %82 : i32 to index
    %c0_51 = arith.constant 0 : index
    %c0_52 = arith.constant 0 : index
    %84 = vector.load %arg2[%c0_50, %83, %c0_51, %c0_52] : memref<1x20x20x4xf32, #tpu.memory_space<vmem>>, vector<1x1x20x4xf32>
    %85 = vector.shape_cast %84 : vector<1x1x20x4xf32> to vector<20x4xf32>
    %cst_53 = arith.constant dense<0.000000e+00> : vector<20x8xf32>
    %86 = tpu.matmul %85, %14, %cst_53 {dimension_numbers = #tpu.dot_dimension_numbers<[1], [0], [0], [1], [0, 0, 1, 1], [], []>} : vector<20x4xf32>, vector<4x8xf32>, vector<20x8xf32> -> vector<20x8xf32>
    %87 = vector.broadcast %15 : vector<1x8xf32> to vector<20x8xf32>
    %88 = arith.addf %86, %87 : vector<20x8xf32>
    %cst_54 = arith.constant 0.000000e+00 : f32
    %cst_55 = arith.constant 6.000000e+00 : f32
    %89 = vector.broadcast %cst_54 : f32 to vector<20x8xf32>
    %90 = arith.maximumf %89, %88 : vector<20x8xf32>
    %91 = vector.broadcast %cst_55 : f32 to vector<20x8xf32>
    %92 = arith.minimumf %91, %90 : vector<20x8xf32>
    %c0_i32_56 = arith.constant 0 : i32
    %93 = arith.cmpi eq, %82, %c0_i32_56 : i32
    %c19_i32_57 = arith.constant 19 : i32
    %94 = arith.cmpi eq, %82, %c19_i32_57 : i32
    %95 = arith.ori %93, %94 : i1
    %cst_58 = arith.constant 0.000000e+00 : f32
    %cst_59 = arith.constant 1.000000e+00 : f32
    %96 = arith.select %95, %cst_58, %cst_59 : f32
    %97 = vector.broadcast %96 : f32 to vector<20x1xf32>
    %98 = arith.mulf %9, %97 : vector<20x1xf32>
    %99 = vector.broadcast %98 : vector<20x1xf32> to vector<20x8xf32>
    %100 = arith.mulf %92, %99 : vector<20x8xf32>
    %c3 = arith.constant 3 : index
    %c0_60 = arith.constant 0 : index
    %c0_61 = arith.constant 0 : index
    %101 = vector.load %arg10[%c3, %c0_60, %c0_61] : memref<8x20x8xf32, #tpu.memory_space<vmem>>, vector<1x20x8xf32>
    %102 = vector.shape_cast %101 : vector<1x20x8xf32> to vector<20x8xf32>
    %103 = vector.shape_cast %100 : vector<20x8xf32> to vector<1x20x8xf32>
    tpu.vector_store %arg10[%c3, %c0_60, %c0_61], %103 {strides = array<i32>} : memref<8x20x8xf32, #tpu.memory_space<vmem>>, vector<1x20x8xf32>,
    %c4_i32 = arith.constant 4 : i32
    %104 = arith.addi %0, %c4_i32 : i32
    %c0_62 = arith.constant 0 : index
    %105 = arith.index_cast %104 : i32 to index
    %c0_63 = arith.constant 0 : index
    %c0_64 = arith.constant 0 : index
    %106 = vector.load %arg2[%c0_62, %105, %c0_63, %c0_64] : memref<1x20x20x4xf32, #tpu.memory_space<vmem>>, vector<1x1x20x4xf32>
    %107 = vector.shape_cast %106 : vector<1x1x20x4xf32> to vector<20x4xf32>
    %cst_65 = arith.constant dense<0.000000e+00> : vector<20x8xf32>
    %108 = tpu.matmul %107, %14, %cst_65 {dimension_numbers = #tpu.dot_dimension_numbers<[1], [0], [0], [1], [0, 0, 1, 1], [], []>} : vector<20x4xf32>, vector<4x8xf32>, vector<20x8xf32> -> vector<20x8xf32>
    %109 = vector.broadcast %15 : vector<1x8xf32> to vector<20x8xf32>
    %110 = arith.addf %108, %109 : vector<20x8xf32>
    %cst_66 = arith.constant 0.000000e+00 : f32
    %cst_67 = arith.constant 6.000000e+00 : f32
    %111 = vector.broadcast %cst_66 : f32 to vector<20x8xf32>
    %112 = arith.maximumf %111, %110 : vector<20x8xf32>
    %113 = vector.broadcast %cst_67 : f32 to vector<20x8xf32>
    %114 = arith.minimumf %113, %112 : vector<20x8xf32>
    %c0_i32_68 = arith.constant 0 : i32
    %115 = arith.cmpi eq, %104, %c0_i32_68 : i32
    %c19_i32_69 = arith.constant 19 : i32
    %116 = arith.cmpi eq, %104, %c19_i32_69 : i32
    %117 = arith.ori %115, %116 : i1
    %cst_70 = arith.constant 0.000000e+00 : f32
    %cst_71 = arith.constant 1.000000e+00 : f32
    %118 = arith.select %117, %cst_70, %cst_71 : f32
    %119 = vector.broadcast %118 : f32 to vector<20x1xf32>
    %120 = arith.mulf %9, %119 : vector<20x1xf32>
    %121 = vector.broadcast %120 : vector<20x1xf32> to vector<20x8xf32>
    %122 = arith.mulf %114, %121 : vector<20x8xf32>
    %c4 = arith.constant 4 : index
    %c0_72 = arith.constant 0 : index
    %c0_73 = arith.constant 0 : index
    %123 = vector.load %arg10[%c4, %c0_72, %c0_73] : memref<8x20x8xf32, #tpu.memory_space<vmem>>, vector<1x20x8xf32>
    %124 = vector.shape_cast %123 : vector<1x20x8xf32> to vector<20x8xf32>
    %125 = vector.shape_cast %122 : vector<20x8xf32> to vector<1x20x8xf32>
    tpu.vector_store %arg10[%c4, %c0_72, %c0_73], %125 {strides = array<i32>} : memref<8x20x8xf32, #tpu.memory_space<vmem>>, vector<1x20x8xf32>,
    %c5_i32 = arith.constant 5 : i32
    %126 = arith.addi %0, %c5_i32 : i32
    %c0_74 = arith.constant 0 : index
    %127 = arith.index_cast %126 : i32 to index
    %c0_75 = arith.constant 0 : index
    %c0_76 = arith.constant 0 : index
    %128 = vector.load %arg2[%c0_74, %127, %c0_75, %c0_76] : memref<1x20x20x4xf32, #tpu.memory_space<vmem>>, vector<1x1x20x4xf32>
    %129 = vector.shape_cast %128 : vector<1x1x20x4xf32> to vector<20x4xf32>
    %cst_77 = arith.constant dense<0.000000e+00> : vector<20x8xf32>
    %130 = tpu.matmul %129, %14, %cst_77 {dimension_numbers = #tpu.dot_dimension_numbers<[1], [0], [0], [1], [0, 0, 1, 1], [], []>} : vector<20x4xf32>, vector<4x8xf32>, vector<20x8xf32> -> vector<20x8xf32>
    %131 = vector.broadcast %15 : vector<1x8xf32> to vector<20x8xf32>
    %132 = arith.addf %130, %131 : vector<20x8xf32>
    %cst_78 = arith.constant 0.000000e+00 : f32
    %cst_79 = arith.constant 6.000000e+00 : f32
    %133 = vector.broadcast %cst_78 : f32 to vector<20x8xf32>
    %134 = arith.maximumf %133, %132 : vector<20x8xf32>
    %135 = vector.broadcast %cst_79 : f32 to vector<20x8xf32>
    %136 = arith.minimumf %135, %134 : vector<20x8xf32>
    %c0_i32_80 = arith.constant 0 : i32
    %137 = arith.cmpi eq, %126, %c0_i32_80 : i32
    %c19_i32_81 = arith.constant 19 : i32
    %138 = arith.cmpi eq, %126, %c19_i32_81 : i32
    %139 = arith.ori %137, %138 : i1
    %cst_82 = arith.constant 0.000000e+00 : f32
    %cst_83 = arith.constant 1.000000e+00 : f32
    %140 = arith.select %139, %cst_82, %cst_83 : f32
    %141 = vector.broadcast %140 : f32 to vector<20x1xf32>
    %142 = arith.mulf %9, %141 : vector<20x1xf32>
    %143 = vector.broadcast %142 : vector<20x1xf32> to vector<20x8xf32>
    %144 = arith.mulf %136, %143 : vector<20x8xf32>
    %c5 = arith.constant 5 : index
    %c0_84 = arith.constant 0 : index
    %c0_85 = arith.constant 0 : index
    %145 = vector.load %arg10[%c5, %c0_84, %c0_85] : memref<8x20x8xf32, #tpu.memory_space<vmem>>, vector<1x20x8xf32>
    %146 = vector.shape_cast %145 : vector<1x20x8xf32> to vector<20x8xf32>
    %147 = vector.shape_cast %144 : vector<20x8xf32> to vector<1x20x8xf32>
    tpu.vector_store %arg10[%c5, %c0_84, %c0_85], %147 {strides = array<i32>} : memref<8x20x8xf32, #tpu.memory_space<vmem>>, vector<1x20x8xf32>,
    %c6_i32_86 = arith.constant 6 : i32
    %148 = arith.addi %0, %c6_i32_86 : i32
    %c0_87 = arith.constant 0 : index
    %149 = arith.index_cast %148 : i32 to index
    %c0_88 = arith.constant 0 : index
    %c0_89 = arith.constant 0 : index
    %150 = vector.load %arg2[%c0_87, %149, %c0_88, %c0_89] : memref<1x20x20x4xf32, #tpu.memory_space<vmem>>, vector<1x1x20x4xf32>
    %151 = vector.shape_cast %150 : vector<1x1x20x4xf32> to vector<20x4xf32>
    %cst_90 = arith.constant dense<0.000000e+00> : vector<20x8xf32>
    %152 = tpu.matmul %151, %14, %cst_90 {dimension_numbers = #tpu.dot_dimension_numbers<[1], [0], [0], [1], [0, 0, 1, 1], [], []>} : vector<20x4xf32>, vector<4x8xf32>, vector<20x8xf32> -> vector<20x8xf32>
    %153 = vector.broadcast %15 : vector<1x8xf32> to vector<20x8xf32>
    %154 = arith.addf %152, %153 : vector<20x8xf32>
    %cst_91 = arith.constant 0.000000e+00 : f32
    %cst_92 = arith.constant 6.000000e+00 : f32
    %155 = vector.broadcast %cst_91 : f32 to vector<20x8xf32>
    %156 = arith.maximumf %155, %154 : vector<20x8xf32>
    %157 = vector.broadcast %cst_92 : f32 to vector<20x8xf32>
    %158 = arith.minimumf %157, %156 : vector<20x8xf32>
    %c0_i32_93 = arith.constant 0 : i32
    %159 = arith.cmpi eq, %148, %c0_i32_93 : i32
    %c19_i32_94 = arith.constant 19 : i32
    %160 = arith.cmpi eq, %148, %c19_i32_94 : i32
    %161 = arith.ori %159, %160 : i1
    %cst_95 = arith.constant 0.000000e+00 : f32
    %cst_96 = arith.constant 1.000000e+00 : f32
    %162 = arith.select %161, %cst_95, %cst_96 : f32
    %163 = vector.broadcast %162 : f32 to vector<20x1xf32>
    %164 = arith.mulf %9, %163 : vector<20x1xf32>
    %165 = vector.broadcast %164 : vector<20x1xf32> to vector<20x8xf32>
    %166 = arith.mulf %158, %165 : vector<20x8xf32>
    %c6 = arith.constant 6 : index
    %c0_97 = arith.constant 0 : index
    %c0_98 = arith.constant 0 : index
    %167 = vector.load %arg10[%c6, %c0_97, %c0_98] : memref<8x20x8xf32, #tpu.memory_space<vmem>>, vector<1x20x8xf32>
    %168 = vector.shape_cast %167 : vector<1x20x8xf32> to vector<20x8xf32>
    %169 = vector.shape_cast %166 : vector<20x8xf32> to vector<1x20x8xf32>
    tpu.vector_store %arg10[%c6, %c0_97, %c0_98], %169 {strides = array<i32>} : memref<8x20x8xf32, #tpu.memory_space<vmem>>, vector<1x20x8xf32>,
    %c7_i32 = arith.constant 7 : i32
    %170 = arith.addi %0, %c7_i32 : i32
    %c0_99 = arith.constant 0 : index
    %171 = arith.index_cast %170 : i32 to index
    %c0_100 = arith.constant 0 : index
    %c0_101 = arith.constant 0 : index
    %172 = vector.load %arg2[%c0_99, %171, %c0_100, %c0_101] : memref<1x20x20x4xf32, #tpu.memory_space<vmem>>, vector<1x1x20x4xf32>
    %173 = vector.shape_cast %172 : vector<1x1x20x4xf32> to vector<20x4xf32>
    %cst_102 = arith.constant dense<0.000000e+00> : vector<20x8xf32>
    %174 = tpu.matmul %173, %14, %cst_102 {dimension_numbers = #tpu.dot_dimension_numbers<[1], [0], [0], [1], [0, 0, 1, 1], [], []>} : vector<20x4xf32>, vector<4x8xf32>, vector<20x8xf32> -> vector<20x8xf32>
    %175 = vector.broadcast %15 : vector<1x8xf32> to vector<20x8xf32>
    %176 = arith.addf %174, %175 : vector<20x8xf32>
    %cst_103 = arith.constant 0.000000e+00 : f32
    %cst_104 = arith.constant 6.000000e+00 : f32
    %177 = vector.broadcast %cst_103 : f32 to vector<20x8xf32>
    %178 = arith.maximumf %177, %176 : vector<20x8xf32>
    %179 = vector.broadcast %cst_104 : f32 to vector<20x8xf32>
    %180 = arith.minimumf %179, %178 : vector<20x8xf32>
    %c0_i32_105 = arith.constant 0 : i32
    %181 = arith.cmpi eq, %170, %c0_i32_105 : i32
    %c19_i32_106 = arith.constant 19 : i32
    %182 = arith.cmpi eq, %170, %c19_i32_106 : i32
    %183 = arith.ori %181, %182 : i1
    %cst_107 = arith.constant 0.000000e+00 : f32
    %cst_108 = arith.constant 1.000000e+00 : f32
    %184 = arith.select %183, %cst_107, %cst_108 : f32
    %185 = vector.broadcast %184 : f32 to vector<20x1xf32>
    %186 = arith.mulf %9, %185 : vector<20x1xf32>
    %187 = vector.broadcast %186 : vector<20x1xf32> to vector<20x8xf32>
    %188 = arith.mulf %180, %187 : vector<20x8xf32>
    %c7 = arith.constant 7 : index
    %c0_109 = arith.constant 0 : index
    %c0_110 = arith.constant 0 : index
    %189 = vector.load %arg10[%c7, %c0_109, %c0_110] : memref<8x20x8xf32, #tpu.memory_space<vmem>>, vector<1x20x8xf32>
    %190 = vector.shape_cast %189 : vector<1x20x8xf32> to vector<20x8xf32>
    %191 = vector.shape_cast %188 : vector<20x8xf32> to vector<1x20x8xf32>
    tpu.vector_store %arg10[%c7, %c0_109, %c0_110], %191 {strides = array<i32>} : memref<8x20x8xf32, #tpu.memory_space<vmem>>, vector<1x20x8xf32>,
    %cst_111 = arith.constant 0.000000e+00 : f32
    %cst_112 = arith.constant 6.000000e+00 : f32
    %192 = vector.broadcast %cst_111 : f32 to vector<1x8xf32>
    %193 = arith.maximumf %192, %13 : vector<1x8xf32>
    %194 = vector.broadcast %cst_112 : f32 to vector<1x8xf32>
    %195 = arith.minimumf %194, %193 : vector<1x8xf32>
    %cst_113 = arith.constant 0.000000e+00 : f32
    %196 = vector.broadcast %cst_113 : f32 to vector<18x8xf32>
    %c0_114 = arith.constant 0 : index
    %c0_115 = arith.constant 0 : index
    %c0_116 = arith.constant 0 : index
    %197 = vector.load %arg10[%c0_114, %c0_115, %c0_116] : memref<8x20x8xf32, #tpu.memory_space<vmem>>, vector<1x20x8xf32>
    %198 = vector.shape_cast %197 : vector<1x20x8xf32> to vector<20x8xf32>
    %199 = vector.extract_strided_slice %198 {offsets = [0, 0], sizes = [18, 8], strides = [1, 1]} : vector<20x8xf32> to vector<18x8xf32>
    %200 = vector.extract_strided_slice %10 {offsets = [0, 0], sizes = [1, 8], strides = [1, 1]} : vector<9x8xf32> to vector<1x8xf32>
    %201 = vector.broadcast %200 : vector<1x8xf32> to vector<18x8xf32>
    %202 = arith.mulf %199, %201 : vector<18x8xf32>
    %203 = arith.addf %196, %202 : vector<18x8xf32>
    %204 = vector.extract_strided_slice %198 {offsets = [1, 0], sizes = [18, 8], strides = [1, 1]} : vector<20x8xf32> to vector<18x8xf32>
    %205 = vector.extract_strided_slice %10 {offsets = [1, 0], sizes = [1, 8], strides = [1, 1]} : vector<9x8xf32> to vector<1x8xf32>
    %206 = vector.broadcast %205 : vector<1x8xf32> to vector<18x8xf32>
    %207 = arith.mulf %204, %206 : vector<18x8xf32>
    %208 = arith.addf %203, %207 : vector<18x8xf32>
    %209 = vector.extract_strided_slice %198 {offsets = [2, 0], sizes = [18, 8], strides = [1, 1]} : vector<20x8xf32> to vector<18x8xf32>
    %210 = vector.extract_strided_slice %10 {offsets = [2, 0], sizes = [1, 8], strides = [1, 1]} : vector<9x8xf32> to vector<1x8xf32>
    %211 = vector.broadcast %210 : vector<1x8xf32> to vector<18x8xf32>
    %212 = arith.mulf %209, %211 : vector<18x8xf32>
    %213 = arith.addf %208, %212 : vector<18x8xf32>
    %c1_117 = arith.constant 1 : index
    %c0_118 = arith.constant 0 : index
    %c0_119 = arith.constant 0 : index
    %214 = vector.load %arg10[%c1_117, %c0_118, %c0_119] : memref<8x20x8xf32, #tpu.memory_space<vmem>>, vector<1x20x8xf32>
    %215 = vector.shape_cast %214 : vector<1x20x8xf32> to vector<20x8xf32>
    %216 = vector.extract_strided_slice %215 {offsets = [0, 0], sizes = [18, 8], strides = [1, 1]} : vector<20x8xf32> to vector<18x8xf32>
    %217 = vector.extract_strided_slice %10 {offsets = [3, 0], sizes = [1, 8], strides = [1, 1]} : vector<9x8xf32> to vector<1x8xf32>
    %218 = vector.broadcast %217 : vector<1x8xf32> to vector<18x8xf32>
    %219 = arith.mulf %216, %218 : vector<18x8xf32>
    %220 = arith.addf %213, %219 : vector<18x8xf32>
    %221 = vector.extract_strided_slice %215 {offsets = [1, 0], sizes = [18, 8], strides = [1, 1]} : vector<20x8xf32> to vector<18x8xf32>
    %222 = vector.extract_strided_slice %10 {offsets = [4, 0], sizes = [1, 8], strides = [1, 1]} : vector<9x8xf32> to vector<1x8xf32>
    %223 = vector.broadcast %222 : vector<1x8xf32> to vector<18x8xf32>
    %224 = arith.mulf %221, %223 : vector<18x8xf32>
    %225 = arith.addf %220, %224 : vector<18x8xf32>
    %226 = vector.extract_strided_slice %215 {offsets = [2, 0], sizes = [18, 8], strides = [1, 1]} : vector<20x8xf32> to vector<18x8xf32>
    %227 = vector.extract_strided_slice %10 {offsets = [5, 0], sizes = [1, 8], strides = [1, 1]} : vector<9x8xf32> to vector<1x8xf32>
    %228 = vector.broadcast %227 : vector<1x8xf32> to vector<18x8xf32>
    %229 = arith.mulf %226, %228 : vector<18x8xf32>
    %230 = arith.addf %225, %229 : vector<18x8xf32>
    %c2_120 = arith.constant 2 : index
    %c0_121 = arith.constant 0 : index
    %c0_122 = arith.constant 0 : index
    %231 = vector.load %arg10[%c2_120, %c0_121, %c0_122] : memref<8x20x8xf32, #tpu.memory_space<vmem>>, vector<1x20x8xf32>
    %232 = vector.shape_cast %231 : vector<1x20x8xf32> to vector<20x8xf32>
    %233 = vector.extract_strided_slice %232 {offsets = [0, 0], sizes = [18, 8], strides = [1, 1]} : vector<20x8xf32> to vector<18x8xf32>
    %234 = vector.extract_strided_slice %10 {offsets = [6, 0], sizes = [1, 8], strides = [1, 1]} : vector<9x8xf32> to vector<1x8xf32>
    %235 = vector.broadcast %234 : vector<1x8xf32> to vector<18x8xf32>
    %236 = arith.mulf %233, %235 : vector<18x8xf32>
    %237 = arith.addf %230, %236 : vector<18x8xf32>
    %238 = vector.extract_strided_slice %232 {offsets = [1, 0], sizes = [18, 8], strides = [1, 1]} : vector<20x8xf32> to vector<18x8xf32>
    %239 = vector.extract_strided_slice %10 {offsets = [7, 0], sizes = [1, 8], strides = [1, 1]} : vector<9x8xf32> to vector<1x8xf32>
    %240 = vector.broadcast %239 : vector<1x8xf32> to vector<18x8xf32>
    %241 = arith.mulf %238, %240 : vector<18x8xf32>
    %242 = arith.addf %237, %241 : vector<18x8xf32>
    %243 = vector.extract_strided_slice %232 {offsets = [2, 0], sizes = [18, 8], strides = [1, 1]} : vector<20x8xf32> to vector<18x8xf32>
    %244 = vector.extract_strided_slice %10 {offsets = [8, 0], sizes = [1, 8], strides = [1, 1]} : vector<9x8xf32> to vector<1x8xf32>
    %245 = vector.broadcast %244 : vector<1x8xf32> to vector<18x8xf32>
    %246 = arith.mulf %243, %245 : vector<18x8xf32>
    %247 = arith.addf %242, %246 : vector<18x8xf32>
    %248 = vector.broadcast %11 : vector<1x8xf32> to vector<18x8xf32>
    %249 = arith.addf %247, %248 : vector<18x8xf32>
    %cst_123 = arith.constant 0.000000e+00 : f32
    %cst_124 = arith.constant 6.000000e+00 : f32
    %250 = vector.broadcast %cst_123 : f32 to vector<18x8xf32>
    %251 = arith.maximumf %250, %249 : vector<18x8xf32>
    %252 = vector.broadcast %cst_124 : f32 to vector<18x8xf32>
    %253 = arith.minimumf %252, %251 : vector<18x8xf32>
    %cst_125 = arith.constant dense<0.000000e+00> : vector<18x8xf32>
    %254 = tpu.matmul %253, %12, %cst_125 {dimension_numbers = #tpu.dot_dimension_numbers<[1], [0], [0], [1], [0, 0, 1, 1], [], []>} : vector<18x8xf32>, vector<8x8xf32>, vector<18x8xf32> -> vector<18x8xf32>
    %255 = vector.broadcast %13 : vector<1x8xf32> to vector<18x8xf32>
    %256 = arith.addf %254, %255 : vector<18x8xf32>
    %cst_126 = arith.constant 0.000000e+00 : f32
    %cst_127 = arith.constant 6.000000e+00 : f32
    %257 = vector.broadcast %cst_126 : f32 to vector<18x8xf32>
    %258 = arith.maximumf %257, %256 : vector<18x8xf32>
    %259 = vector.broadcast %cst_127 : f32 to vector<18x8xf32>
    %260 = arith.minimumf %259, %258 : vector<18x8xf32>
    %c0_128 = arith.constant 0 : index
    %c0_129 = arith.constant 0 : index
    %c1_130 = arith.constant 1 : index
    %c0_131 = arith.constant 0 : index
    %261 = vector.load %arg9[%c0_128, %c0_129, %c1_130, %c0_131] : memref<1x6x20x8xf32, #tpu.memory_space<vmem>>, vector<1x1x18x8xf32>
    %262 = vector.shape_cast %261 : vector<1x1x18x8xf32> to vector<18x8xf32>
    %263 = vector.shape_cast %260 : vector<18x8xf32> to vector<1x1x18x8xf32>
    tpu.vector_store %arg9[%c0_128, %c0_129, %c1_130, %c0_131], %263 {strides = array<i32>} : memref<1x6x20x8xf32, #tpu.memory_space<vmem>>, vector<1x1x18x8xf32>,
    %c0_132 = arith.constant 0 : index
    %c0_133 = arith.constant 0 : index
    %c0_134 = arith.constant 0 : index
    %c0_135 = arith.constant 0 : index
    %264 = vector.load %arg9[%c0_132, %c0_133, %c0_134, %c0_135] : memref<1x6x20x8xf32, #tpu.memory_space<vmem>>, vector<1x1x1x8xf32>
    %265 = vector.shape_cast %264 : vector<1x1x1x8xf32> to vector<1x8xf32>
    %266 = vector.shape_cast %195 : vector<1x8xf32> to vector<1x1x1x8xf32>
    tpu.vector_store %arg9[%c0_132, %c0_133, %c0_134, %c0_135], %266 {strides = array<i32>} : memref<1x6x20x8xf32, #tpu.memory_space<vmem>>, vector<1x1x1x8xf32>,
    %c0_136 = arith.constant 0 : index
    %c0_137 = arith.constant 0 : index
    %c19 = arith.constant 19 : index
    %c0_138 = arith.constant 0 : index
    %267 = vector.load %arg9[%c0_136, %c0_137, %c19, %c0_138] : memref<1x6x20x8xf32, #tpu.memory_space<vmem>>, vector<1x1x1x8xf32>
    %268 = vector.shape_cast %267 : vector<1x1x1x8xf32> to vector<1x8xf32>
    %269 = vector.shape_cast %195 : vector<1x8xf32> to vector<1x1x1x8xf32>
    tpu.vector_store %arg9[%c0_136, %c0_137, %c19, %c0_138], %269 {strides = array<i32>} : memref<1x6x20x8xf32, #tpu.memory_space<vmem>>, vector<1x1x1x8xf32>,
    %cst_139 = arith.constant 0.000000e+00 : f32
    %270 = vector.broadcast %cst_139 : f32 to vector<18x8xf32>
    %c1_140 = arith.constant 1 : index
    %c0_141 = arith.constant 0 : index
    %c0_142 = arith.constant 0 : index
    %271 = vector.load %arg10[%c1_140, %c0_141, %c0_142] : memref<8x20x8xf32, #tpu.memory_space<vmem>>, vector<1x20x8xf32>
    %272 = vector.shape_cast %271 : vector<1x20x8xf32> to vector<20x8xf32>
    %273 = vector.extract_strided_slice %272 {offsets = [0, 0], sizes = [18, 8], strides = [1, 1]} : vector<20x8xf32> to vector<18x8xf32>
    %274 = vector.extract_strided_slice %10 {offsets = [0, 0], sizes = [1, 8], strides = [1, 1]} : vector<9x8xf32> to vector<1x8xf32>
    %275 = vector.broadcast %274 : vector<1x8xf32> to vector<18x8xf32>
    %276 = arith.mulf %273, %275 : vector<18x8xf32>
    %277 = arith.addf %270, %276 : vector<18x8xf32>
    %278 = vector.extract_strided_slice %272 {offsets = [1, 0], sizes = [18, 8], strides = [1, 1]} : vector<20x8xf32> to vector<18x8xf32>
    %279 = vector.extract_strided_slice %10 {offsets = [1, 0], sizes = [1, 8], strides = [1, 1]} : vector<9x8xf32> to vector<1x8xf32>
    %280 = vector.broadcast %279 : vector<1x8xf32> to vector<18x8xf32>
    %281 = arith.mulf %278, %280 : vector<18x8xf32>
    %282 = arith.addf %277, %281 : vector<18x8xf32>
    %283 = vector.extract_strided_slice %272 {offsets = [2, 0], sizes = [18, 8], strides = [1, 1]} : vector<20x8xf32> to vector<18x8xf32>
    %284 = vector.extract_strided_slice %10 {offsets = [2, 0], sizes = [1, 8], strides = [1, 1]} : vector<9x8xf32> to vector<1x8xf32>
    %285 = vector.broadcast %284 : vector<1x8xf32> to vector<18x8xf32>
    %286 = arith.mulf %283, %285 : vector<18x8xf32>
    %287 = arith.addf %282, %286 : vector<18x8xf32>
    %c2_143 = arith.constant 2 : index
    %c0_144 = arith.constant 0 : index
    %c0_145 = arith.constant 0 : index
    %288 = vector.load %arg10[%c2_143, %c0_144, %c0_145] : memref<8x20x8xf32, #tpu.memory_space<vmem>>, vector<1x20x8xf32>
    %289 = vector.shape_cast %288 : vector<1x20x8xf32> to vector<20x8xf32>
    %290 = vector.extract_strided_slice %289 {offsets = [0, 0], sizes = [18, 8], strides = [1, 1]} : vector<20x8xf32> to vector<18x8xf32>
    %291 = vector.extract_strided_slice %10 {offsets = [3, 0], sizes = [1, 8], strides = [1, 1]} : vector<9x8xf32> to vector<1x8xf32>
    %292 = vector.broadcast %291 : vector<1x8xf32> to vector<18x8xf32>
    %293 = arith.mulf %290, %292 : vector<18x8xf32>
    %294 = arith.addf %287, %293 : vector<18x8xf32>
    %295 = vector.extract_strided_slice %289 {offsets = [1, 0], sizes = [18, 8], strides = [1, 1]} : vector<20x8xf32> to vector<18x8xf32>
    %296 = vector.extract_strided_slice %10 {offsets = [4, 0], sizes = [1, 8], strides = [1, 1]} : vector<9x8xf32> to vector<1x8xf32>
    %297 = vector.broadcast %296 : vector<1x8xf32> to vector<18x8xf32>
    %298 = arith.mulf %295, %297 : vector<18x8xf32>
    %299 = arith.addf %294, %298 : vector<18x8xf32>
    %300 = vector.extract_strided_slice %289 {offsets = [2, 0], sizes = [18, 8], strides = [1, 1]} : vector<20x8xf32> to vector<18x8xf32>
    %301 = vector.extract_strided_slice %10 {offsets = [5, 0], sizes = [1, 8], strides = [1, 1]} : vector<9x8xf32> to vector<1x8xf32>
    %302 = vector.broadcast %301 : vector<1x8xf32> to vector<18x8xf32>
    %303 = arith.mulf %300, %302 : vector<18x8xf32>
    %304 = arith.addf %299, %303 : vector<18x8xf32>
    %c3_146 = arith.constant 3 : index
    %c0_147 = arith.constant 0 : index
    %c0_148 = arith.constant 0 : index
    %305 = vector.load %arg10[%c3_146, %c0_147, %c0_148] : memref<8x20x8xf32, #tpu.memory_space<vmem>>, vector<1x20x8xf32>
    %306 = vector.shape_cast %305 : vector<1x20x8xf32> to vector<20x8xf32>
    %307 = vector.extract_strided_slice %306 {offsets = [0, 0], sizes = [18, 8], strides = [1, 1]} : vector<20x8xf32> to vector<18x8xf32>
    %308 = vector.extract_strided_slice %10 {offsets = [6, 0], sizes = [1, 8], strides = [1, 1]} : vector<9x8xf32> to vector<1x8xf32>
    %309 = vector.broadcast %308 : vector<1x8xf32> to vector<18x8xf32>
    %310 = arith.mulf %307, %309 : vector<18x8xf32>
    %311 = arith.addf %304, %310 : vector<18x8xf32>
    %312 = vector.extract_strided_slice %306 {offsets = [1, 0], sizes = [18, 8], strides = [1, 1]} : vector<20x8xf32> to vector<18x8xf32>
    %313 = vector.extract_strided_slice %10 {offsets = [7, 0], sizes = [1, 8], strides = [1, 1]} : vector<9x8xf32> to vector<1x8xf32>
    %314 = vector.broadcast %313 : vector<1x8xf32> to vector<18x8xf32>
    %315 = arith.mulf %312, %314 : vector<18x8xf32>
    %316 = arith.addf %311, %315 : vector<18x8xf32>
    %317 = vector.extract_strided_slice %306 {offsets = [2, 0], sizes = [18, 8], strides = [1, 1]} : vector<20x8xf32> to vector<18x8xf32>
    %318 = vector.extract_strided_slice %10 {offsets = [8, 0], sizes = [1, 8], strides = [1, 1]} : vector<9x8xf32> to vector<1x8xf32>
    %319 = vector.broadcast %318 : vector<1x8xf32> to vector<18x8xf32>
    %320 = arith.mulf %317, %319 : vector<18x8xf32>
    %321 = arith.addf %316, %320 : vector<18x8xf32>
    %322 = vector.broadcast %11 : vector<1x8xf32> to vector<18x8xf32>
    %323 = arith.addf %321, %322 : vector<18x8xf32>
    %cst_149 = arith.constant 0.000000e+00 : f32
    %cst_150 = arith.constant 6.000000e+00 : f32
    %324 = vector.broadcast %cst_149 : f32 to vector<18x8xf32>
    %325 = arith.maximumf %324, %323 : vector<18x8xf32>
    %326 = vector.broadcast %cst_150 : f32 to vector<18x8xf32>
    %327 = arith.minimumf %326, %325 : vector<18x8xf32>
    %cst_151 = arith.constant dense<0.000000e+00> : vector<18x8xf32>
    %328 = tpu.matmul %327, %12, %cst_151 {dimension_numbers = #tpu.dot_dimension_numbers<[1], [0], [0], [1], [0, 0, 1, 1], [], []>} : vector<18x8xf32>, vector<8x8xf32>, vector<18x8xf32> -> vector<18x8xf32>
    %329 = vector.broadcast %13 : vector<1x8xf32> to vector<18x8xf32>
    %330 = arith.addf %328, %329 : vector<18x8xf32>
    %cst_152 = arith.constant 0.000000e+00 : f32
    %cst_153 = arith.constant 6.000000e+00 : f32
    %331 = vector.broadcast %cst_152 : f32 to vector<18x8xf32>
    %332 = arith.maximumf %331, %330 : vector<18x8xf32>
    %333 = vector.broadcast %cst_153 : f32 to vector<18x8xf32>
    %334 = arith.minimumf %333, %332 : vector<18x8xf32>
    %c0_154 = arith.constant 0 : index
    %c1_155 = arith.constant 1 : index
    %c1_156 = arith.constant 1 : index
    %c0_157 = arith.constant 0 : index
    %335 = vector.load %arg9[%c0_154, %c1_155, %c1_156, %c0_157] : memref<1x6x20x8xf32, #tpu.memory_space<vmem>>, vector<1x1x18x8xf32>
    %336 = vector.shape_cast %335 : vector<1x1x18x8xf32> to vector<18x8xf32>
    %337 = vector.shape_cast %334 : vector<18x8xf32> to vector<1x1x18x8xf32>
    tpu.vector_store %arg9[%c0_154, %c1_155, %c1_156, %c0_157], %337 {strides = array<i32>} : memref<1x6x20x8xf32, #tpu.memory_space<vmem>>, vector<1x1x18x8xf32>,
    %c0_158 = arith.constant 0 : index
    %c1_159 = arith.constant 1 : index
    %c0_160 = arith.constant 0 : index
    %c0_161 = arith.constant 0 : index
    %338 = vector.load %arg9[%c0_158, %c1_159, %c0_160, %c0_161] : memref<1x6x20x8xf32, #tpu.memory_space<vmem>>, vector<1x1x1x8xf32>
    %339 = vector.shape_cast %338 : vector<1x1x1x8xf32> to vector<1x8xf32>
    %340 = vector.shape_cast %195 : vector<1x8xf32> to vector<1x1x1x8xf32>
    tpu.vector_store %arg9[%c0_158, %c1_159, %c0_160, %c0_161], %340 {strides = array<i32>} : memref<1x6x20x8xf32, #tpu.memory_space<vmem>>, vector<1x1x1x8xf32>,
    %c0_162 = arith.constant 0 : index
    %c1_163 = arith.constant 1 : index
    %c19_164 = arith.constant 19 : index
    %c0_165 = arith.constant 0 : index
    %341 = vector.load %arg9[%c0_162, %c1_163, %c19_164, %c0_165] : memref<1x6x20x8xf32, #tpu.memory_space<vmem>>, vector<1x1x1x8xf32>
    %342 = vector.shape_cast %341 : vector<1x1x1x8xf32> to vector<1x8xf32>
    %343 = vector.shape_cast %195 : vector<1x8xf32> to vector<1x1x1x8xf32>
    tpu.vector_store %arg9[%c0_162, %c1_163, %c19_164, %c0_165], %343 {strides = array<i32>} : memref<1x6x20x8xf32, #tpu.memory_space<vmem>>, vector<1x1x1x8xf32>,
    %cst_166 = arith.constant 0.000000e+00 : f32
    %344 = vector.broadcast %cst_166 : f32 to vector<18x8xf32>
    %c2_167 = arith.constant 2 : index
    %c0_168 = arith.constant 0 : index
    %c0_169 = arith.constant 0 : index
    %345 = vector.load %arg10[%c2_167, %c0_168, %c0_169] : memref<8x20x8xf32, #tpu.memory_space<vmem>>, vector<1x20x8xf32>
    %346 = vector.shape_cast %345 : vector<1x20x8xf32> to vector<20x8xf32>
    %347 = vector.extract_strided_slice %346 {offsets = [0, 0], sizes = [18, 8], strides = [1, 1]} : vector<20x8xf32> to vector<18x8xf32>
    %348 = vector.extract_strided_slice %10 {offsets = [0, 0], sizes = [1, 8], strides = [1, 1]} : vector<9x8xf32> to vector<1x8xf32>
    %349 = vector.broadcast %348 : vector<1x8xf32> to vector<18x8xf32>
    %350 = arith.mulf %347, %349 : vector<18x8xf32>
    %351 = arith.addf %344, %350 : vector<18x8xf32>
    %352 = vector.extract_strided_slice %346 {offsets = [1, 0], sizes = [18, 8], strides = [1, 1]} : vector<20x8xf32> to vector<18x8xf32>
    %353 = vector.extract_strided_slice %10 {offsets = [1, 0], sizes = [1, 8], strides = [1, 1]} : vector<9x8xf32> to vector<1x8xf32>
    %354 = vector.broadcast %353 : vector<1x8xf32> to vector<18x8xf32>
    %355 = arith.mulf %352, %354 : vector<18x8xf32>
    %356 = arith.addf %351, %355 : vector<18x8xf32>
    %357 = vector.extract_strided_slice %346 {offsets = [2, 0], sizes = [18, 8], strides = [1, 1]} : vector<20x8xf32> to vector<18x8xf32>
    %358 = vector.extract_strided_slice %10 {offsets = [2, 0], sizes = [1, 8], strides = [1, 1]} : vector<9x8xf32> to vector<1x8xf32>
    %359 = vector.broadcast %358 : vector<1x8xf32> to vector<18x8xf32>
    %360 = arith.mulf %357, %359 : vector<18x8xf32>
    %361 = arith.addf %356, %360 : vector<18x8xf32>
    %c3_170 = arith.constant 3 : index
    %c0_171 = arith.constant 0 : index
    %c0_172 = arith.constant 0 : index
    %362 = vector.load %arg10[%c3_170, %c0_171, %c0_172] : memref<8x20x8xf32, #tpu.memory_space<vmem>>, vector<1x20x8xf32>
    %363 = vector.shape_cast %362 : vector<1x20x8xf32> to vector<20x8xf32>
    %364 = vector.extract_strided_slice %363 {offsets = [0, 0], sizes = [18, 8], strides = [1, 1]} : vector<20x8xf32> to vector<18x8xf32>
    %365 = vector.extract_strided_slice %10 {offsets = [3, 0], sizes = [1, 8], strides = [1, 1]} : vector<9x8xf32> to vector<1x8xf32>
    %366 = vector.broadcast %365 : vector<1x8xf32> to vector<18x8xf32>
    %367 = arith.mulf %364, %366 : vector<18x8xf32>
    %368 = arith.addf %361, %367 : vector<18x8xf32>
    %369 = vector.extract_strided_slice %363 {offsets = [1, 0], sizes = [18, 8], strides = [1, 1]} : vector<20x8xf32> to vector<18x8xf32>
    %370 = vector.extract_strided_slice %10 {offsets = [4, 0], sizes = [1, 8], strides = [1, 1]} : vector<9x8xf32> to vector<1x8xf32>
    %371 = vector.broadcast %370 : vector<1x8xf32> to vector<18x8xf32>
    %372 = arith.mulf %369, %371 : vector<18x8xf32>
    %373 = arith.addf %368, %372 : vector<18x8xf32>
    %374 = vector.extract_strided_slice %363 {offsets = [2, 0], sizes = [18, 8], strides = [1, 1]} : vector<20x8xf32> to vector<18x8xf32>
    %375 = vector.extract_strided_slice %10 {offsets = [5, 0], sizes = [1, 8], strides = [1, 1]} : vector<9x8xf32> to vector<1x8xf32>
    %376 = vector.broadcast %375 : vector<1x8xf32> to vector<18x8xf32>
    %377 = arith.mulf %374, %376 : vector<18x8xf32>
    %378 = arith.addf %373, %377 : vector<18x8xf32>
    %c4_173 = arith.constant 4 : index
    %c0_174 = arith.constant 0 : index
    %c0_175 = arith.constant 0 : index
    %379 = vector.load %arg10[%c4_173, %c0_174, %c0_175] : memref<8x20x8xf32, #tpu.memory_space<vmem>>, vector<1x20x8xf32>
    %380 = vector.shape_cast %379 : vector<1x20x8xf32> to vector<20x8xf32>
    %381 = vector.extract_strided_slice %380 {offsets = [0, 0], sizes = [18, 8], strides = [1, 1]} : vector<20x8xf32> to vector<18x8xf32>
    %382 = vector.extract_strided_slice %10 {offsets = [6, 0], sizes = [1, 8], strides = [1, 1]} : vector<9x8xf32> to vector<1x8xf32>
    %383 = vector.broadcast %382 : vector<1x8xf32> to vector<18x8xf32>
    %384 = arith.mulf %381, %383 : vector<18x8xf32>
    %385 = arith.addf %378, %384 : vector<18x8xf32>
    %386 = vector.extract_strided_slice %380 {offsets = [1, 0], sizes = [18, 8], strides = [1, 1]} : vector<20x8xf32> to vector<18x8xf32>
    %387 = vector.extract_strided_slice %10 {offsets = [7, 0], sizes = [1, 8], strides = [1, 1]} : vector<9x8xf32> to vector<1x8xf32>
    %388 = vector.broadcast %387 : vector<1x8xf32> to vector<18x8xf32>
    %389 = arith.mulf %386, %388 : vector<18x8xf32>
    %390 = arith.addf %385, %389 : vector<18x8xf32>
    %391 = vector.extract_strided_slice %380 {offsets = [2, 0], sizes = [18, 8], strides = [1, 1]} : vector<20x8xf32> to vector<18x8xf32>
    %392 = vector.extract_strided_slice %10 {offsets = [8, 0], sizes = [1, 8], strides = [1, 1]} : vector<9x8xf32> to vector<1x8xf32>
    %393 = vector.broadcast %392 : vector<1x8xf32> to vector<18x8xf32>
    %394 = arith.mulf %391, %393 : vector<18x8xf32>
    %395 = arith.addf %390, %394 : vector<18x8xf32>
    %396 = vector.broadcast %11 : vector<1x8xf32> to vector<18x8xf32>
    %397 = arith.addf %395, %396 : vector<18x8xf32>
    %cst_176 = arith.constant 0.000000e+00 : f32
    %cst_177 = arith.constant 6.000000e+00 : f32
    %398 = vector.broadcast %cst_176 : f32 to vector<18x8xf32>
    %399 = arith.maximumf %398, %397 : vector<18x8xf32>
    %400 = vector.broadcast %cst_177 : f32 to vector<18x8xf32>
    %401 = arith.minimumf %400, %399 : vector<18x8xf32>
    %cst_178 = arith.constant dense<0.000000e+00> : vector<18x8xf32>
    %402 = tpu.matmul %401, %12, %cst_178 {dimension_numbers = #tpu.dot_dimension_numbers<[1], [0], [0], [1], [0, 0, 1, 1], [], []>} : vector<18x8xf32>, vector<8x8xf32>, vector<18x8xf32> -> vector<18x8xf32>
    %403 = vector.broadcast %13 : vector<1x8xf32> to vector<18x8xf32>
    %404 = arith.addf %402, %403 : vector<18x8xf32>
    %cst_179 = arith.constant 0.000000e+00 : f32
    %cst_180 = arith.constant 6.000000e+00 : f32
    %405 = vector.broadcast %cst_179 : f32 to vector<18x8xf32>
    %406 = arith.maximumf %405, %404 : vector<18x8xf32>
    %407 = vector.broadcast %cst_180 : f32 to vector<18x8xf32>
    %408 = arith.minimumf %407, %406 : vector<18x8xf32>
    %c0_181 = arith.constant 0 : index
    %c2_182 = arith.constant 2 : index
    %c1_183 = arith.constant 1 : index
    %c0_184 = arith.constant 0 : index
    %409 = vector.load %arg9[%c0_181, %c2_182, %c1_183, %c0_184] : memref<1x6x20x8xf32, #tpu.memory_space<vmem>>, vector<1x1x18x8xf32>
    %410 = vector.shape_cast %409 : vector<1x1x18x8xf32> to vector<18x8xf32>
    %411 = vector.shape_cast %408 : vector<18x8xf32> to vector<1x1x18x8xf32>
    tpu.vector_store %arg9[%c0_181, %c2_182, %c1_183, %c0_184], %411 {strides = array<i32>} : memref<1x6x20x8xf32, #tpu.memory_space<vmem>>, vector<1x1x18x8xf32>,
    %c0_185 = arith.constant 0 : index
    %c2_186 = arith.constant 2 : index
    %c0_187 = arith.constant 0 : index
    %c0_188 = arith.constant 0 : index
    %412 = vector.load %arg9[%c0_185, %c2_186, %c0_187, %c0_188] : memref<1x6x20x8xf32, #tpu.memory_space<vmem>>, vector<1x1x1x8xf32>
    %413 = vector.shape_cast %412 : vector<1x1x1x8xf32> to vector<1x8xf32>
    %414 = vector.shape_cast %195 : vector<1x8xf32> to vector<1x1x1x8xf32>
    tpu.vector_store %arg9[%c0_185, %c2_186, %c0_187, %c0_188], %414 {strides = array<i32>} : memref<1x6x20x8xf32, #tpu.memory_space<vmem>>, vector<1x1x1x8xf32>,
    %c0_189 = arith.constant 0 : index
    %c2_190 = arith.constant 2 : index
    %c19_191 = arith.constant 19 : index
    %c0_192 = arith.constant 0 : index
    %415 = vector.load %arg9[%c0_189, %c2_190, %c19_191, %c0_192] : memref<1x6x20x8xf32, #tpu.memory_space<vmem>>, vector<1x1x1x8xf32>
    %416 = vector.shape_cast %415 : vector<1x1x1x8xf32> to vector<1x8xf32>
    %417 = vector.shape_cast %195 : vector<1x8xf32> to vector<1x1x1x8xf32>
    tpu.vector_store %arg9[%c0_189, %c2_190, %c19_191, %c0_192], %417 {strides = array<i32>} : memref<1x6x20x8xf32, #tpu.memory_space<vmem>>, vector<1x1x1x8xf32>,
    %cst_193 = arith.constant 0.000000e+00 : f32
    %418 = vector.broadcast %cst_193 : f32 to vector<18x8xf32>
    %c3_194 = arith.constant 3 : index
    %c0_195 = arith.constant 0 : index
    %c0_196 = arith.constant 0 : index
    %419 = vector.load %arg10[%c3_194, %c0_195, %c0_196] : memref<8x20x8xf32, #tpu.memory_space<vmem>>, vector<1x20x8xf32>
    %420 = vector.shape_cast %419 : vector<1x20x8xf32> to vector<20x8xf32>
    %421 = vector.extract_strided_slice %420 {offsets = [0, 0], sizes = [18, 8], strides = [1, 1]} : vector<20x8xf32> to vector<18x8xf32>
    %422 = vector.extract_strided_slice %10 {offsets = [0, 0], sizes = [1, 8], strides = [1, 1]} : vector<9x8xf32> to vector<1x8xf32>
    %423 = vector.broadcast %422 : vector<1x8xf32> to vector<18x8xf32>
    %424 = arith.mulf %421, %423 : vector<18x8xf32>
    %425 = arith.addf %418, %424 : vector<18x8xf32>
    %426 = vector.extract_strided_slice %420 {offsets = [1, 0], sizes = [18, 8], strides = [1, 1]} : vector<20x8xf32> to vector<18x8xf32>
    %427 = vector.extract_strided_slice %10 {offsets = [1, 0], sizes = [1, 8], strides = [1, 1]} : vector<9x8xf32> to vector<1x8xf32>
    %428 = vector.broadcast %427 : vector<1x8xf32> to vector<18x8xf32>
    %429 = arith.mulf %426, %428 : vector<18x8xf32>
    %430 = arith.addf %425, %429 : vector<18x8xf32>
    %431 = vector.extract_strided_slice %420 {offsets = [2, 0], sizes = [18, 8], strides = [1, 1]} : vector<20x8xf32> to vector<18x8xf32>
    %432 = vector.extract_strided_slice %10 {offsets = [2, 0], sizes = [1, 8], strides = [1, 1]} : vector<9x8xf32> to vector<1x8xf32>
    %433 = vector.broadcast %432 : vector<1x8xf32> to vector<18x8xf32>
    %434 = arith.mulf %431, %433 : vector<18x8xf32>
    %435 = arith.addf %430, %434 : vector<18x8xf32>
    %c4_197 = arith.constant 4 : index
    %c0_198 = arith.constant 0 : index
    %c0_199 = arith.constant 0 : index
    %436 = vector.load %arg10[%c4_197, %c0_198, %c0_199] : memref<8x20x8xf32, #tpu.memory_space<vmem>>, vector<1x20x8xf32>
    %437 = vector.shape_cast %436 : vector<1x20x8xf32> to vector<20x8xf32>
    %438 = vector.extract_strided_slice %437 {offsets = [0, 0], sizes = [18, 8], strides = [1, 1]} : vector<20x8xf32> to vector<18x8xf32>
    %439 = vector.extract_strided_slice %10 {offsets = [3, 0], sizes = [1, 8], strides = [1, 1]} : vector<9x8xf32> to vector<1x8xf32>
    %440 = vector.broadcast %439 : vector<1x8xf32> to vector<18x8xf32>
    %441 = arith.mulf %438, %440 : vector<18x8xf32>
    %442 = arith.addf %435, %441 : vector<18x8xf32>
    %443 = vector.extract_strided_slice %437 {offsets = [1, 0], sizes = [18, 8], strides = [1, 1]} : vector<20x8xf32> to vector<18x8xf32>
    %444 = vector.extract_strided_slice %10 {offsets = [4, 0], sizes = [1, 8], strides = [1, 1]} : vector<9x8xf32> to vector<1x8xf32>
    %445 = vector.broadcast %444 : vector<1x8xf32> to vector<18x8xf32>
    %446 = arith.mulf %443, %445 : vector<18x8xf32>
    %447 = arith.addf %442, %446 : vector<18x8xf32>
    %448 = vector.extract_strided_slice %437 {offsets = [2, 0], sizes = [18, 8], strides = [1, 1]} : vector<20x8xf32> to vector<18x8xf32>
    %449 = vector.extract_strided_slice %10 {offsets = [5, 0], sizes = [1, 8], strides = [1, 1]} : vector<9x8xf32> to vector<1x8xf32>
    %450 = vector.broadcast %449 : vector<1x8xf32> to vector<18x8xf32>
    %451 = arith.mulf %448, %450 : vector<18x8xf32>
    %452 = arith.addf %447, %451 : vector<18x8xf32>
    %c5_200 = arith.constant 5 : index
    %c0_201 = arith.constant 0 : index
    %c0_202 = arith.constant 0 : index
    %453 = vector.load %arg10[%c5_200, %c0_201, %c0_202] : memref<8x20x8xf32, #tpu.memory_space<vmem>>, vector<1x20x8xf32>
    %454 = vector.shape_cast %453 : vector<1x20x8xf32> to vector<20x8xf32>
    %455 = vector.extract_strided_slice %454 {offsets = [0, 0], sizes = [18, 8], strides = [1, 1]} : vector<20x8xf32> to vector<18x8xf32>
    %456 = vector.extract_strided_slice %10 {offsets = [6, 0], sizes = [1, 8], strides = [1, 1]} : vector<9x8xf32> to vector<1x8xf32>
    %457 = vector.broadcast %456 : vector<1x8xf32> to vector<18x8xf32>
    %458 = arith.mulf %455, %457 : vector<18x8xf32>
    %459 = arith.addf %452, %458 : vector<18x8xf32>
    %460 = vector.extract_strided_slice %454 {offsets = [1, 0], sizes = [18, 8], strides = [1, 1]} : vector<20x8xf32> to vector<18x8xf32>
    %461 = vector.extract_strided_slice %10 {offsets = [7, 0], sizes = [1, 8], strides = [1, 1]} : vector<9x8xf32> to vector<1x8xf32>
    %462 = vector.broadcast %461 : vector<1x8xf32> to vector<18x8xf32>
    %463 = arith.mulf %460, %462 : vector<18x8xf32>
    %464 = arith.addf %459, %463 : vector<18x8xf32>
    %465 = vector.extract_strided_slice %454 {offsets = [2, 0], sizes = [18, 8], strides = [1, 1]} : vector<20x8xf32> to vector<18x8xf32>
    %466 = vector.extract_strided_slice %10 {offsets = [8, 0], sizes = [1, 8], strides = [1, 1]} : vector<9x8xf32> to vector<1x8xf32>
    %467 = vector.broadcast %466 : vector<1x8xf32> to vector<18x8xf32>
    %468 = arith.mulf %465, %467 : vector<18x8xf32>
    %469 = arith.addf %464, %468 : vector<18x8xf32>
    %470 = vector.broadcast %11 : vector<1x8xf32> to vector<18x8xf32>
    %471 = arith.addf %469, %470 : vector<18x8xf32>
    %cst_203 = arith.constant 0.000000e+00 : f32
    %cst_204 = arith.constant 6.000000e+00 : f32
    %472 = vector.broadcast %cst_203 : f32 to vector<18x8xf32>
    %473 = arith.maximumf %472, %471 : vector<18x8xf32>
    %474 = vector.broadcast %cst_204 : f32 to vector<18x8xf32>
    %475 = arith.minimumf %474, %473 : vector<18x8xf32>
    %cst_205 = arith.constant dense<0.000000e+00> : vector<18x8xf32>
    %476 = tpu.matmul %475, %12, %cst_205 {dimension_numbers = #tpu.dot_dimension_numbers<[1], [0], [0], [1], [0, 0, 1, 1], [], []>} : vector<18x8xf32>, vector<8x8xf32>, vector<18x8xf32> -> vector<18x8xf32>
    %477 = vector.broadcast %13 : vector<1x8xf32> to vector<18x8xf32>
    %478 = arith.addf %476, %477 : vector<18x8xf32>
    %cst_206 = arith.constant 0.000000e+00 : f32
    %cst_207 = arith.constant 6.000000e+00 : f32
    %479 = vector.broadcast %cst_206 : f32 to vector<18x8xf32>
    %480 = arith.maximumf %479, %478 : vector<18x8xf32>
    %481 = vector.broadcast %cst_207 : f32 to vector<18x8xf32>
    %482 = arith.minimumf %481, %480 : vector<18x8xf32>
    %c0_208 = arith.constant 0 : index
    %c3_209 = arith.constant 3 : index
    %c1_210 = arith.constant 1 : index
    %c0_211 = arith.constant 0 : index
    %483 = vector.load %arg9[%c0_208, %c3_209, %c1_210, %c0_211] : memref<1x6x20x8xf32, #tpu.memory_space<vmem>>, vector<1x1x18x8xf32>
    %484 = vector.shape_cast %483 : vector<1x1x18x8xf32> to vector<18x8xf32>
    %485 = vector.shape_cast %482 : vector<18x8xf32> to vector<1x1x18x8xf32>
    tpu.vector_store %arg9[%c0_208, %c3_209, %c1_210, %c0_211], %485 {strides = array<i32>} : memref<1x6x20x8xf32, #tpu.memory_space<vmem>>, vector<1x1x18x8xf32>,
    %c0_212 = arith.constant 0 : index
    %c3_213 = arith.constant 3 : index
    %c0_214 = arith.constant 0 : index
    %c0_215 = arith.constant 0 : index
    %486 = vector.load %arg9[%c0_212, %c3_213, %c0_214, %c0_215] : memref<1x6x20x8xf32, #tpu.memory_space<vmem>>, vector<1x1x1x8xf32>
    %487 = vector.shape_cast %486 : vector<1x1x1x8xf32> to vector<1x8xf32>
    %488 = vector.shape_cast %195 : vector<1x8xf32> to vector<1x1x1x8xf32>
    tpu.vector_store %arg9[%c0_212, %c3_213, %c0_214, %c0_215], %488 {strides = array<i32>} : memref<1x6x20x8xf32, #tpu.memory_space<vmem>>, vector<1x1x1x8xf32>,
    %c0_216 = arith.constant 0 : index
    %c3_217 = arith.constant 3 : index
    %c19_218 = arith.constant 19 : index
    %c0_219 = arith.constant 0 : index
    %489 = vector.load %arg9[%c0_216, %c3_217, %c19_218, %c0_219] : memref<1x6x20x8xf32, #tpu.memory_space<vmem>>, vector<1x1x1x8xf32>
    %490 = vector.shape_cast %489 : vector<1x1x1x8xf32> to vector<1x8xf32>
    %491 = vector.shape_cast %195 : vector<1x8xf32> to vector<1x1x1x8xf32>
    tpu.vector_store %arg9[%c0_216, %c3_217, %c19_218, %c0_219], %491 {strides = array<i32>} : memref<1x6x20x8xf32, #tpu.memory_space<vmem>>, vector<1x1x1x8xf32>,
    %cst_220 = arith.constant 0.000000e+00 : f32
    %492 = vector.broadcast %cst_220 : f32 to vector<18x8xf32>
    %c4_221 = arith.constant 4 : index
    %c0_222 = arith.constant 0 : index
    %c0_223 = arith.constant 0 : index
    %493 = vector.load %arg10[%c4_221, %c0_222, %c0_223] : memref<8x20x8xf32, #tpu.memory_space<vmem>>, vector<1x20x8xf32>
    %494 = vector.shape_cast %493 : vector<1x20x8xf32> to vector<20x8xf32>
    %495 = vector.extract_strided_slice %494 {offsets = [0, 0], sizes = [18, 8], strides = [1, 1]} : vector<20x8xf32> to vector<18x8xf32>
    %496 = vector.extract_strided_slice %10 {offsets = [0, 0], sizes = [1, 8], strides = [1, 1]} : vector<9x8xf32> to vector<1x8xf32>
    %497 = vector.broadcast %496 : vector<1x8xf32> to vector<18x8xf32>
    %498 = arith.mulf %495, %497 : vector<18x8xf32>
    %499 = arith.addf %492, %498 : vector<18x8xf32>
    %500 = vector.extract_strided_slice %494 {offsets = [1, 0], sizes = [18, 8], strides = [1, 1]} : vector<20x8xf32> to vector<18x8xf32>
    %501 = vector.extract_strided_slice %10 {offsets = [1, 0], sizes = [1, 8], strides = [1, 1]} : vector<9x8xf32> to vector<1x8xf32>
    %502 = vector.broadcast %501 : vector<1x8xf32> to vector<18x8xf32>
    %503 = arith.mulf %500, %502 : vector<18x8xf32>
    %504 = arith.addf %499, %503 : vector<18x8xf32>
    %505 = vector.extract_strided_slice %494 {offsets = [2, 0], sizes = [18, 8], strides = [1, 1]} : vector<20x8xf32> to vector<18x8xf32>
    %506 = vector.extract_strided_slice %10 {offsets = [2, 0], sizes = [1, 8], strides = [1, 1]} : vector<9x8xf32> to vector<1x8xf32>
    %507 = vector.broadcast %506 : vector<1x8xf32> to vector<18x8xf32>
    %508 = arith.mulf %505, %507 : vector<18x8xf32>
    %509 = arith.addf %504, %508 : vector<18x8xf32>
    %c5_224 = arith.constant 5 : index
    %c0_225 = arith.constant 0 : index
    %c0_226 = arith.constant 0 : index
    %510 = vector.load %arg10[%c5_224, %c0_225, %c0_226] : memref<8x20x8xf32, #tpu.memory_space<vmem>>, vector<1x20x8xf32>
    %511 = vector.shape_cast %510 : vector<1x20x8xf32> to vector<20x8xf32>
    %512 = vector.extract_strided_slice %511 {offsets = [0, 0], sizes = [18, 8], strides = [1, 1]} : vector<20x8xf32> to vector<18x8xf32>
    %513 = vector.extract_strided_slice %10 {offsets = [3, 0], sizes = [1, 8], strides = [1, 1]} : vector<9x8xf32> to vector<1x8xf32>
    %514 = vector.broadcast %513 : vector<1x8xf32> to vector<18x8xf32>
    %515 = arith.mulf %512, %514 : vector<18x8xf32>
    %516 = arith.addf %509, %515 : vector<18x8xf32>
    %517 = vector.extract_strided_slice %511 {offsets = [1, 0], sizes = [18, 8], strides = [1, 1]} : vector<20x8xf32> to vector<18x8xf32>
    %518 = vector.extract_strided_slice %10 {offsets = [4, 0], sizes = [1, 8], strides = [1, 1]} : vector<9x8xf32> to vector<1x8xf32>
    %519 = vector.broadcast %518 : vector<1x8xf32> to vector<18x8xf32>
    %520 = arith.mulf %517, %519 : vector<18x8xf32>
    %521 = arith.addf %516, %520 : vector<18x8xf32>
    %522 = vector.extract_strided_slice %511 {offsets = [2, 0], sizes = [18, 8], strides = [1, 1]} : vector<20x8xf32> to vector<18x8xf32>
    %523 = vector.extract_strided_slice %10 {offsets = [5, 0], sizes = [1, 8], strides = [1, 1]} : vector<9x8xf32> to vector<1x8xf32>
    %524 = vector.broadcast %523 : vector<1x8xf32> to vector<18x8xf32>
    %525 = arith.mulf %522, %524 : vector<18x8xf32>
    %526 = arith.addf %521, %525 : vector<18x8xf32>
    %c6_227 = arith.constant 6 : index
    %c0_228 = arith.constant 0 : index
    %c0_229 = arith.constant 0 : index
    %527 = vector.load %arg10[%c6_227, %c0_228, %c0_229] : memref<8x20x8xf32, #tpu.memory_space<vmem>>, vector<1x20x8xf32>
    %528 = vector.shape_cast %527 : vector<1x20x8xf32> to vector<20x8xf32>
    %529 = vector.extract_strided_slice %528 {offsets = [0, 0], sizes = [18, 8], strides = [1, 1]} : vector<20x8xf32> to vector<18x8xf32>
    %530 = vector.extract_strided_slice %10 {offsets = [6, 0], sizes = [1, 8], strides = [1, 1]} : vector<9x8xf32> to vector<1x8xf32>
    %531 = vector.broadcast %530 : vector<1x8xf32> to vector<18x8xf32>
    %532 = arith.mulf %529, %531 : vector<18x8xf32>
    %533 = arith.addf %526, %532 : vector<18x8xf32>
    %534 = vector.extract_strided_slice %528 {offsets = [1, 0], sizes = [18, 8], strides = [1, 1]} : vector<20x8xf32> to vector<18x8xf32>
    %535 = vector.extract_strided_slice %10 {offsets = [7, 0], sizes = [1, 8], strides = [1, 1]} : vector<9x8xf32> to vector<1x8xf32>
    %536 = vector.broadcast %535 : vector<1x8xf32> to vector<18x8xf32>
    %537 = arith.mulf %534, %536 : vector<18x8xf32>
    %538 = arith.addf %533, %537 : vector<18x8xf32>
    %539 = vector.extract_strided_slice %528 {offsets = [2, 0], sizes = [18, 8], strides = [1, 1]} : vector<20x8xf32> to vector<18x8xf32>
    %540 = vector.extract_strided_slice %10 {offsets = [8, 0], sizes = [1, 8], strides = [1, 1]} : vector<9x8xf32> to vector<1x8xf32>
    %541 = vector.broadcast %540 : vector<1x8xf32> to vector<18x8xf32>
    %542 = arith.mulf %539, %541 : vector<18x8xf32>
    %543 = arith.addf %538, %542 : vector<18x8xf32>
    %544 = vector.broadcast %11 : vector<1x8xf32> to vector<18x8xf32>
    %545 = arith.addf %543, %544 : vector<18x8xf32>
    %cst_230 = arith.constant 0.000000e+00 : f32
    %cst_231 = arith.constant 6.000000e+00 : f32
    %546 = vector.broadcast %cst_230 : f32 to vector<18x8xf32>
    %547 = arith.maximumf %546, %545 : vector<18x8xf32>
    %548 = vector.broadcast %cst_231 : f32 to vector<18x8xf32>
    %549 = arith.minimumf %548, %547 : vector<18x8xf32>
    %cst_232 = arith.constant dense<0.000000e+00> : vector<18x8xf32>
    %550 = tpu.matmul %549, %12, %cst_232 {dimension_numbers = #tpu.dot_dimension_numbers<[1], [0], [0], [1], [0, 0, 1, 1], [], []>} : vector<18x8xf32>, vector<8x8xf32>, vector<18x8xf32> -> vector<18x8xf32>
    %551 = vector.broadcast %13 : vector<1x8xf32> to vector<18x8xf32>
    %552 = arith.addf %550, %551 : vector<18x8xf32>
    %cst_233 = arith.constant 0.000000e+00 : f32
    %cst_234 = arith.constant 6.000000e+00 : f32
    %553 = vector.broadcast %cst_233 : f32 to vector<18x8xf32>
    %554 = arith.maximumf %553, %552 : vector<18x8xf32>
    %555 = vector.broadcast %cst_234 : f32 to vector<18x8xf32>
    %556 = arith.minimumf %555, %554 : vector<18x8xf32>
    %c0_235 = arith.constant 0 : index
    %c4_236 = arith.constant 4 : index
    %c1_237 = arith.constant 1 : index
    %c0_238 = arith.constant 0 : index
    %557 = vector.load %arg9[%c0_235, %c4_236, %c1_237, %c0_238] : memref<1x6x20x8xf32, #tpu.memory_space<vmem>>, vector<1x1x18x8xf32>
    %558 = vector.shape_cast %557 : vector<1x1x18x8xf32> to vector<18x8xf32>
    %559 = vector.shape_cast %556 : vector<18x8xf32> to vector<1x1x18x8xf32>
    tpu.vector_store %arg9[%c0_235, %c4_236, %c1_237, %c0_238], %559 {strides = array<i32>} : memref<1x6x20x8xf32, #tpu.memory_space<vmem>>, vector<1x1x18x8xf32>,
    %c0_239 = arith.constant 0 : index
    %c4_240 = arith.constant 4 : index
    %c0_241 = arith.constant 0 : index
    %c0_242 = arith.constant 0 : index
    %560 = vector.load %arg9[%c0_239, %c4_240, %c0_241, %c0_242] : memref<1x6x20x8xf32, #tpu.memory_space<vmem>>, vector<1x1x1x8xf32>
    %561 = vector.shape_cast %560 : vector<1x1x1x8xf32> to vector<1x8xf32>
    %562 = vector.shape_cast %195 : vector<1x8xf32> to vector<1x1x1x8xf32>
    tpu.vector_store %arg9[%c0_239, %c4_240, %c0_241, %c0_242], %562 {strides = array<i32>} : memref<1x6x20x8xf32, #tpu.memory_space<vmem>>, vector<1x1x1x8xf32>,
    %c0_243 = arith.constant 0 : index
    %c4_244 = arith.constant 4 : index
    %c19_245 = arith.constant 19 : index
    %c0_246 = arith.constant 0 : index
    %563 = vector.load %arg9[%c0_243, %c4_244, %c19_245, %c0_246] : memref<1x6x20x8xf32, #tpu.memory_space<vmem>>, vector<1x1x1x8xf32>
    %564 = vector.shape_cast %563 : vector<1x1x1x8xf32> to vector<1x8xf32>
    %565 = vector.shape_cast %195 : vector<1x8xf32> to vector<1x1x1x8xf32>
    tpu.vector_store %arg9[%c0_243, %c4_244, %c19_245, %c0_246], %565 {strides = array<i32>} : memref<1x6x20x8xf32, #tpu.memory_space<vmem>>, vector<1x1x1x8xf32>,
    %cst_247 = arith.constant 0.000000e+00 : f32
    %566 = vector.broadcast %cst_247 : f32 to vector<18x8xf32>
    %c5_248 = arith.constant 5 : index
    %c0_249 = arith.constant 0 : index
    %c0_250 = arith.constant 0 : index
    %567 = vector.load %arg10[%c5_248, %c0_249, %c0_250] : memref<8x20x8xf32, #tpu.memory_space<vmem>>, vector<1x20x8xf32>
    %568 = vector.shape_cast %567 : vector<1x20x8xf32> to vector<20x8xf32>
    %569 = vector.extract_strided_slice %568 {offsets = [0, 0], sizes = [18, 8], strides = [1, 1]} : vector<20x8xf32> to vector<18x8xf32>
    %570 = vector.extract_strided_slice %10 {offsets = [0, 0], sizes = [1, 8], strides = [1, 1]} : vector<9x8xf32> to vector<1x8xf32>
    %571 = vector.broadcast %570 : vector<1x8xf32> to vector<18x8xf32>
    %572 = arith.mulf %569, %571 : vector<18x8xf32>
    %573 = arith.addf %566, %572 : vector<18x8xf32>
    %574 = vector.extract_strided_slice %568 {offsets = [1, 0], sizes = [18, 8], strides = [1, 1]} : vector<20x8xf32> to vector<18x8xf32>
    %575 = vector.extract_strided_slice %10 {offsets = [1, 0], sizes = [1, 8], strides = [1, 1]} : vector<9x8xf32> to vector<1x8xf32>
    %576 = vector.broadcast %575 : vector<1x8xf32> to vector<18x8xf32>
    %577 = arith.mulf %574, %576 : vector<18x8xf32>
    %578 = arith.addf %573, %577 : vector<18x8xf32>
    %579 = vector.extract_strided_slice %568 {offsets = [2, 0], sizes = [18, 8], strides = [1, 1]} : vector<20x8xf32> to vector<18x8xf32>
    %580 = vector.extract_strided_slice %10 {offsets = [2, 0], sizes = [1, 8], strides = [1, 1]} : vector<9x8xf32> to vector<1x8xf32>
    %581 = vector.broadcast %580 : vector<1x8xf32> to vector<18x8xf32>
    %582 = arith.mulf %579, %581 : vector<18x8xf32>
    %583 = arith.addf %578, %582 : vector<18x8xf32>
    %c6_251 = arith.constant 6 : index
    %c0_252 = arith.constant 0 : index
    %c0_253 = arith.constant 0 : index
    %584 = vector.load %arg10[%c6_251, %c0_252, %c0_253] : memref<8x20x8xf32, #tpu.memory_space<vmem>>, vector<1x20x8xf32>
    %585 = vector.shape_cast %584 : vector<1x20x8xf32> to vector<20x8xf32>
    %586 = vector.extract_strided_slice %585 {offsets = [0, 0], sizes = [18, 8], strides = [1, 1]} : vector<20x8xf32> to vector<18x8xf32>
    %587 = vector.extract_strided_slice %10 {offsets = [3, 0], sizes = [1, 8], strides = [1, 1]} : vector<9x8xf32> to vector<1x8xf32>
    %588 = vector.broadcast %587 : vector<1x8xf32> to vector<18x8xf32>
    %589 = arith.mulf %586, %588 : vector<18x8xf32>
    %590 = arith.addf %583, %589 : vector<18x8xf32>
    %591 = vector.extract_strided_slice %585 {offsets = [1, 0], sizes = [18, 8], strides = [1, 1]} : vector<20x8xf32> to vector<18x8xf32>
    %592 = vector.extract_strided_slice %10 {offsets = [4, 0], sizes = [1, 8], strides = [1, 1]} : vector<9x8xf32> to vector<1x8xf32>
    %593 = vector.broadcast %592 : vector<1x8xf32> to vector<18x8xf32>
    %594 = arith.mulf %591, %593 : vector<18x8xf32>
    %595 = arith.addf %590, %594 : vector<18x8xf32>
    %596 = vector.extract_strided_slice %585 {offsets = [2, 0], sizes = [18, 8], strides = [1, 1]} : vector<20x8xf32> to vector<18x8xf32>
    %597 = vector.extract_strided_slice %10 {offsets = [5, 0], sizes = [1, 8], strides = [1, 1]} : vector<9x8xf32> to vector<1x8xf32>
    %598 = vector.broadcast %597 : vector<1x8xf32> to vector<18x8xf32>
    %599 = arith.mulf %596, %598 : vector<18x8xf32>
    %600 = arith.addf %595, %599 : vector<18x8xf32>
    %c7_254 = arith.constant 7 : index
    %c0_255 = arith.constant 0 : index
    %c0_256 = arith.constant 0 : index
    %601 = vector.load %arg10[%c7_254, %c0_255, %c0_256] : memref<8x20x8xf32, #tpu.memory_space<vmem>>, vector<1x20x8xf32>
    %602 = vector.shape_cast %601 : vector<1x20x8xf32> to vector<20x8xf32>
    %603 = vector.extract_strided_slice %602 {offsets = [0, 0], sizes = [18, 8], strides = [1, 1]} : vector<20x8xf32> to vector<18x8xf32>
    %604 = vector.extract_strided_slice %10 {offsets = [6, 0], sizes = [1, 8], strides = [1, 1]} : vector<9x8xf32> to vector<1x8xf32>
    %605 = vector.broadcast %604 : vector<1x8xf32> to vector<18x8xf32>
    %606 = arith.mulf %603, %605 : vector<18x8xf32>
    %607 = arith.addf %600, %606 : vector<18x8xf32>
    %608 = vector.extract_strided_slice %602 {offsets = [1, 0], sizes = [18, 8], strides = [1, 1]} : vector<20x8xf32> to vector<18x8xf32>
    %609 = vector.extract_strided_slice %10 {offsets = [7, 0], sizes = [1, 8], strides = [1, 1]} : vector<9x8xf32> to vector<1x8xf32>
    %610 = vector.broadcast %609 : vector<1x8xf32> to vector<18x8xf32>
    %611 = arith.mulf %608, %610 : vector<18x8xf32>
    %612 = arith.addf %607, %611 : vector<18x8xf32>
    %613 = vector.extract_strided_slice %602 {offsets = [2, 0], sizes = [18, 8], strides = [1, 1]} : vector<20x8xf32> to vector<18x8xf32>
    %614 = vector.extract_strided_slice %10 {offsets = [8, 0], sizes = [1, 8], strides = [1, 1]} : vector<9x8xf32> to vector<1x8xf32>
    %615 = vector.broadcast %614 : vector<1x8xf32> to vector<18x8xf32>
    %616 = arith.mulf %613, %615 : vector<18x8xf32>
    %617 = arith.addf %612, %616 : vector<18x8xf32>
    %618 = vector.broadcast %11 : vector<1x8xf32> to vector<18x8xf32>
    %619 = arith.addf %617, %618 : vector<18x8xf32>
    %cst_257 = arith.constant 0.000000e+00 : f32
    %cst_258 = arith.constant 6.000000e+00 : f32
    %620 = vector.broadcast %cst_257 : f32 to vector<18x8xf32>
    %621 = arith.maximumf %620, %619 : vector<18x8xf32>
    %622 = vector.broadcast %cst_258 : f32 to vector<18x8xf32>
    %623 = arith.minimumf %622, %621 : vector<18x8xf32>
    %cst_259 = arith.constant dense<0.000000e+00> : vector<18x8xf32>
    %624 = tpu.matmul %623, %12, %cst_259 {dimension_numbers = #tpu.dot_dimension_numbers<[1], [0], [0], [1], [0, 0, 1, 1], [], []>} : vector<18x8xf32>, vector<8x8xf32>, vector<18x8xf32> -> vector<18x8xf32>
    %625 = vector.broadcast %13 : vector<1x8xf32> to vector<18x8xf32>
    %626 = arith.addf %624, %625 : vector<18x8xf32>
    %cst_260 = arith.constant 0.000000e+00 : f32
    %cst_261 = arith.constant 6.000000e+00 : f32
    %627 = vector.broadcast %cst_260 : f32 to vector<18x8xf32>
    %628 = arith.maximumf %627, %626 : vector<18x8xf32>
    %629 = vector.broadcast %cst_261 : f32 to vector<18x8xf32>
    %630 = arith.minimumf %629, %628 : vector<18x8xf32>
    %c0_262 = arith.constant 0 : index
    %c5_263 = arith.constant 5 : index
    %c1_264 = arith.constant 1 : index
    %c0_265 = arith.constant 0 : index
    %631 = vector.load %arg9[%c0_262, %c5_263, %c1_264, %c0_265] : memref<1x6x20x8xf32, #tpu.memory_space<vmem>>, vector<1x1x18x8xf32>
    %632 = vector.shape_cast %631 : vector<1x1x18x8xf32> to vector<18x8xf32>
    %633 = vector.shape_cast %630 : vector<18x8xf32> to vector<1x1x18x8xf32>
    tpu.vector_store %arg9[%c0_262, %c5_263, %c1_264, %c0_265], %633 {strides = array<i32>} : memref<1x6x20x8xf32, #tpu.memory_space<vmem>>, vector<1x1x18x8xf32>,
    %c0_266 = arith.constant 0 : index
    %c5_267 = arith.constant 5 : index
    %c0_268 = arith.constant 0 : index
    %c0_269 = arith.constant 0 : index
    %634 = vector.load %arg9[%c0_266, %c5_267, %c0_268, %c0_269] : memref<1x6x20x8xf32, #tpu.memory_space<vmem>>, vector<1x1x1x8xf32>
    %635 = vector.shape_cast %634 : vector<1x1x1x8xf32> to vector<1x8xf32>
    %636 = vector.shape_cast %195 : vector<1x8xf32> to vector<1x1x1x8xf32>
    tpu.vector_store %arg9[%c0_266, %c5_267, %c0_268, %c0_269], %636 {strides = array<i32>} : memref<1x6x20x8xf32, #tpu.memory_space<vmem>>, vector<1x1x1x8xf32>,
    %c0_270 = arith.constant 0 : index
    %c5_271 = arith.constant 5 : index
    %c19_272 = arith.constant 19 : index
    %c0_273 = arith.constant 0 : index
    %637 = vector.load %arg9[%c0_270, %c5_271, %c19_272, %c0_273] : memref<1x6x20x8xf32, #tpu.memory_space<vmem>>, vector<1x1x1x8xf32>
    %638 = vector.shape_cast %637 : vector<1x1x1x8xf32> to vector<1x8xf32>
    %639 = vector.shape_cast %195 : vector<1x8xf32> to vector<1x1x1x8xf32>
    tpu.vector_store %arg9[%c0_270, %c5_271, %c19_272, %c0_273], %639 {strides = array<i32>} : memref<1x6x20x8xf32, #tpu.memory_space<vmem>>, vector<1x1x1x8xf32>,
    return
  }
  func.func @transform_0(%arg0: i32, %arg1: i32) -> (i32, i32, i32, i32) {
    %c0_i32 = arith.constant 0 : i32
    %c0_i32_0 = arith.constant 0 : i32
    %c0_i32_1 = arith.constant 0 : i32
    %c0_i32_2 = arith.constant 0 : i32
    return %arg0, %c0_i32, %c0_i32_0, %c0_i32_1 : i32, i32, i32, i32
  }
  func.func @transform_1(%arg0: i32, %arg1: i32) -> (i32, i32) {
    %c0_i32 = arith.constant 0 : i32
    %c0_i32_0 = arith.constant 0 : i32
    %c0_i32_1 = arith.constant 0 : i32
    return %c0_i32, %c0_i32_0 : i32, i32
  }
  func.func @transform_2(%arg0: i32, %arg1: i32) -> (i32, i32) {
    %c0_i32 = arith.constant 0 : i32
    %c0_i32_0 = arith.constant 0 : i32
    %c0_i32_1 = arith.constant 0 : i32
    return %c0_i32, %c0_i32_0 : i32, i32
  }
  func.func @transform_3(%arg0: i32, %arg1: i32) -> (i32, i32) {
    %c0_i32 = arith.constant 0 : i32
    %c0_i32_0 = arith.constant 0 : i32
    %c0_i32_1 = arith.constant 0 : i32
    return %c0_i32, %c0_i32_0 : i32, i32
  }
  func.func @transform_4(%arg0: i32, %arg1: i32) -> (i32, i32) {
    %c0_i32 = arith.constant 0 : i32
    %c0_i32_0 = arith.constant 0 : i32
    %c0_i32_1 = arith.constant 0 : i32
    return %c0_i32, %c0_i32_0 : i32, i32
  }
  func.func @transform_5(%arg0: i32, %arg1: i32) -> (i32, i32) {
    %c0_i32 = arith.constant 0 : i32
    %c0_i32_0 = arith.constant 0 : i32
    %c0_i32_1 = arith.constant 0 : i32
    return %c0_i32, %c0_i32_0 : i32, i32
  }
  func.func @transform_6(%arg0: i32, %arg1: i32) -> (i32, i32) {
    %c0_i32 = arith.constant 0 : i32
    %c0_i32_0 = arith.constant 0 : i32
    %c0_i32_1 = arith.constant 0 : i32
    return %c0_i32, %c0_i32_0 : i32, i32
  }
  func.func @transform_7(%arg0: i32, %arg1: i32) -> (i32, i32, i32, i32) {
    %c0_i32 = arith.constant 0 : i32
    %c0_i32_0 = arith.constant 0 : i32
    %c0_i32_1 = arith.constant 0 : i32
    return %arg0, %arg1, %c0_i32, %c0_i32_0 : i32, i32, i32, i32
  }
}

</mosaic_0001>

<llo_original>
// kernel: inverted_residual_forward.1
$region0: #{inverted_residual_forward.1}
  #allocation0 [shape = 'u32[]', space=smem, size = 0x4, offset = 0x4, fixed_abs, tag = 'smem constant byte address 0x4 - core index']
  #allocation1 [shape = 'u32[144,128]{1,0:T(1,128)}', space=vmem, size = 0x12000, scoped, tag = 'internal scratch']
  #allocation2 [shape = 'f32[8,20,8]{2,1,0:T(8,128)}', space=vmem, size = 0x18000, scoped, tag = 'scratch operand']
  %s0 = inlined_call_operand.vmem [shape: f32[2,20,20,4], index: 0, kind: input, shape index: {}]
  %s1 = inlined_call_operand.vmem [shape: f32[4,8], index: 1, kind: input, shape index: {}]
  %s2 = inlined_call_operand.vmem [shape: f32[1,8], index: 2, kind: input, shape index: {}]
  %s3 = inlined_call_operand.vmem [shape: f32[9,8], index: 3, kind: input, shape index: {}]
  %s4 = inlined_call_operand.vmem [shape: f32[1,8], index: 4, kind: input, shape index: {}]
  %s5 = inlined_call_operand.vmem [shape: f32[8,8], index: 5, kind: input, shape index: {}]
  %s6 = inlined_call_operand.vmem [shape: f32[1,8], index: 6, kind: input, shape index: {}]
  %s7 = inlined_call_operand.vmem [shape: f32[2,18,20,8], index: 7, kind: output, shape index: {}]
  %s8 = sld [smem:[#allocation0]]
  $region61: #{inverted_residual_forward.1} parent=0
    _
  %s10 = ssub.s32 1, %s8
  %s11 = scalar_select 0, %s10, %s8
  loop: start=0, step=1, limit=8
  $region2: #{inverted_residual_forward.1} parent=0 // loop_pre_header
    _
  $region3: #{inverted_residual_forward.1} parent=0 // loop_header
    %s13 = sphi 0, %s17
    %p14 = scmp.ge.s32.totalorder %s13, 8
    %s20 = sphi 0, %s32
    %s21 = sphi 0, %s28
    %s22 = sphi 0, %s20
    %s23 = sphi 0, %s21
    %s24 = sphi 0, %s22
    %s25 = sphi 0, %s23
    %s35 = sphi 0, %s37
    %s38 = sphi 0, %s35
    %s39 = sphi 0, %s38
    %s55 = sphi 0, %s39
    %s59 = sphi 0, %s59
    %s61 = sphi 0, %s59
    %s62 = sphi 0, %s61
    %s76 = sphi 0, %s62
    %s80 = sphi 0, %s80
    %s82 = sphi 0, %s80
    %s83 = sphi 0, %s82
    %s97 = sphi 0, %s83
    %s101 = sphi 0, %s101
    %s103 = sphi 0, %s101
    %s104 = sphi 0, %s103
    %s118 = sphi 0, %s104
    %s122 = sphi 0, %s122
    %s124 = sphi 0, %s122
    %s125 = sphi 0, %s124
    %s139 = sphi 0, %s125
    %s143 = sphi 0, %s143
    %s145 = sphi 0, %s143
    %s146 = sphi 0, %s145
    %s160 = sphi 0, %s146
    %s164 = sphi 0, %s164
    %s166 = sphi 0, %s164
    %s167 = sphi 0, %s166
    %s181 = sphi 0, %s167
    %s189 = sphi 0, %s191
    %s192 = sphi 0, %s189
    %s193 = sphi 0, %s192
    %s209 = sphi 0, %s193
  $region4: #{inverted_residual_forward.1} parent=0 // loop_header_branch
    %16 = sbr.rel (%p14) target = $region8
  $region5: #{inverted_residual_forward.1} parent=0 // loop_body
    %s18 = ssub.s32 %s13, 1
    %s19 = ssub.s32 %s13, 2
    %s26 = sadd.s32 1, %s21
    %p27 = scmp.ge.s32.totalorder %s26, 3
    %s28 = scalar_select %p27, 0, %s26
    %s29 = sadd.s32 1, %s20
    %s30 = scalar_select %p27, %s29, %s20
    %p31 = scmp.ge.s32.totalorder %s30, 2
    %s32 = scalar_select %p31, 0, %s30
    %s33 = ssub.s32 %s20, %s32
    %p34 = scmp.eq.s32.totalorder %s33, 0
    %s36 = sadd.s32 %s35, 1
    %s37 = scalar_select %p34, %s35, %s36
    %p40 = pneg %p34
    %p41 = scmp.eq.s32.totalorder %s13, 5
    %p42 = por %p40, %p41
    %p43 = scmp.ne.s32.totalorder %s35, %s38
    %p44 = scmp.eq.s32.totalorder %s13, 0
    %p45 = por %p43, %p44
    %p46 = scmp.ne.s32.totalorder %s35, %s38
    %p47 = scmp.eq.s32.totalorder %s18, 5
    %p48 = por %p46, %p47
    %p49 = scmp.ne.s32.totalorder %s38, %s39
    %p50 = scmp.eq.s32.totalorder %s18, 0
    %p51 = por %p49, %p50
    %p52 = scmp.ne.s32.totalorder %s38, %s39
    %p53 = scmp.eq.s32.totalorder %s19, 5
    %p54 = por %p52, %p53
    %p56 = scmp.ne.s32.totalorder %s39, %s55
    %p57 = scmp.eq.s32.totalorder %s19, 0
    %p58 = por %p56, %p57
    %s60 = sadd.s32 %s59, 1
    %p63 = scmp.eq.s32.totalorder %s13, 5
    %p64 = scmp.ne.s32.totalorder %s59, %s61
    %p65 = scmp.eq.s32.totalorder %s13, 0
    %p66 = por %p64, %p65
    %p67 = scmp.ne.s32.totalorder %s59, %s61
    %p68 = scmp.eq.s32.totalorder %s18, 5
    %p69 = por %p67, %p68
    %p70 = scmp.ne.s32.totalorder %s61, %s62
    %p71 = scmp.eq.s32.totalorder %s18, 0
    %p72 = por %p70, %p71
    %p73 = scmp.ne.s32.totalorder %s61, %s62
    %p74 = scmp.eq.s32.totalorder %s19, 5
    %p75 = por %p73, %p74
    %p77 = scmp.ne.s32.totalorder %s62, %s76
    %p78 = scmp.eq.s32.totalorder %s19, 0
    %p79 = por %p77, %p78
    %s81 = sadd.s32 %s80, 1
    %p84 = scmp.eq.s32.totalorder %s13, 5
    %p85 = scmp.ne.s32.totalorder %s80, %s82
    %p86 = scmp.eq.s32.totalorder %s13, 0
    %p87 = por %p85, %p86
    %p88 = scmp.ne.s32.totalorder %s80, %s82
    %p89 = scmp.eq.s32.totalorder %s18, 5
    %p90 = por %p88, %p89
    %p91 = scmp.ne.s32.totalorder %s82, %s83
    %p92 = scmp.eq.s32.totalorder %s18, 0
    %p93 = por %p91, %p92
    %p94 = scmp.ne.s32.totalorder %s82, %s83
    %p95 = scmp.eq.s32.totalorder %s19, 5
    %p96 = por %p94, %p95
    %p98 = scmp.ne.s32.totalorder %s83, %s97
    %p99 = scmp.eq.s32.totalorder %s19, 0
    %p100 = por %p98, %p99
    %s102 = sadd.s32 %s101, 1
    %p105 = scmp.eq.s32.totalorder %s13, 5
    %p106 = scmp.ne.s32.totalorder %s101, %s103
    %p107 = scmp.eq.s32.totalorder %s13, 0
    %p108 = por %p106, %p107
    %p109 = scmp.ne.s32.totalorder %s101, %s103
    %p110 = scmp.eq.s32.totalorder %s18, 5
    %p111 = por %p109, %p110
    %p112 = scmp.ne.s32.totalorder %s103, %s104
    %p113 = scmp.eq.s32.totalorder %s18, 0
    %p114 = por %p112, %p113
    %p115 = scmp.ne.s32.totalorder %s103, %s104
    %p116 = scmp.eq.s32.totalorder %s19, 5
    %p117 = por %p115, %p116
    %p119 = scmp.ne.s32.totalorder %s104, %s118
    %p120 = scmp.eq.s32.totalorder %s19, 0
    %p121 = por %p119, %p120
    %s123 = sadd.s32 %s122, 1
    %p126 = scmp.eq.s32.totalorder %s13, 5
    %p127 = scmp.ne.s32.totalorder %s122, %s124
    %p128 = scmp.eq.s32.totalorder %s13, 0
    %p129 = por %p127, %p128
    %p130 = scmp.ne.s32.totalorder %s122, %s124
    %p131 = scmp.eq.s32.totalorder %s18, 5
    %p132 = por %p130, %p131
    %p133 = scmp.ne.s32.totalorder %s124, %s125
    %p134 = scmp.eq.s32.totalorder %s18, 0
    %p135 = por %p133, %p134
    %p136 = scmp.ne.s32.totalorder %s124, %s125
    %p137 = scmp.eq.s32.totalorder %s19, 5
    %p138 = por %p136, %p137
    %p140 = scmp.ne.s32.totalorder %s125, %s139
    %p141 = scmp.eq.s32.totalorder %s19, 0
    %p142 = por %p140, %p141
    %s144 = sadd.s32 %s143, 1
    %p147 = scmp.eq.s32.totalorder %s13, 5
    %p148 = scmp.ne.s32.totalorder %s143, %s145
    %p149 = scmp.eq.s32.totalorder %s13, 0
    %p150 = por %p148, %p149
    %p151 = scmp.ne.s32.totalorder %s143, %s145
    %p152 = scmp.eq.s32.totalorder %s18, 5
    %p153 = por %p151, %p152
    %p154 = scmp.ne.s32.totalorder %s145, %s146
    %p155 = scmp.eq.s32.totalorder %s18, 0
    %p156 = por %p154, %p155
    %p157 = scmp.ne.s32.totalorder %s145, %s146
    %p158 = scmp.eq.s32.totalorder %s19, 5
    %p159 = por %p157, %p158
    %p161 = scmp.ne.s32.totalorder %s146, %s160
    %p162 = scmp.eq.s32.totalorder %s19, 0
    %p163 = por %p161, %p162
    %s165 = sadd.s32 %s164, 1
    %p168 = scmp.eq.s32.totalorder %s13, 5
    %p169 = scmp.ne.s32.totalorder %s164, %s166
    %p170 = scmp.eq.s32.totalorder %s13, 0
    %p171 = por %p169, %p170
    %p172 = scmp.ne.s32.totalorder %s164, %s166
    %p173 = scmp.eq.s32.totalorder %s18, 5
    %p174 = por %p172, %p173
    %p175 = scmp.ne.s32.totalorder %s166, %s167
    %p176 = scmp.eq.s32.totalorder %s18, 0
    %p177 = por %p175, %p176
    %p178 = scmp.ne.s32.totalorder %s166, %s167
    %p179 = scmp.eq.s32.totalorder %s19, 5
    %p180 = por %p178, %p179
    %p182 = scmp.ne.s32.totalorder %s167, %s181
    %p183 = scmp.eq.s32.totalorder %s19, 0
    %p184 = por %p182, %p183
    %s185 = ssub.s32 %s20, %s32
    %s186 = ssub.s32 %s21, %s28
    %s187 = sor.u32 %s185, %s186
    %p188 = scmp.eq.s32.totalorder %s187, 0
    %s190 = sadd.s32 %s189, 1
    %s191 = scalar_select %p188, %s189, %s190
    %p194 = pneg %p188
    %p195 = scmp.eq.s32.totalorder %s13, 5
    %p196 = por %p194, %p195
    %p197 = scmp.ne.s32.totalorder %s189, %s192
    %p198 = scmp.eq.s32.totalorder %s13, 0
    %p199 = por %p197, %p198
    %p200 = scmp.ne.s32.totalorder %s189, %s192
    %p201 = scmp.eq.s32.totalorder %s18, 5
    %p202 = por %p200, %p201
    %p203 = scmp.ne.s32.totalorder %s192, %s193
    %p204 = scmp.eq.s32.totalorder %s18, 0
    %p205 = por %p203, %p204
    %p206 = scmp.ne.s32.totalorder %s192, %s193
    %p207 = scmp.eq.s32.totalorder %s19, 5
    %p208 = por %p206, %p207
    %p210 = scmp.ne.s32.totalorder %s193, %s209
    %p211 = scmp.eq.s32.totalorder %s19, 0
    %p212 = por %p210, %p211
    %p213 = scmp.le.s32.totalorder 1, %s13
    %p214 = scmp.lt.s32.totalorder %s13, 7
    %p215 = pnand %p213, %p214
    %p216 = pneg %p215
    // Predicated region
    $region9: #{inverted_residual_forward.1} parent=5 // pred_check
      _
    $region10: #{inverted_residual_forward.1} parent=5 // pred_check_branch
      %218 = sbr.rel (%p215) target = $region12
    $region11: #{inverted_residual_forward.1} parent=5 // pred_region
      %s219 = ssub.s32 %s13, 1
      // Predicated region
      $region13: #{inverted_residual_forward.1} parent=11 // pred_check
        %p220 = pneg %p72
      $region14: #{inverted_residual_forward.1} parent=11 // pred_check_branch
        %222 = sbr.rel (%p220) target = $region16
      $region15: #{inverted_residual_forward.1} parent=11 // pred_region
        _
      $region16: #{inverted_residual_forward.1} parent=11 // pred_fallthru
        _
      // Predicated region
      $region17: #{inverted_residual_forward.1} parent=11 // pred_check
        %p223 = pneg %p93
      $region18: #{inverted_residual_forward.1} parent=11 // pred_check_branch
        %225 = sbr.rel (%p223) target = $region20
      $region19: #{inverted_residual_forward.1} parent=11 // pred_region
        _
      $region20: #{inverted_residual_forward.1} parent=11 // pred_fallthru
        _
      // Predicated region
      $region21: #{inverted_residual_forward.1} parent=11 // pred_check
        %p226 = pneg %p114
      $region22: #{inverted_residual_forward.1} parent=11 // pred_check_branch
        %228 = sbr.rel (%p226) target = $region24
      $region23: #{inverted_residual_forward.1} parent=11 // pred_region
        _
      $region24: #{inverted_residual_forward.1} parent=11 // pred_fallthru
        _
      // Predicated region
      $region25: #{inverted_residual_forward.1} parent=11 // pred_check
        %p229 = pneg %p135
      $region26: #{inverted_residual_forward.1} parent=11 // pred_check_branch
        %231 = sbr.rel (%p229) target = $region28
      $region27: #{inverted_residual_forward.1} parent=11 // pred_region
        _
      $region28: #{inverted_residual_forward.1} parent=11 // pred_fallthru
        _
      // Predicated region
      $region29: #{inverted_residual_forward.1} parent=11 // pred_check
        %p232 = pneg %p156
      $region30: #{inverted_residual_forward.1} parent=11 // pred_check_branch
        %234 = sbr.rel (%p232) target = $region32
      $region31: #{inverted_residual_forward.1} parent=11 // pred_region
        _
      $region32: #{inverted_residual_forward.1} parent=11 // pred_fallthru
        _
      // Predicated region
      $region33: #{inverted_residual_forward.1} parent=11 // pred_check
        %p235 = pneg %p177
      $region34: #{inverted_residual_forward.1} parent=11 // pred_check_branch
        %237 = sbr.rel (%p235) target = $region36
      $region35: #{inverted_residual_forward.1} parent=11 // pred_region
        _
      $region36: #{inverted_residual_forward.1} parent=11 // pred_fallthru
        _
    $region12: #{inverted_residual_forward.1} parent=5 // pred_fallthru
      _
    %p238 = scmp.lt.s32.totalorder %s13, 6
    // Predicated region
    $region37: #{inverted_residual_forward.1} parent=5 // pred_check
      %p239 = pneg %p238
    $region38: #{inverted_residual_forward.1} parent=5 // pred_check_branch
      %241 = sbr.rel (%p239) target = $region40
    $region39: #{inverted_residual_forward.1} parent=5 // pred_region
      // Predicated region
      $region41: #{inverted_residual_forward.1} parent=39 // pred_check
        %p242 = pneg %p45
      $region42: #{inverted_residual_forward.1} parent=39 // pred_check_branch
        %244 = sbr.rel (%p242) target = $region44
      $region43: #{inverted_residual_forward.1} parent=39 // pred_region
        %p245 = scmp.lt.s32.totalorder %s20, 1
        %s246 = scalar_select %p245, %s20, 1
        %s247 = smul.addr %s246, 60
        %s248 = smul.addr %s247, 8
        %s249 = scalar_lea.vmem %s0, %s248
      $region44: #{inverted_residual_forward.1} parent=39 // pred_fallthru
        _
    $region40: #{inverted_residual_forward.1} parent=5 // pred_fallthru
      _
    %p250 = scmp.le.s32.totalorder 1, %s13
    %p251 = scmp.lt.s32.totalorder %s13, 7
    %p252 = pnand %p250, %p251
    %p253 = pneg %p252
    // Predicated region
    $region45: #{inverted_residual_forward.1} parent=5 // pred_check
      _
    $region46: #{inverted_residual_forward.1} parent=5 // pred_check_branch
      %255 = sbr.rel (%p252) target = $region48
    $region47: #{inverted_residual_forward.1} parent=5 // pred_region
      %s256 = ssub.s32 %s13, 1
      %p257 = scmp.lt.s32.totalorder %s22, 1
      %s258 = scalar_select %p257, %s22, 1
      %s259 = smul.addr %s258, 60
      %s260 = smul.addr %s259, 8
      %s261 = scalar_lea.vmem %s0, %s260
      %p262 = pneg %p51
      %p263 = pneg %p48
      %p264 = pneg %p72
      %p265 = pneg %p69
      %p266 = pneg %p93
      %p267 = pneg %p90
      %p268 = pneg %p114
      %p269 = pneg %p111
      %p270 = pneg %p135
      %p271 = pneg %p132
      %p272 = pneg %p156
      %p273 = pneg %p153
      %p274 = pneg %p177
      %p275 = pneg %p174
      %p276 = pneg %p205
      %p277 = pneg %p202
      %s278 = smul.u32 6, %s23
      %p279 = scmp.lt.s32.totalorder %s22, 1
      %s280 = scalar_select %p279, %s22, 1
      %p281 = scmp.lt.s32.totalorder %s278, 17
      %s282 = scalar_select %p281, %s278, 17
      %s283 = smul.addr %s282, 3
      %s284 = smul.addr %s280, 54
      %s285 = sadd.s32 %s283, %s284
      %s286 = smul.addr %s285, 8
      %s287 = scalar_lea.vmem %s7, %s286
      %p288 = scmp.lt.s32.totalorder %s22, 1
      %s289 = scalar_select %p288, %s22, 1
      %s290 = smul.addr %s289, 60
      %s291 = smul.addr %s290, 8
      %s292 = scalar_lea.vmem %s0, %s291
      %s293 = smul.u32 6, %s23
      %p294 = scmp.lt.s32.totalorder %s22, 1
      %s295 = scalar_select %p294, %s22, 1
      %p296 = scmp.lt.s32.totalorder %s293, 17
      %s297 = scalar_select %p296, %s293, 17
      %s298 = smul.addr %s297, 3
      %s299 = smul.addr %s295, 54
      %s300 = sadd.s32 %s298, %s299
      %s301 = smul.addr %s300, 8
      %s302 = scalar_lea.vmem %s7, %s301
      %s303 = smul.u32 6, %s23
      %s304 = smul.u32 %s23, 6
      %v305 = vlaneseq
      %v306 = vshrl.u32 %v305, 7
      %v307 = vadd.s32 %v306, 8
      %v308 = vadd.s32 %v306, 16
      %vm309 = vcmp.eq.s32.totalorder %v306, 0
      %vm310 = vcmp.eq.s32.totalorder %v307, 0
      %vm311 = vcmp.eq.s32.totalorder %v308, 0
      %vm312 = vcmp.eq.s32.totalorder %v306, 19
      %vm313 = vcmp.eq.s32.totalorder %v307, 19
      %vm314 = vcmp.eq.s32.totalorder %v308, 19
      %vm315 = vmor %vm309, %vm312
      %vm316 = vmor %vm310, %vm313
      %vm317 = vmor %vm311, %vm314
      %v318 = vsel %vm315, 0.0, 1.0
      %v319 = vsel %vm316, 0.0, 1.0
      %v320 = vsel %vm317, 0.0, 1.0
      %v321 = vld [vmem:[%s3] sm:$0xff]
      %v322 = vld [vmem:[%s3 + $0x8] sm:$0x1]
      %v323 = vld [vmem:[%s4] sm:$0x1]
      %v324 = vld [vmem:[%s5] sm:$0xff]
      %v325 = vld [vmem:[%s6] sm:$0x1]
      %v326 = vld [vmem:[%s1] sm:$0xf]
      %v327 = vld [vmem:[%s2] sm:$0x1]
      %s328 = smul.u32 %s304, 24
      %s329 = scalar_lea.vmem %s292, %s328
      %v330 = vld [vmem:[%s329] sm:$0xff]
      %v331 = vld [vmem:[%s329 + $0x8] sm:$0xff]
      %v332 = vld [vmem:[%s329 + $0x10] sm:$0xf]
      %v334 = vlaneseq
      %v335 = vshrl.u32 %v334, 7
      %v336 = vsub.s32 0, %v335
      %v337 = vrot.slane %v327, %v336
      %vm339 = vcmask 31744
      %v341 = vsel %vm339, %v330, 0
      %v344 = vsel %vm339, %v331, 0
      %v347 = vsel %vm339, %v332, 0
      %vm349 = vcmask 1043456
      %v351 = vsel %vm349, %v326, 0
      %353 = vmatprep.subr.mxu0 0.0
      %354 = vmatpush1.msra.mxu0 0.0
      %355 = vmatprep.subr.mxu0 0.0
      %356 = vmatpush1.msra.mxu0 0.0
      %357 = vmatprep.subr.mxu0 0.0
      %358 = vmatpush1.msra.mxu0 0.0
      %359 = vmatprep.subr.mxu0 0.0
      %360 = vmatpush1.msra.mxu0 0.0
      %361 = vmatprep.subr.mxu0 0.0
      %362 = vmatpush1.msra.mxu0 0.0
      %363 = vmatprep.subr.mxu0 0.0
      %364 = vmatpush1.msra.mxu0 0.0
      %365 = vmatprep.subr.mxu0 0.0
      %366 = vmatpush1.msra.mxu0 0.0
      %367 = vmatprep.subr.mxu0 0.0
      %368 = vmatpush1.msra.mxu0 0.0
      %369 = vmatprep.subr.mxu0 0.0
      %370 = vmatpush1.msra.mxu0 0.0
      %371 = vmatprep.subr.mxu0 0.0
      %372 = vmatpush1.msra.mxu0 0.0
      %373 = vmatprep.subr.mxu0 0.0
      %374 = vmatpush1.msra.mxu0 0.0
      %375 = vmatprep.subr.mxu0 0.0
      %376 = vmatpush1.msra.mxu0 0.0
      %377 = vmatprep.subr.mxu0 0.0
      %378 = vmatpush1.msra.mxu0 0.0
      %379 = vmatprep.subr.mxu0 0.0
      %380 = vmatpush1.msra.mxu0 0.0
      %381 = vmatprep.subr.mxu0 0.0
      %382 = vmatpush1.msra.mxu0 0.0
      %383 = vmatprep.subr.mxu0 0.0
      %384 = vmatpush1.msra.mxu0 %v351
      %385 = vmatprep.subr.mxu0 0.0
      %386 = vmatpush2.msra.mxu0 0.0
      %387 = vmatprep.subr.mxu0 0.0
      %388 = vmatpush2.msra.mxu0 0.0
      %389 = vmatprep.subr.mxu0 0.0
      %390 = vmatpush2.msra.mxu0 0.0
      %391 = vmatprep.subr.mxu0 0.0
      %392 = vmatpush2.msra.mxu0 0.0
      %393 = vmatprep.subr.mxu0 0.0
      %394 = vmatpush2.msra.mxu0 0.0
      %395 = vmatprep.subr.mxu0 0.0
      %396 = vmatpush2.msra.mxu0 0.0
      %397 = vmatprep.subr.mxu0 0.0
      %398 = vmatpush2.msra.mxu0 0.0
      %399 = vmatprep.subr.mxu0 0.0
      %400 = vmatpush2.msra.mxu0 0.0
      %401 = vmatprep.subr.mxu0 0.0
      %402 = vmatpush2.msra.mxu0 0.0
      %403 = vmatprep.subr.mxu0 0.0
      %404 = vmatpush2.msra.mxu0 0.0
      %405 = vmatprep.subr.mxu0 0.0
      %406 = vmatpush2.msra.mxu0 0.0
      %407 = vmatprep.subr.mxu0 0.0
      %408 = vmatpush2.msra.mxu0 0.0
      %409 = vmatprep.subr.mxu0 0.0
      %410 = vmatpush2.msra.mxu0 0.0
      %411 = vmatprep.subr.mxu0 0.0
      %412 = vmatpush2.msra.mxu0 0.0
      %413 = vmatprep.subr.mxu0 0.0
      %414 = vmatpush2.msra.mxu0 0.0
      %415 = vmatprep.subr.mxu0 0.0
      %416 = vmatpush2.msra.mxu0 0.0
      %417 = vmatprep.mubr.f32.mxu0 0.0
      %418 = vmatmul.mubr.f32.gmra.mxu0 %v341
      %v419 = vpop.f32.mrf.mxu0
      %v420 = vadd.f32 %v337, %v419
      %v421 = vpop.f32.mrf.mxu0
      %422 = vmatprep.mubr.f32.mxu0 0.0
      %423 = vmatmul.mubr.f32.gmra.mxu0 %v344
      %v424 = vpop.f32.mrf.mxu0
      %v425 = vadd.f32 %v337, %v424
      %v426 = vpop.f32.mrf.mxu0
      %427 = vmatprep.mubr.f32.mxu0 0.0
      %428 = vmatmul.mubr.f32.gmra.mxu0 %v347
      %v429 = vpop.f32.mrf.mxu0
      %v430 = vadd.f32 %v337, %v429
      %v431 = vpop.f32.mrf.mxu0
      %432 = vdwg.mxu0
      %v433 = vmax.f32 %v420, 0.0
      %v434 = vmax.f32 %v425, 0.0
      %v435 = vmax.f32 %v430, 0.0
      %v436 = vmin.f32 %v433, 6.0
      %v437 = vmin.f32 %v434, 6.0
      %v438 = vmin.f32 %v435, 6.0
      %p439 = scmp.eq.s32.totalorder %s304, 0
      %p440 = scmp.eq.s32.totalorder %s304, 19
      %p441 = por %p439, %p440
      %s442 = scalar_select %p441, 0.0, 1.0
      %v443 = vstv %s442
      %v444 = vmul.f32 %v318, %v443
      %v445 = vmul.f32 %v319, %v443
      %v446 = vmul.f32 %v320, %v443
      %v447 = vmul.f32 %v436, %v444
      %v448 = vmul.f32 %v437, %v445
      %v449 = vmul.f32 %v438, %v446
      %vm450 = vcmask 64512
      %451 = vst.msk [vmem:[#allocation2] sm:$0xff] %vm450, %v447
      %452 = vst.msk [vmem:[#allocation2 + $0x8] sm:$0xff] %vm450, %v448
      %vm453 = vcmask 60416
      %454 = vst.msk [vmem:[#allocation2 + $0x10] sm:$0xf] %vm453, %v449
      %s455 = sadd.s32 %s304, 1
      %s456 = smul.u32 %s455, 24
      %s457 = scalar_lea.vmem %s292, %s456
      %v458 = vld [vmem:[%s457] sm:$0xff]
      %v459 = vld [vmem:[%s457 + $0x8] sm:$0xff]
      %v460 = vld [vmem:[%s457 + $0x10] sm:$0xf]
      %v462 = vsel %vm339, %v458, 0
      %v465 = vsel %vm339, %v459, 0
      %v468 = vsel %vm339, %v460, 0
      %470 = vmatprep.subr.mxu0 0.0
      %471 = vmatpush1.msra.mxu0 0.0
      %472 = vmatprep.subr.mxu0 0.0
      %473 = vmatpush1.msra.mxu0 0.0
      %474 = vmatprep.subr.mxu0 0.0
      %475 = vmatpush1.msra.mxu0 0.0
      %476 = vmatprep.subr.mxu0 0.0
      %477 = vmatpush1.msra.mxu0 0.0
      %478 = vmatprep.subr.mxu0 0.0
      %479 = vmatpush1.msra.mxu0 0.0
      %480 = vmatprep.subr.mxu0 0.0
      %481 = vmatpush1.msra.mxu0 0.0
      %482 = vmatprep.subr.mxu0 0.0
      %483 = vmatpush1.msra.mxu0 0.0
      %484 = vmatprep.subr.mxu0 0.0
      %485 = vmatpush1.msra.mxu0 0.0
      %486 = vmatprep.subr.mxu0 0.0
      %487 = vmatpush1.msra.mxu0 0.0
      %488 = vmatprep.subr.mxu0 0.0
      %489 = vmatpush1.msra.mxu0 0.0
      %490 = vmatprep.subr.mxu0 0.0
      %491 = vmatpush1.msra.mxu0 0.0
      %492 = vmatprep.subr.mxu0 0.0
      %493 = vmatpush1.msra.mxu0 0.0
      %494 = vmatprep.subr.mxu0 0.0
      %495 = vmatpush1.msra.mxu0 0.0
      %496 = vmatprep.subr.mxu0 0.0
      %497 = vmatpush1.msra.mxu0 0.0
      %498 = vmatprep.subr.mxu0 0.0
      %499 = vmatpush1.msra.mxu0 0.0
      %500 = vmatprep.subr.mxu0 0.0
      %501 = vmatpush1.msra.mxu0 %v351
      %502 = vmatprep.subr.mxu0 0.0
      %503 = vmatpush2.msra.mxu0 0.0
      %504 = vmatprep.subr.mxu0 0.0
      %505 = vmatpush2.msra.mxu0 0.0
      %506 = vmatprep.subr.mxu0 0.0
      %507 = vmatpush2.msra.mxu0 0.0
      %508 = vmatprep.subr.mxu0 0.0
      %509 = vmatpush2.msra.mxu0 0.0
      %510 = vmatprep.subr.mxu0 0.0
      %511 = vmatpush2.msra.mxu0 0.0
      %512 = vmatprep.subr.mxu0 0.0
      %513 = vmatpush2.msra.mxu0 0.0
      %514 = vmatprep.subr.mxu0 0.0
      %515 = vmatpush2.msra.mxu0 0.0
      %516 = vmatprep.subr.mxu0 0.0
      %517 = vmatpush2.msra.mxu0 0.0
      %518 = vmatprep.subr.mxu0 0.0
      %519 = vmatpush2.msra.mxu0 0.0
      %520 = vmatprep.subr.mxu0 0.0
      %521 = vmatpush2.msra.mxu0 0.0
      %522 = vmatprep.subr.mxu0 0.0
      %523 = vmatpush2.msra.mxu0 0.0
      %524 = vmatprep.subr.mxu0 0.0
      %525 = vmatpush2.msra.mxu0 0.0
      %526 = vmatprep.subr.mxu0 0.0
      %527 = vmatpush2.msra.mxu0 0.0
      %528 = vmatprep.subr.mxu0 0.0
      %529 = vmatpush2.msra.mxu0 0.0
      %530 = vmatprep.subr.mxu0 0.0
      %531 = vmatpush2.msra.mxu0 0.0
      %532 = vmatprep.subr.mxu0 0.0
      %533 = vmatpush2.msra.mxu0 0.0
      %534 = vmatprep.mubr.f32.mxu0 0.0
      %535 = vmatmul.mubr.f32.gmra.mxu0 %v462
      %v536 = vpop.f32.mrf.mxu0
      %v537 = vadd.f32 %v337, %v536
      %v538 = vpop.f32.mrf.mxu0
      %539 = vmatprep.mubr.f32.mxu0 0.0
      %540 = vmatmul.mubr.f32.gmra.mxu0 %v465
      %v541 = vpop.f32.mrf.mxu0
      %v542 = vadd.f32 %v337, %v541
      %v543 = vpop.f32.mrf.mxu0
      %544 = vmatprep.mubr.f32.mxu0 0.0
      %545 = vmatmul.mubr.f32.gmra.mxu0 %v468
      %v546 = vpop.f32.mrf.mxu0
      %v547 = vadd.f32 %v337, %v546
      %v548 = vpop.f32.mrf.mxu0
      %549 = vdwg.mxu0
      %v550 = vmax.f32 %v537, 0.0
      %v551 = vmax.f32 %v542, 0.0
      %v552 = vmax.f32 %v547, 0.0
      %v553 = vmin.f32 %v550, 6.0
      %v554 = vmin.f32 %v551, 6.0
      %v555 = vmin.f32 %v552, 6.0
      %p556 = scmp.eq.s32.totalorder %s455, 0
      %p557 = scmp.eq.s32.totalorder %s455, 19
      %p558 = por %p556, %p557
      %s559 = scalar_select %p558, 0.0, 1.0
      %v560 = vstv %s559
      %v561 = vmul.f32 %v318, %v560
      %v562 = vmul.f32 %v319, %v560
      %v563 = vmul.f32 %v320, %v560
      %v564 = vmul.f32 %v553, %v561
      %v565 = vmul.f32 %v554, %v562
      %v566 = vmul.f32 %v555, %v563
      %s567 = scalar_lea.vmem [#allocation2], 24
      %568 = vst.msk [vmem:[%s567] sm:$0xff] %vm450, %v564
      %569 = vst.msk [vmem:[%s567 + $0x8] sm:$0xff] %vm450, %v565
      %570 = vst.msk [vmem:[%s567 + $0x10] sm:$0xf] %vm453, %v566
      %s571 = sadd.s32 %s304, 2
      %s572 = smul.u32 %s571, 24
      %s573 = scalar_lea.vmem %s292, %s572
      %v574 = vld [vmem:[%s573] sm:$0xff]
      %v575 = vld [vmem:[%s573 + $0x8] sm:$0xff]
      %v576 = vld [vmem:[%s573 + $0x10] sm:$0xf]
      %v578 = vsel %vm339, %v574, 0
      %v581 = vsel %vm339, %v575, 0
      %v584 = vsel %vm339, %v576, 0
      %586 = vmatprep.subr.mxu0 0.0
      %587 = vmatpush1.msra.mxu0 0.0
      %588 = vmatprep.subr.mxu0 0.0
      %589 = vmatpush1.msra.mxu0 0.0
      %590 = vmatprep.subr.mxu0 0.0
      %591 = vmatpush1.msra.mxu0 0.0
      %592 = vmatprep.subr.mxu0 0.0
      %593 = vmatpush1.msra.mxu0 0.0
      %594 = vmatprep.subr.mxu0 0.0
      %595 = vmatpush1.msra.mxu0 0.0
      %596 = vmatprep.subr.mxu0 0.0
      %597 = vmatpush1.msra.mxu0 0.0
      %598 = vmatprep.subr.mxu0 0.0
      %599 = vmatpush1.msra.mxu0 0.0
      %600 = vmatprep.subr.mxu0 0.0
      %601 = vmatpush1.msra.mxu0 0.0
      %602 = vmatprep.subr.mxu0 0.0
      %603 = vmatpush1.msra.mxu0 0.0
      %604 = vmatprep.subr.mxu0 0.0
      %605 = vmatpush1.msra.mxu0 0.0
      %606 = vmatprep.subr.mxu0 0.0
      %607 = vmatpush1.msra.mxu0 0.0
      %608 = vmatprep.subr.mxu0 0.0
      %609 = vmatpush1.msra.mxu0 0.0
      %610 = vmatprep.subr.mxu0 0.0
      %611 = vmatpush1.msra.mxu0 0.0
      %612 = vmatprep.subr.mxu0 0.0
      %613 = vmatpush1.msra.mxu0 0.0
      %614 = vmatprep.subr.mxu0 0.0
      %615 = vmatpush1.msra.mxu0 0.0
      %616 = vmatprep.subr.mxu0 0.0
      %617 = vmatpush1.msra.mxu0 %v351
      %618 = vmatprep.subr.mxu0 0.0
      %619 = vmatpush2.msra.mxu0 0.0
      %620 = vmatprep.subr.mxu0 0.0
      %621 = vmatpush2.msra.mxu0 0.0
      %622 = vmatprep.subr.mxu0 0.0
      %623 = vmatpush2.msra.mxu0 0.0
      %624 = vmatprep.subr.mxu0 0.0
      %625 = vmatpush2.msra.mxu0 0.0
      %626 = vmatprep.subr.mxu0 0.0
      %627 = vmatpush2.msra.mxu0 0.0
      %628 = vmatprep.subr.mxu0 0.0
      %629 = vmatpush2.msra.mxu0 0.0
      %630 = vmatprep.subr.mxu0 0.0
      %631 = vmatpush2.msra.mxu0 0.0
      %632 = vmatprep.subr.mxu0 0.0
      %633 = vmatpush2.msra.mxu0 0.0
      %634 = vmatprep.subr.mxu0 0.0
      %635 = vmatpush2.msra.mxu0 0.0
      %636 = vmatprep.subr.mxu0 0.0
      %637 = vmatpush2.msra.mxu0 0.0
      %638 = vmatprep.subr.mxu0 0.0
      %639 = vmatpush2.msra.mxu0 0.0
      %640 = vmatprep.subr.mxu0 0.0
      %641 = vmatpush2.msra.mxu0 0.0
      %642 = vmatprep.subr.mxu0 0.0
      %643 = vmatpush2.msra.mxu0 0.0
      %644 = vmatprep.subr.mxu0 0.0
      %645 = vmatpush2.msra.mxu0 0.0
      %646 = vmatprep.subr.mxu0 0.0
      %647 = vmatpush2.msra.mxu0 0.0
      %648 = vmatprep.subr.mxu0 0.0
      %649 = vmatpush2.msra.mxu0 0.0
      %650 = vmatprep.mubr.f32.mxu0 0.0
      %651 = vmatmul.mubr.f32.gmra.mxu0 %v578
      %v652 = vpop.f32.mrf.mxu0
      %v653 = vadd.f32 %v337, %v652
      %v654 = vpop.f32.mrf.mxu0
      %655 = vmatprep.mubr.f32.mxu0 0.0
      %656 = vmatmul.mubr.f32.gmra.mxu0 %v581
      %v657 = vpop.f32.mrf.mxu0
      %v658 = vadd.f32 %v337, %v657
      %v659 = vpop.f32.mrf.mxu0
      %660 = vmatprep.mubr.f32.mxu0 0.0
      %661 = vmatmul.mubr.f32.gmra.mxu0 %v584
      %v662 = vpop.f32.mrf.mxu0
      %v663 = vadd.f32 %v337, %v662
      %v664 = vpop.f32.mrf.mxu0
      %665 = vdwg.mxu0
      %v666 = vmax.f32 %v653, 0.0
      %v667 = vmax.f32 %v658, 0.0
      %v668 = vmax.f32 %v663, 0.0
      %v669 = vmin.f32 %v666, 6.0
      %v670 = vmin.f32 %v667, 6.0
      %v671 = vmin.f32 %v668, 6.0
      %p672 = scmp.eq.s32.totalorder %s571, 0
      %p673 = scmp.eq.s32.totalorder %s571, 19
      %p674 = por %p672, %p673
      %s675 = scalar_select %p674, 0.0, 1.0
      %v676 = vstv %s675
      %v677 = vmul.f32 %v318, %v676
      %v678 = vmul.f32 %v319, %v676
      %v679 = vmul.f32 %v320, %v676
      %v680 = vmul.f32 %v669, %v677
      %v681 = vmul.f32 %v670, %v678
      %v682 = vmul.f32 %v671, %v679
      %s683 = scalar_lea.vmem [#allocation2], 48
      %684 = vst.msk [vmem:[%s683] sm:$0xff] %vm450, %v680
      %685 = vst.msk [vmem:[%s683 + $0x8] sm:$0xff] %vm450, %v681
      %686 = vst.msk [vmem:[%s683 + $0x10] sm:$0xf] %vm453, %v682
      %s687 = sadd.s32 %s304, 3
      %s688 = smul.u32 %s687, 24
      %s689 = scalar_lea.vmem %s292, %s688
      %v690 = vld [vmem:[%s689] sm:$0xff]
      %v691 = vld [vmem:[%s689 + $0x8] sm:$0xff]
      %v692 = vld [vmem:[%s689 + $0x10] sm:$0xf]
      %v694 = vsel %vm339, %v690, 0
      %v697 = vsel %vm339, %v691, 0
      %v700 = vsel %vm339, %v692, 0
      %702 = vmatprep.subr.mxu0 0.0
      %703 = vmatpush1.msra.mxu0 0.0
      %704 = vmatprep.subr.mxu0 0.0
      %705 = vmatpush1.msra.mxu0 0.0
      %706 = vmatprep.subr.mxu0 0.0
      %707 = vmatpush1.msra.mxu0 0.0
      %708 = vmatprep.subr.mxu0 0.0
      %709 = vmatpush1.msra.mxu0 0.0
      %710 = vmatprep.subr.mxu0 0.0
      %711 = vmatpush1.msra.mxu0 0.0
      %712 = vmatprep.subr.mxu0 0.0
      %713 = vmatpush1.msra.mxu0 0.0
      %714 = vmatprep.subr.mxu0 0.0
      %715 = vmatpush1.msra.mxu0 0.0
      %716 = vmatprep.subr.mxu0 0.0
      %717 = vmatpush1.msra.mxu0 0.0
      %718 = vmatprep.subr.mxu0 0.0
      %719 = vmatpush1.msra.mxu0 0.0
      %720 = vmatprep.subr.mxu0 0.0
      %721 = vmatpush1.msra.mxu0 0.0
      %722 = vmatprep.subr.mxu0 0.0
      %723 = vmatpush1.msra.mxu0 0.0
      %724 = vmatprep.subr.mxu0 0.0
      %725 = vmatpush1.msra.mxu0 0.0
      %726 = vmatprep.subr.mxu0 0.0
      %727 = vmatpush1.msra.mxu0 0.0
      %728 = vmatprep.subr.mxu0 0.0
      %729 = vmatpush1.msra.mxu0 0.0
      %730 = vmatprep.subr.mxu0 0.0
      %731 = vmatpush1.msra.mxu0 0.0
      %732 = vmatprep.subr.mxu0 0.0
      %733 = vmatpush1.msra.mxu0 %v351
      %734 = vmatprep.subr.mxu0 0.0
      %735 = vmatpush2.msra.mxu0 0.0
      %736 = vmatprep.subr.mxu0 0.0
      %737 = vmatpush2.msra.mxu0 0.0
      %738 = vmatprep.subr.mxu0 0.0
      %739 = vmatpush2.msra.mxu0 0.0
      %740 = vmatprep.subr.mxu0 0.0
      %741 = vmatpush2.msra.mxu0 0.0
      %742 = vmatprep.subr.mxu0 0.0
      %743 = vmatpush2.msra.mxu0 0.0
      %744 = vmatprep.subr.mxu0 0.0
      %745 = vmatpush2.msra.mxu0 0.0
      %746 = vmatprep.subr.mxu0 0.0
      %747 = vmatpush2.msra.mxu0 0.0
      %748 = vmatprep.subr.mxu0 0.0
      %749 = vmatpush2.msra.mxu0 0.0
      %750 = vmatprep.subr.mxu0 0.0
      %751 = vmatpush2.msra.mxu0 0.0
      %752 = vmatprep.subr.mxu0 0.0
      %753 = vmatpush2.msra.mxu0 0.0
      %754 = vmatprep.subr.mxu0 0.0
      %755 = vmatpush2.msra.mxu0 0.0
      %756 = vmatprep.subr.mxu0 0.0
      %757 = vmatpush2.msra.mxu0 0.0
      %758 = vmatprep.subr.mxu0 0.0
      %759 = vmatpush2.msra.mxu0 0.0
      %760 = vmatprep.subr.mxu0 0.0
      %761 = vmatpush2.msra.mxu0 0.0
      %762 = vmatprep.subr.mxu0 0.0
      %763 = vmatpush2.msra.mxu0 0.0
      %764 = vmatprep.subr.mxu0 0.0
      %765 = vmatpush2.msra.mxu0 0.0
      %766 = vmatprep.mubr.f32.mxu0 0.0
      %767 = vmatmul.mubr.f32.gmra.mxu0 %v694
      %v768 = vpop.f32.mrf.mxu0
      %v769 = vadd.f32 %v337, %v768
      %v770 = vpop.f32.mrf.mxu0
      %771 = vmatprep.mubr.f32.mxu0 0.0
      %772 = vmatmul.mubr.f32.gmra.mxu0 %v697
      %v773 = vpop.f32.mrf.mxu0
      %v774 = vadd.f32 %v337, %v773
      %v775 = vpop.f32.mrf.mxu0
      %776 = vmatprep.mubr.f32.mxu0 0.0
      %777 = vmatmul.mubr.f32.gmra.mxu0 %v700
      %v778 = vpop.f32.mrf.mxu0
      %v779 = vadd.f32 %v337, %v778
      %v780 = vpop.f32.mrf.mxu0
      %781 = vdwg.mxu0
      %v782 = vmax.f32 %v769, 0.0
      %v783 = vmax.f32 %v774, 0.0
      %v784 = vmax.f32 %v779, 0.0
      %v785 = vmin.f32 %v782, 6.0
      %v786 = vmin.f32 %v783, 6.0
      %v787 = vmin.f32 %v784, 6.0
      %p788 = scmp.eq.s32.totalorder %s687, 0
      %p789 = scmp.eq.s32.totalorder %s687, 19
      %p790 = por %p788, %p789
      %s791 = scalar_select %p790, 0.0, 1.0
      %v792 = vstv %s791
      %v793 = vmul.f32 %v318, %v792
      %v794 = vmul.f32 %v319, %v792
      %v795 = vmul.f32 %v320, %v792
      %v796 = vmul.f32 %v785, %v793
      %v797 = vmul.f32 %v786, %v794
      %v798 = vmul.f32 %v787, %v795
      %s799 = scalar_lea.vmem [#allocation2], 72
      %800 = vst.msk [vmem:[%s799] sm:$0xff] %vm450, %v796
      %801 = vst.msk [vmem:[%s799 + $0x8] sm:$0xff] %vm450, %v797
      %802 = vst.msk [vmem:[%s799 + $0x10] sm:$0xf] %vm453, %v798
      %s803 = sadd.s32 %s304, 4
      %s804 = smul.u32 %s803, 24
      %s805 = scalar_lea.vmem %s292, %s804
      %v806 = vld [vmem:[%s805] sm:$0xff]
      %v807 = vld [vmem:[%s805 + $0x8] sm:$0xff]
      %v808 = vld [vmem:[%s805 + $0x10] sm:$0xf]
      %v810 = vsel %vm339, %v806, 0
      %v813 = vsel %vm339, %v807, 0
      %v816 = vsel %vm339, %v808, 0
      %818 = vmatprep.subr.mxu0 0.0
      %819 = vmatpush1.msra.mxu0 0.0
      %820 = vmatprep.subr.mxu0 0.0
      %821 = vmatpush1.msra.mxu0 0.0
      %822 = vmatprep.subr.mxu0 0.0
      %823 = vmatpush1.msra.mxu0 0.0
      %824 = vmatprep.subr.mxu0 0.0
      %825 = vmatpush1.msra.mxu0 0.0
      %826 = vmatprep.subr.mxu0 0.0
      %827 = vmatpush1.msra.mxu0 0.0
      %828 = vmatprep.subr.mxu0 0.0
      %829 = vmatpush1.msra.mxu0 0.0
      %830 = vmatprep.subr.mxu0 0.0
      %831 = vmatpush1.msra.mxu0 0.0
      %832 = vmatprep.subr.mxu0 0.0
      %833 = vmatpush1.msra.mxu0 0.0
      %834 = vmatprep.subr.mxu0 0.0
      %835 = vmatpush1.msra.mxu0 0.0
      %836 = vmatprep.subr.mxu0 0.0
      %837 = vmatpush1.msra.mxu0 0.0
      %838 = vmatprep.subr.mxu0 0.0
      %839 = vmatpush1.msra.mxu0 0.0
      %840 = vmatprep.subr.mxu0 0.0
      %841 = vmatpush1.msra.mxu0 0.0
      %842 = vmatprep.subr.mxu0 0.0
      %843 = vmatpush1.msra.mxu0 0.0
      %844 = vmatprep.subr.mxu0 0.0
      %845 = vmatpush1.msra.mxu0 0.0
      %846 = vmatprep.subr.mxu0 0.0
      %847 = vmatpush1.msra.mxu0 0.0
      %848 = vmatprep.subr.mxu0 0.0
      %849 = vmatpush1.msra.mxu0 %v351
      %850 = vmatprep.subr.mxu0 0.0
      %851 = vmatpush2.msra.mxu0 0.0
      %852 = vmatprep.subr.mxu0 0.0
      %853 = vmatpush2.msra.mxu0 0.0
      %854 = vmatprep.subr.mxu0 0.0
      %855 = vmatpush2.msra.mxu0 0.0
      %856 = vmatprep.subr.mxu0 0.0
      %857 = vmatpush2.msra.mxu0 0.0
      %858 = vmatprep.subr.mxu0 0.0
      %859 = vmatpush2.msra.mxu0 0.0
      %860 = vmatprep.subr.mxu0 0.0
      %861 = vmatpush2.msra.mxu0 0.0
      %862 = vmatprep.subr.mxu0 0.0
      %863 = vmatpush2.msra.mxu0 0.0
      %864 = vmatprep.subr.mxu0 0.0
      %865 = vmatpush2.msra.mxu0 0.0
      %866 = vmatprep.subr.mxu0 0.0
      %867 = vmatpush2.msra.mxu0 0.0
      %868 = vmatprep.subr.mxu0 0.0
      %869 = vmatpush2.msra.mxu0 0.0
      %870 = vmatprep.subr.mxu0 0.0
      %871 = vmatpush2.msra.mxu0 0.0
      %872 = vmatprep.subr.mxu0 0.0
      %873 = vmatpush2.msra.mxu0 0.0
      %874 = vmatprep.subr.mxu0 0.0
      %875 = vmatpush2.msra.mxu0 0.0
      %876 = vmatprep.subr.mxu0 0.0
      %877 = vmatpush2.msra.mxu0 0.0
      %878 = vmatprep.subr.mxu0 0.0
      %879 = vmatpush2.msra.mxu0 0.0
      %880 = vmatprep.subr.mxu0 0.0
      %881 = vmatpush2.msra.mxu0 0.0
      %882 = vmatprep.mubr.f32.mxu0 0.0
      %883 = vmatmul.mubr.f32.gmra.mxu0 %v810
      %v884 = vpop.f32.mrf.mxu0
      %v885 = vadd.f32 %v337, %v884
      %v886 = vpop.f32.mrf.mxu0
      %887 = vmatprep.mubr.f32.mxu0 0.0
      %888 = vmatmul.mubr.f32.gmra.mxu0 %v813
      %v889 = vpop.f32.mrf.mxu0
      %v890 = vadd.f32 %v337, %v889
      %v891 = vpop.f32.mrf.mxu0
      %892 = vmatprep.mubr.f32.mxu0 0.0
      %893 = vmatmul.mubr.f32.gmra.mxu0 %v816
      %v894 = vpop.f32.mrf.mxu0
      %v895 = vadd.f32 %v337, %v894
      %v896 = vpop.f32.mrf.mxu0
      %897 = vdwg.mxu0
      %v898 = vmax.f32 %v885, 0.0
      %v899 = vmax.f32 %v890, 0.0
      %v900 = vmax.f32 %v895, 0.0
      %v901 = vmin.f32 %v898, 6.0
      %v902 = vmin.f32 %v899, 6.0
      %v903 = vmin.f32 %v900, 6.0
      %p904 = scmp.eq.s32.totalorder %s803, 0
      %p905 = scmp.eq.s32.totalorder %s803, 19
      %p906 = por %p904, %p905
      %s907 = scalar_select %p906, 0.0, 1.0
      %v908 = vstv %s907
      %v909 = vmul.f32 %v318, %v908
      %v910 = vmul.f32 %v319, %v908
      %v911 = vmul.f32 %v320, %v908
      %v912 = vmul.f32 %v901, %v909
      %v913 = vmul.f32 %v902, %v910
      %v914 = vmul.f32 %v903, %v911
      %s915 = scalar_lea.vmem [#allocation2], 96
      %916 = vst.msk [vmem:[%s915] sm:$0xff] %vm450, %v912
      %917 = vst.msk [vmem:[%s915 + $0x8] sm:$0xff] %vm450, %v913
      %918 = vst.msk [vmem:[%s915 + $0x10] sm:$0xf] %vm453, %v914
      %s919 = sadd.s32 %s304, 5
      %s920 = smul.u32 %s919, 24
      %s921 = scalar_lea.vmem %s292, %s920
      %v922 = vld [vmem:[%s921] sm:$0xff]
      %v923 = vld [vmem:[%s921 + $0x8] sm:$0xff]
      %v924 = vld [vmem:[%s921 + $0x10] sm:$0xf]
      %v926 = vsel %vm339, %v922, 0
      %v929 = vsel %vm339, %v923, 0
      %v932 = vsel %vm339, %v924, 0
      %934 = vmatprep.subr.mxu0 0.0
      %935 = vmatpush1.msra.mxu0 0.0
      %936 = vmatprep.subr.mxu0 0.0
      %937 = vmatpush1.msra.mxu0 0.0
      %938 = vmatprep.subr.mxu0 0.0
      %939 = vmatpush1.msra.mxu0 0.0
      %940 = vmatprep.subr.mxu0 0.0
      %941 = vmatpush1.msra.mxu0 0.0
      %942 = vmatprep.subr.mxu0 0.0
      %943 = vmatpush1.msra.mxu0 0.0
      %944 = vmatprep.subr.mxu0 0.0
      %945 = vmatpush1.msra.mxu0 0.0
      %946 = vmatprep.subr.mxu0 0.0
      %947 = vmatpush1.msra.mxu0 0.0
      %948 = vmatprep.subr.mxu0 0.0
      %949 = vmatpush1.msra.mxu0 0.0
      %950 = vmatprep.subr.mxu0 0.0
      %951 = vmatpush1.msra.mxu0 0.0
      %952 = vmatprep.subr.mxu0 0.0
      %953 = vmatpush1.msra.mxu0 0.0
      %954 = vmatprep.subr.mxu0 0.0
      %955 = vmatpush1.msra.mxu0 0.0
      %956 = vmatprep.subr.mxu0 0.0
      %957 = vmatpush1.msra.mxu0 0.0
      %958 = vmatprep.subr.mxu0 0.0
      %959 = vmatpush1.msra.mxu0 0.0
      %960 = vmatprep.subr.mxu0 0.0
      %961 = vmatpush1.msra.mxu0 0.0
      %962 = vmatprep.subr.mxu0 0.0
      %963 = vmatpush1.msra.mxu0 0.0
      %964 = vmatprep.subr.mxu0 0.0
      %965 = vmatpush1.msra.mxu0 %v351
      %966 = vmatprep.subr.mxu0 0.0
      %967 = vmatpush2.msra.mxu0 0.0
      %968 = vmatprep.subr.mxu0 0.0
      %969 = vmatpush2.msra.mxu0 0.0
      %970 = vmatprep.subr.mxu0 0.0
      %971 = vmatpush2.msra.mxu0 0.0
      %972 = vmatprep.subr.mxu0 0.0
      %973 = vmatpush2.msra.mxu0 0.0
      %974 = vmatprep.subr.mxu0 0.0
      %975 = vmatpush2.msra.mxu0 0.0
      %976 = vmatprep.subr.mxu0 0.0
      %977 = vmatpush2.msra.mxu0 0.0
      %978 = vmatprep.subr.mxu0 0.0
      %979 = vmatpush2.msra.mxu0 0.0
      %980 = vmatprep.subr.mxu0 0.0
      %981 = vmatpush2.msra.mxu0 0.0
      %982 = vmatprep.subr.mxu0 0.0
      %983 = vmatpush2.msra.mxu0 0.0
      %984 = vmatprep.subr.mxu0 0.0
      %985 = vmatpush2.msra.mxu0 0.0
      %986 = vmatprep.subr.mxu0 0.0
      %987 = vmatpush2.msra.mxu0 0.0
      %988 = vmatprep.subr.mxu0 0.0
      %989 = vmatpush2.msra.mxu0 0.0
      %990 = vmatprep.subr.mxu0 0.0
      %991 = vmatpush2.msra.mxu0 0.0
      %992 = vmatprep.subr.mxu0 0.0
      %993 = vmatpush2.msra.mxu0 0.0
      %994 = vmatprep.subr.mxu0 0.0
      %995 = vmatpush2.msra.mxu0 0.0
      %996 = vmatprep.subr.mxu0 0.0
      %997 = vmatpush2.msra.mxu0 0.0
      %998 = vmatprep.mubr.f32.mxu0 0.0
      %999 = vmatmul.mubr.f32.gmra.mxu0 %v926
      %v1000 = vpop.f32.mrf.mxu0
      %v1001 = vadd.f32 %v337, %v1000
      %v1002 = vpop.f32.mrf.mxu0
      %1003 = vmatprep.mubr.f32.mxu0 0.0
      %1004 = vmatmul.mubr.f32.gmra.mxu0 %v929
      %v1005 = vpop.f32.mrf.mxu0
      %v1006 = vadd.f32 %v337, %v1005
      %v1007 = vpop.f32.mrf.mxu0
      %1008 = vmatprep.mubr.f32.mxu0 0.0
      %1009 = vmatmul.mubr.f32.gmra.mxu0 %v932
      %v1010 = vpop.f32.mrf.mxu0
      %v1011 = vadd.f32 %v337, %v1010
      %v1012 = vpop.f32.mrf.mxu0
      %1013 = vdwg.mxu0
      %v1014 = vmax.f32 %v1001, 0.0
      %v1015 = vmax.f32 %v1006, 0.0
      %v1016 = vmax.f32 %v1011, 0.0
      %v1017 = vmin.f32 %v1014, 6.0
      %v1018 = vmin.f32 %v1015, 6.0
      %v1019 = vmin.f32 %v1016, 6.0
      %p1020 = scmp.eq.s32.totalorder %s919, 0
      %p1021 = scmp.eq.s32.totalorder %s919, 19
      %p1022 = por %p1020, %p1021
      %s1023 = scalar_select %p1022, 0.0, 1.0
      %v1024 = vstv %s1023
      %v1025 = vmul.f32 %v318, %v1024
      %v1026 = vmul.f32 %v319, %v1024
      %v1027 = vmul.f32 %v320, %v1024
      %v1028 = vmul.f32 %v1017, %v1025
      %v1029 = vmul.f32 %v1018, %v1026
      %v1030 = vmul.f32 %v1019, %v1027
      %s1031 = scalar_lea.vmem [#allocation2], 120
      %1032 = vst.msk [vmem:[%s1031] sm:$0xff] %vm450, %v1028
      %1033 = vst.msk [vmem:[%s1031 + $0x8] sm:$0xff] %vm450, %v1029
      %1034 = vst.msk [vmem:[%s1031 + $0x10] sm:$0xf] %vm453, %v1030
      %s1035 = sadd.s32 %s304, 6
      %s1036 = smul.u32 %s1035, 24
      %s1037 = scalar_lea.vmem %s292, %s1036
      %v1038 = vld [vmem:[%s1037] sm:$0xff]
      %v1039 = vld [vmem:[%s1037 + $0x8] sm:$0xff]
      %v1040 = vld [vmem:[%s1037 + $0x10] sm:$0xf]
      %v1042 = vsel %vm339, %v1038, 0
      %v1045 = vsel %vm339, %v1039, 0
      %v1048 = vsel %vm339, %v1040, 0
      %1050 = vmatprep.subr.mxu0 0.0
      %1051 = vmatpush1.msra.mxu0 0.0
      %1052 = vmatprep.subr.mxu0 0.0
      %1053 = vmatpush1.msra.mxu0 0.0
      %1054 = vmatprep.subr.mxu0 0.0
      %1055 = vmatpush1.msra.mxu0 0.0
      %1056 = vmatprep.subr.mxu0 0.0
      %1057 = vmatpush1.msra.mxu0 0.0
      %1058 = vmatprep.subr.mxu0 0.0
      %1059 = vmatpush1.msra.mxu0 0.0
      %1060 = vmatprep.subr.mxu0 0.0
      %1061 = vmatpush1.msra.mxu0 0.0
      %1062 = vmatprep.subr.mxu0 0.0
      %1063 = vmatpush1.msra.mxu0 0.0
      %1064 = vmatprep.subr.mxu0 0.0
      %1065 = vmatpush1.msra.mxu0 0.0
      %1066 = vmatprep.subr.mxu0 0.0
      %1067 = vmatpush1.msra.mxu0 0.0
      %1068 = vmatprep.subr.mxu0 0.0
      %1069 = vmatpush1.msra.mxu0 0.0
      %1070 = vmatprep.subr.mxu0 0.0
      %1071 = vmatpush1.msra.mxu0 0.0
      %1072 = vmatprep.subr.mxu0 0.0
      %1073 = vmatpush1.msra.mxu0 0.0
      %1074 = vmatprep.subr.mxu0 0.0
      %1075 = vmatpush1.msra.mxu0 0.0
      %1076 = vmatprep.subr.mxu0 0.0
      %1077 = vmatpush1.msra.mxu0 0.0
      %1078 = vmatprep.subr.mxu0 0.0
      %1079 = vmatpush1.msra.mxu0 0.0
      %1080 = vmatprep.subr.mxu0 0.0
      %1081 = vmatpush1.msra.mxu0 %v351
      %1082 = vmatprep.subr.mxu0 0.0
      %1083 = vmatpush2.msra.mxu0 0.0
      %1084 = vmatprep.subr.mxu0 0.0
      %1085 = vmatpush2.msra.mxu0 0.0
      %1086 = vmatprep.subr.mxu0 0.0
      %1087 = vmatpush2.msra.mxu0 0.0
      %1088 = vmatprep.subr.mxu0 0.0
      %1089 = vmatpush2.msra.mxu0 0.0
      %1090 = vmatprep.subr.mxu0 0.0
      %1091 = vmatpush2.msra.mxu0 0.0
      %1092 = vmatprep.subr.mxu0 0.0
      %1093 = vmatpush2.msra.mxu0 0.0
      %1094 = vmatprep.subr.mxu0 0.0
      %1095 = vmatpush2.msra.mxu0 0.0
      %1096 = vmatprep.subr.mxu0 0.0
      %1097 = vmatpush2.msra.mxu0 0.0
      %1098 = vmatprep.subr.mxu0 0.0
      %1099 = vmatpush2.msra.mxu0 0.0
      %1100 = vmatprep.subr.mxu0 0.0
      %1101 = vmatpush2.msra.mxu0 0.0
      %1102 = vmatprep.subr.mxu0 0.0
      %1103 = vmatpush2.msra.mxu0 0.0
      %1104 = vmatprep.subr.mxu0 0.0
      %1105 = vmatpush2.msra.mxu0 0.0
      %1106 = vmatprep.subr.mxu0 0.0
      %1107 = vmatpush2.msra.mxu0 0.0
      %1108 = vmatprep.subr.mxu0 0.0
      %1109 = vmatpush2.msra.mxu0 0.0
      %1110 = vmatprep.subr.mxu0 0.0
      %1111 = vmatpush2.msra.mxu0 0.0
      %1112 = vmatprep.subr.mxu0 0.0
      %1113 = vmatpush2.msra.mxu0 0.0
      %1114 = vmatprep.mubr.f32.mxu0 0.0
      %1115 = vmatmul.mubr.f32.gmra.mxu0 %v1042
      %v1116 = vpop.f32.mrf.mxu0
      %v1117 = vadd.f32 %v337, %v1116
      %v1118 = vpop.f32.mrf.mxu0
      %1119 = vmatprep.mubr.f32.mxu0 0.0
      %1120 = vmatmul.mubr.f32.gmra.mxu0 %v1045
      %v1121 = vpop.f32.mrf.mxu0
      %v1122 = vadd.f32 %v337, %v1121
      %v1123 = vpop.f32.mrf.mxu0
      %1124 = vmatprep.mubr.f32.mxu0 0.0
      %1125 = vmatmul.mubr.f32.gmra.mxu0 %v1048
      %v1126 = vpop.f32.mrf.mxu0
      %v1127 = vadd.f32 %v337, %v1126
      %v1128 = vpop.f32.mrf.mxu0
      %1129 = vdwg.mxu0
      %v1130 = vmax.f32 %v1117, 0.0
      %v1131 = vmax.f32 %v1122, 0.0
      %v1132 = vmax.f32 %v1127, 0.0
      %v1133 = vmin.f32 %v1130, 6.0
      %v1134 = vmin.f32 %v1131, 6.0
      %v1135 = vmin.f32 %v1132, 6.0
      %p1136 = scmp.eq.s32.totalorder %s1035, 0
      %p1137 = scmp.eq.s32.totalorder %s1035, 19
      %p1138 = por %p1136, %p1137
      %s1139 = scalar_select %p1138, 0.0, 1.0
      %v1140 = vstv %s1139
      %v1141 = vmul.f32 %v318, %v1140
      %v1142 = vmul.f32 %v319, %v1140
      %v1143 = vmul.f32 %v320, %v1140
      %v1144 = vmul.f32 %v1133, %v1141
      %v1145 = vmul.f32 %v1134, %v1142
      %v1146 = vmul.f32 %v1135, %v1143
      %s1147 = scalar_lea.vmem [#allocation2], 144
      %1148 = vst.msk [vmem:[%s1147] sm:$0xff] %vm450, %v1144
      %1149 = vst.msk [vmem:[%s1147 + $0x8] sm:$0xff] %vm450, %v1145
      %1150 = vst.msk [vmem:[%s1147 + $0x10] sm:$0xf] %vm453, %v1146
      %s1151 = sadd.s32 %s304, 7
      %s1152 = smul.u32 %s1151, 24
      %s1153 = scalar_lea.vmem %s292, %s1152
      %v1154 = vld [vmem:[%s1153] sm:$0xff]
      %v1155 = vld [vmem:[%s1153 + $0x8] sm:$0xff]
      %v1156 = vld [vmem:[%s1153 + $0x10] sm:$0xf]
      %v1158 = vsel %vm339, %v1154, 0
      %v1161 = vsel %vm339, %v1155, 0
      %v1164 = vsel %vm339, %v1156, 0
      %1166 = vmatprep.subr.mxu0 0.0
      %1167 = vmatpush1.msra.mxu0 0.0
      %1168 = vmatprep.subr.mxu0 0.0
      %1169 = vmatpush1.msra.mxu0 0.0
      %1170 = vmatprep.subr.mxu0 0.0
      %1171 = vmatpush1.msra.mxu0 0.0
      %1172 = vmatprep.subr.mxu0 0.0
      %1173 = vmatpush1.msra.mxu0 0.0
      %1174 = vmatprep.subr.mxu0 0.0
      %1175 = vmatpush1.msra.mxu0 0.0
      %1176 = vmatprep.subr.mxu0 0.0
      %1177 = vmatpush1.msra.mxu0 0.0
      %1178 = vmatprep.subr.mxu0 0.0
      %1179 = vmatpush1.msra.mxu0 0.0
      %1180 = vmatprep.subr.mxu0 0.0
      %1181 = vmatpush1.msra.mxu0 0.0
      %1182 = vmatprep.subr.mxu0 0.0
      %1183 = vmatpush1.msra.mxu0 0.0
      %1184 = vmatprep.subr.mxu0 0.0
      %1185 = vmatpush1.msra.mxu0 0.0
      %1186 = vmatprep.subr.mxu0 0.0
      %1187 = vmatpush1.msra.mxu0 0.0
      %1188 = vmatprep.subr.mxu0 0.0
      %1189 = vmatpush1.msra.mxu0 0.0
      %1190 = vmatprep.subr.mxu0 0.0
      %1191 = vmatpush1.msra.mxu0 0.0
      %1192 = vmatprep.subr.mxu0 0.0
      %1193 = vmatpush1.msra.mxu0 0.0
      %1194 = vmatprep.subr.mxu0 0.0
      %1195 = vmatpush1.msra.mxu0 0.0
      %1196 = vmatprep.subr.mxu0 0.0
      %1197 = vmatpush1.msra.mxu0 %v351
      %1198 = vmatprep.subr.mxu0 0.0
      %1199 = vmatpush2.msra.mxu0 0.0
      %1200 = vmatprep.subr.mxu0 0.0
      %1201 = vmatpush2.msra.mxu0 0.0
      %1202 = vmatprep.subr.mxu0 0.0
      %1203 = vmatpush2.msra.mxu0 0.0
      %1204 = vmatprep.subr.mxu0 0.0
      %1205 = vmatpush2.msra.mxu0 0.0
      %1206 = vmatprep.subr.mxu0 0.0
      %1207 = vmatpush2.msra.mxu0 0.0
      %1208 = vmatprep.subr.mxu0 0.0
      %1209 = vmatpush2.msra.mxu0 0.0
      %1210 = vmatprep.subr.mxu0 0.0
      %1211 = vmatpush2.msra.mxu0 0.0
      %1212 = vmatprep.subr.mxu0 0.0
      %1213 = vmatpush2.msra.mxu0 0.0
      %1214 = vmatprep.subr.mxu0 0.0
      %1215 = vmatpush2.msra.mxu0 0.0
      %1216 = vmatprep.subr.mxu0 0.0
      %1217 = vmatpush2.msra.mxu0 0.0
      %1218 = vmatprep.subr.mxu0 0.0
      %1219 = vmatpush2.msra.mxu0 0.0
      %1220 = vmatprep.subr.mxu0 0.0
      %1221 = vmatpush2.msra.mxu0 0.0
      %1222 = vmatprep.subr.mxu0 0.0
      %1223 = vmatpush2.msra.mxu0 0.0
      %1224 = vmatprep.subr.mxu0 0.0
      %1225 = vmatpush2.msra.mxu0 0.0
      %1226 = vmatprep.subr.mxu0 0.0
      %1227 = vmatpush2.msra.mxu0 0.0
      %1228 = vmatprep.subr.mxu0 0.0
      %1229 = vmatpush2.msra.mxu0 0.0
      %1230 = vmatprep.mubr.f32.mxu0 0.0
      %1231 = vmatmul.mubr.f32.gmra.mxu0 %v1158
      %v1232 = vpop.f32.mrf.mxu0
      %v1233 = vadd.f32 %v337, %v1232
      %v1234 = vpop.f32.mrf.mxu0
      %1235 = vmatprep.mubr.f32.mxu0 0.0
      %1236 = vmatmul.mubr.f32.gmra.mxu0 %v1161
      %v1237 = vpop.f32.mrf.mxu0
      %v1238 = vadd.f32 %v337, %v1237
      %v1239 = vpop.f32.mrf.mxu0
      %1240 = vmatprep.mubr.f32.mxu0 0.0
      %1241 = vmatmul.mubr.f32.gmra.mxu0 %v1164
      %v1242 = vpop.f32.mrf.mxu0
      %v1243 = vadd.f32 %v337, %v1242
      %v1244 = vpop.f32.mrf.mxu0
      %1245 = vdwg.mxu0
      %v1246 = vmax.f32 %v1233, 0.0
      %v1247 = vmax.f32 %v1238, 0.0
      %v1248 = vmax.f32 %v1243, 0.0
      %v1249 = vmin.f32 %v1246, 6.0
      %v1250 = vmin.f32 %v1247, 6.0
      %v1251 = vmin.f32 %v1248, 6.0
      %p1252 = scmp.eq.s32.totalorder %s1151, 0
      %p1253 = scmp.eq.s32.totalorder %s1151, 19
      %p1254 = por %p1252, %p1253
      %s1255 = scalar_select %p1254, 0.0, 1.0
      %v1256 = vstv %s1255
      %v1257 = vmul.f32 %v318, %v1256
      %v1258 = vmul.f32 %v319, %v1256
      %v1259 = vmul.f32 %v320, %v1256
      %v1260 = vmul.f32 %v1249, %v1257
      %v1261 = vmul.f32 %v1250, %v1258
      %v1262 = vmul.f32 %v1251, %v1259
      %s1263 = scalar_lea.vmem [#allocation2], 168
      %1264 = vst.msk [vmem:[%s1263] sm:$0xff] %vm450, %v1260
      %1265 = vst.msk [vmem:[%s1263 + $0x8] sm:$0xff] %vm450, %v1261
      %1266 = vst.msk [vmem:[%s1263 + $0x10] sm:$0xf] %vm453, %v1262
      %v1267 = vmax.f32 %v325, 0.0
      %v1268 = vmin.f32 %v1267, 6.0
      %v1269 = vld [vmem:[#allocation2] sm:$0xff]
      %v1270 = vld [vmem:[#allocation2 + $0x8] sm:$0xff]
      %v1271 = vld [vmem:[#allocation2 + $0x10] sm:$0xf]
      %v1272 = vlaneseq
      %v1273 = vshrl.u32 %v1272, 7
      %v1274 = vsub.s32 0, %v1273
      %v1275 = vrot.slane %v321, %v1274
      %v1276 = vmul.f32 %v1269, %v1275
      %v1277 = vmul.f32 %v1270, %v1275
      %v1278 = vmul.f32 %v1271, %v1275
      %v1279 = vadd.f32 %v1276, 0.0
      %v1280 = vadd.f32 %v1277, 0.0
      %v1281 = vadd.f32 %v1278, 0.0
      %v1282 = vlaneseq
      %v1283 = vshrl.u32 %v1282, 7
      %v1284 = vsub.s32 1, %v1283
      %v1285 = vrot.slane %v321, %v1284
      %v1286 = vmul.f32 %v1269, %v1285
      %v1287 = vmul.f32 %v1270, %v1285
      %v1288 = vmul.f32 %v1271, %v1285
      %vm1292 = vcmask 1046528
      %v1293 = vrot.slane %v1286, 1
      %v1294 = vrot.slane %v1287, 1
      %v1295 = vsel %vm1292, %v1293, %v1294
      %v1296 = vrot.slane %v1288, 1
      %v1297 = vsel %vm1292, %v1294, %v1296
      %v1301 = vadd.f32 %v1279, %v1295
      %v1302 = vadd.f32 %v1280, %v1297
      %v1303 = vadd.f32 %v1281, %v1296
      %v1304 = vlaneseq
      %v1305 = vshrl.u32 %v1304, 7
      %v1306 = vsub.s32 2, %v1305
      %v1307 = vrot.slane %v321, %v1306
      %v1308 = vmul.f32 %v1269, %v1307
      %v1309 = vmul.f32 %v1270, %v1307
      %v1310 = vmul.f32 %v1271, %v1307
      %vm1314 = vcmask 1045504
      %v1315 = vrot.slane %v1308, 2
      %v1316 = vrot.slane %v1309, 2
      %v1317 = vsel %vm1314, %v1315, %v1316
      %v1318 = vrot.slane %v1310, 2
      %v1319 = vsel %vm1314, %v1316, %v1318
      %v1323 = vadd.f32 %v1301, %v1317
      %v1324 = vadd.f32 %v1302, %v1319
      %v1325 = vadd.f32 %v1303, %v1318
      %v1326 = vld [vmem:[%s567] sm:$0xff]
      %v1327 = vld [vmem:[%s567 + $0x8] sm:$0xff]
      %v1328 = vld [vmem:[%s567 + $0x10] sm:$0xf]
      %v1329 = vlaneseq
      %v1330 = vshrl.u32 %v1329, 7
      %v1331 = vsub.s32 3, %v1330
      %v1332 = vrot.slane %v321, %v1331
      %v1333 = vmul.f32 %v1326, %v1332
      %v1334 = vmul.f32 %v1327, %v1332
      %v1335 = vmul.f32 %v1328, %v1332
      %v1336 = vadd.f32 %v1323, %v1333
      %v1337 = vadd.f32 %v1324, %v1334
      %v1338 = vadd.f32 %v1325, %v1335
      %v1339 = vlaneseq
      %v1340 = vshrl.u32 %v1339, 7
      %v1341 = vsub.s32 4, %v1340
      %v1342 = vrot.slane %v321, %v1341
      %v1343 = vmul.f32 %v1326, %v1342
      %v1344 = vmul.f32 %v1327, %v1342
      %v1345 = vmul.f32 %v1328, %v1342
      %v1349 = vrot.slane %v1343, 1
      %v1350 = vrot.slane %v1344, 1
      %v1351 = vsel %vm1292, %v1349, %v1350
      %v1352 = vrot.slane %v1345, 1
      %v1353 = vsel %vm1292, %v1350, %v1352
      %v1357 = vadd.f32 %v1336, %v1351
      %v1358 = vadd.f32 %v1337, %v1353
      %v1359 = vadd.f32 %v1338, %v1352
      %v1360 = vlaneseq
      %v1361 = vshrl.u32 %v1360, 7
      %v1362 = vsub.s32 5, %v1361
      %v1363 = vrot.slane %v321, %v1362
      %v1364 = vmul.f32 %v1326, %v1363
      %v1365 = vmul.f32 %v1327, %v1363
      %v1366 = vmul.f32 %v1328, %v1363
      %v1370 = vrot.slane %v1364, 2
      %v1371 = vrot.slane %v1365, 2
      %v1372 = vsel %vm1314, %v1370, %v1371
      %v1373 = vrot.slane %v1366, 2
      %v1374 = vsel %vm1314, %v1371, %v1373
      %v1378 = vadd.f32 %v1357, %v1372
      %v1379 = vadd.f32 %v1358, %v1374
      %v1380 = vadd.f32 %v1359, %v1373
      %v1381 = vld [vmem:[%s683] sm:$0xff]
      %v1382 = vld [vmem:[%s683 + $0x8] sm:$0xff]
      %v1383 = vld [vmem:[%s683 + $0x10] sm:$0xf]
      %v1384 = vlaneseq
      %v1385 = vshrl.u32 %v1384, 7
      %v1386 = vsub.s32 6, %v1385
      %v1387 = vrot.slane %v321, %v1386
      %v1388 = vmul.f32 %v1381, %v1387
      %v1389 = vmul.f32 %v1382, %v1387
      %v1390 = vmul.f32 %v1383, %v1387
      %v1391 = vadd.f32 %v1378, %v1388
      %v1392 = vadd.f32 %v1379, %v1389
      %v1393 = vadd.f32 %v1380, %v1390
      %v1394 = vlaneseq
      %v1395 = vshrl.u32 %v1394, 7
      %v1396 = vsub.s32 7, %v1395
      %v1397 = vrot.slane %v321, %v1396
      %v1398 = vmul.f32 %v1381, %v1397
      %v1399 = vmul.f32 %v1382, %v1397
      %v1400 = vmul.f32 %v1383, %v1397
      %v1404 = vrot.slane %v1398, 1
      %v1405 = vrot.slane %v1399, 1
      %v1406 = vsel %vm1292, %v1404, %v1405
      %v1407 = vrot.slane %v1400, 1
      %v1408 = vsel %vm1292, %v1405, %v1407
      %v1412 = vadd.f32 %v1391, %v1406
      %v1413 = vadd.f32 %v1392, %v1408
      %v1414 = vadd.f32 %v1393, %v1407
      %v1415 = vlaneseq
      %v1416 = vshrl.u32 %v1415, 7
      %v1417 = vsub.s32 0, %v1416
      %v1418 = vrot.slane %v322, %v1417
      %v1419 = vmul.f32 %v1381, %v1418
      %v1420 = vmul.f32 %v1382, %v1418
      %v1421 = vmul.f32 %v1383, %v1418
      %v1425 = vrot.slane %v1419, 2
      %v1426 = vrot.slane %v1420, 2
      %v1427 = vsel %vm1314, %v1425, %v1426
      %v1428 = vrot.slane %v1421, 2
      %v1429 = vsel %vm1314, %v1426, %v1428
      %v1433 = vadd.f32 %v1412, %v1427
      %v1434 = vadd.f32 %v1413, %v1429
      %v1435 = vadd.f32 %v1414, %v1428
      %v1437 = vlaneseq
      %v1438 = vshrl.u32 %v1437, 7
      %v1439 = vsub.s32 0, %v1438
      %v1440 = vrot.slane %v323, %v1439
      %v1442 = vadd.f32 %v1433, %v1440
      %v1443 = vadd.f32 %v1434, %v1440
      %v1444 = vadd.f32 %v1435, %v1440
      %v1445 = vmax.f32 %v1442, 0.0
      %v1446 = vmax.f32 %v1443, 0.0
      %v1447 = vmax.f32 %v1444, 0.0
      %v1448 = vmin.f32 %v1445, 6.0
      %v1449 = vmin.f32 %v1446, 6.0
      %v1450 = vmin.f32 %v1447, 6.0
      %v1452 = vlaneseq
      %v1453 = vshrl.u32 %v1452, 7
      %v1454 = vsub.s32 0, %v1453
      %v1455 = vrot.slane %v325, %v1454
      %v1458 = vsel %vm450, %v1448, 0
      %v1461 = vsel %vm450, %v1449, 0
      %v1464 = vsel %vm450, %v1450, 0
      %1466 = vmatprep.subr.mxu0 0.0
      %1467 = vmatpush1.msra.mxu0 0.0
      %1468 = vmatprep.subr.mxu0 0.0
      %1469 = vmatpush1.msra.mxu0 0.0
      %1470 = vmatprep.subr.mxu0 0.0
      %1471 = vmatpush1.msra.mxu0 0.0
      %1472 = vmatprep.subr.mxu0 0.0
      %1473 = vmatpush1.msra.mxu0 0.0
      %1474 = vmatprep.subr.mxu0 0.0
      %1475 = vmatpush1.msra.mxu0 0.0
      %1476 = vmatprep.subr.mxu0 0.0
      %1477 = vmatpush1.msra.mxu0 0.0
      %1478 = vmatprep.subr.mxu0 0.0
      %1479 = vmatpush1.msra.mxu0 0.0
      %1480 = vmatprep.subr.mxu0 0.0
      %1481 = vmatpush1.msra.mxu0 0.0
      %1482 = vmatprep.subr.mxu0 0.0
      %1483 = vmatpush1.msra.mxu0 0.0
      %1484 = vmatprep.subr.mxu0 0.0
      %1485 = vmatpush1.msra.mxu0 0.0
      %1486 = vmatprep.subr.mxu0 0.0
      %1487 = vmatpush1.msra.mxu0 0.0
      %1488 = vmatprep.subr.mxu0 0.0
      %1489 = vmatpush1.msra.mxu0 0.0
      %1490 = vmatprep.subr.mxu0 0.0
      %1491 = vmatpush1.msra.mxu0 0.0
      %1492 = vmatprep.subr.mxu0 0.0
      %1493 = vmatpush1.msra.mxu0 0.0
      %1494 = vmatprep.subr.mxu0 0.0
      %1495 = vmatpush1.msra.mxu0 0.0
      %1496 = vmatprep.subr.mxu0 0.0
      %1497 = vmatpush1.msra.mxu0 %v324
      %1498 = vmatprep.subr.mxu0 0.0
      %1499 = vmatpush2.msra.mxu0 0.0
      %1500 = vmatprep.subr.mxu0 0.0
      %1501 = vmatpush2.msra.mxu0 0.0
      %1502 = vmatprep.subr.mxu0 0.0
      %1503 = vmatpush2.msra.mxu0 0.0
      %1504 = vmatprep.subr.mxu0 0.0
      %1505 = vmatpush2.msra.mxu0 0.0
      %1506 = vmatprep.subr.mxu0 0.0
      %1507 = vmatpush2.msra.mxu0 0.0
      %1508 = vmatprep.subr.mxu0 0.0
      %1509 = vmatpush2.msra.mxu0 0.0
      %1510 = vmatprep.subr.mxu0 0.0
      %1511 = vmatpush2.msra.mxu0 0.0
      %1512 = vmatprep.subr.mxu0 0.0
      %1513 = vmatpush2.msra.mxu0 0.0
      %1514 = vmatprep.subr.mxu0 0.0
      %1515 = vmatpush2.msra.mxu0 0.0
      %1516 = vmatprep.subr.mxu0 0.0
      %1517 = vmatpush2.msra.mxu0 0.0
      %1518 = vmatprep.subr.mxu0 0.0
      %1519 = vmatpush2.msra.mxu0 0.0
      %1520 = vmatprep.subr.mxu0 0.0
      %1521 = vmatpush2.msra.mxu0 0.0
      %1522 = vmatprep.subr.mxu0 0.0
      %1523 = vmatpush2.msra.mxu0 0.0
      %1524 = vmatprep.subr.mxu0 0.0
      %1525 = vmatpush2.msra.mxu0 0.0
      %1526 = vmatprep.subr.mxu0 0.0
      %1527 = vmatpush2.msra.mxu0 0.0
      %1528 = vmatprep.subr.mxu0 0.0
      %1529 = vmatpush2.msra.mxu0 0.0
      %1530 = vmatprep.mubr.f32.mxu0 0.0
      %1531 = vmatmul.mubr.f32.gmra.mxu0 %v1458
      %v1532 = vpop.f32.mrf.mxu0
      %v1533 = vadd.f32 %v1455, %v1532
      %v1534 = vpop.f32.mrf.mxu0
      %1535 = vmatprep.mubr.f32.mxu0 0.0
      %1536 = vmatmul.mubr.f32.gmra.mxu0 %v1461
      %v1537 = vpop.f32.mrf.mxu0
      %v1538 = vadd.f32 %v1455, %v1537
      %v1539 = vpop.f32.mrf.mxu0
      %1540 = vmatprep.mubr.f32.mxu0 0.0
      %1541 = vmatmul.mubr.f32.gmra.mxu0 %v1464
      %v1542 = vpop.f32.mrf.mxu0
      %v1543 = vadd.f32 %v1455, %v1542
      %v1544 = vpop.f32.mrf.mxu0
      %1545 = vdwg.mxu0
      %v1546 = vmax.f32 %v1533, 0.0
      %v1547 = vmax.f32 %v1538, 0.0
      %v1548 = vmax.f32 %v1543, 0.0
      %v1549 = vmin.f32 %v1546, 6.0
      %v1550 = vmin.f32 %v1547, 6.0
      %v1551 = vmin.f32 %v1548, 6.0
      %1552 = vst.msk [vmem:[%s302 + $0x1] sm:$0xff] %vm450, %v1549
      %1553 = vst.msk [vmem:[%s302 + $0x9] sm:$0xff] %vm450, %v1550
      %vm1554 = vcmask 58368
      %1555 = vst.msk [vmem:[%s302 + $0x11] sm:$0x3] %vm1554, %v1551
      %vm1556 = vcmask 57344
      %1557 = vst.msk [vmem:[%s302] sm:$0x1] %vm1556, %v1268
      %1558 = vst.msk [vmem:[%s302 + $0x13] sm:$0x1] %vm1556, %v1268
      %v1559 = vld [vmem:[%s567] sm:$0xff]
      %v1560 = vld [vmem:[%s567 + $0x8] sm:$0xff]
      %v1561 = vld [vmem:[%s567 + $0x10] sm:$0xf]
      %v1562 = vmul.f32 %v1559, %v1275
      %v1563 = vmul.f32 %v1560, %v1275
      %v1564 = vmul.f32 %v1561, %v1275
      %v1565 = vadd.f32 %v1562, 0.0
      %v1566 = vadd.f32 %v1563, 0.0
      %v1567 = vadd.f32 %v1564, 0.0
      %v1568 = vmul.f32 %v1559, %v1285
      %v1569 = vmul.f32 %v1560, %v1285
      %v1570 = vmul.f32 %v1561, %v1285
      %v1574 = vrot.slane %v1568, 1
      %v1575 = vrot.slane %v1569, 1
      %v1576 = vsel %vm1292, %v1574, %v1575
      %v1577 = vrot.slane %v1570, 1
      %v1578 = vsel %vm1292, %v1575, %v1577
      %v1582 = vadd.f32 %v1565, %v1576
      %v1583 = vadd.f32 %v1566, %v1578
      %v1584 = vadd.f32 %v1567, %v1577
      %v1585 = vmul.f32 %v1559, %v1307
      %v1586 = vmul.f32 %v1560, %v1307
      %v1587 = vmul.f32 %v1561, %v1307
      %v1591 = vrot.slane %v1585, 2
      %v1592 = vrot.slane %v1586, 2
      %v1593 = vsel %vm1314, %v1591, %v1592
      %v1594 = vrot.slane %v1587, 2
      %v1595 = vsel %vm1314, %v1592, %v1594
      %v1599 = vadd.f32 %v1582, %v1593
      %v1600 = vadd.f32 %v1583, %v1595
      %v1601 = vadd.f32 %v1584, %v1594
      %v1602 = vld [vmem:[%s683] sm:$0xff]
      %v1603 = vld [vmem:[%s683 + $0x8] sm:$0xff]
      %v1604 = vld [vmem:[%s683 + $0x10] sm:$0xf]
      %v1605 = vmul.f32 %v1602, %v1332
      %v1606 = vmul.f32 %v1603, %v1332
      %v1607 = vmul.f32 %v1604, %v1332
      %v1608 = vadd.f32 %v1599, %v1605
      %v1609 = vadd.f32 %v1600, %v1606
      %v1610 = vadd.f32 %v1601, %v1607
      %v1611 = vmul.f32 %v1602, %v1342
      %v1612 = vmul.f32 %v1603, %v1342
      %v1613 = vmul.f32 %v1604, %v1342
      %v1617 = vrot.slane %v1611, 1
      %v1618 = vrot.slane %v1612, 1
      %v1619 = vsel %vm1292, %v1617, %v1618
      %v1620 = vrot.slane %v1613, 1
      %v1621 = vsel %vm1292, %v1618, %v1620
      %v1625 = vadd.f32 %v1608, %v1619
      %v1626 = vadd.f32 %v1609, %v1621
      %v1627 = vadd.f32 %v1610, %v1620
      %v1628 = vmul.f32 %v1602, %v1363
      %v1629 = vmul.f32 %v1603, %v1363
      %v1630 = vmul.f32 %v1604, %v1363
      %v1634 = vrot.slane %v1628, 2
      %v1635 = vrot.slane %v1629, 2
      %v1636 = vsel %vm1314, %v1634, %v1635
      %v1637 = vrot.slane %v1630, 2
      %v1638 = vsel %vm1314, %v1635, %v1637
      %v1642 = vadd.f32 %v1625, %v1636
      %v1643 = vadd.f32 %v1626, %v1638
      %v1644 = vadd.f32 %v1627, %v1637
      %v1645 = vld [vmem:[%s799] sm:$0xff]
      %v1646 = vld [vmem:[%s799 + $0x8] sm:$0xff]
      %v1647 = vld [vmem:[%s799 + $0x10] sm:$0xf]
      %v1648 = vmul.f32 %v1645, %v1387
      %v1649 = vmul.f32 %v1646, %v1387
      %v1650 = vmul.f32 %v1647, %v1387
      %v1651 = vadd.f32 %v1642, %v1648
      %v1652 = vadd.f32 %v1643, %v1649
      %v1653 = vadd.f32 %v1644, %v1650
      %v1654 = vmul.f32 %v1645, %v1397
      %v1655 = vmul.f32 %v1646, %v1397
      %v1656 = vmul.f32 %v1647, %v1397
      %v1660 = vrot.slane %v1654, 1
      %v1661 = vrot.slane %v1655, 1
      %v1662 = vsel %vm1292, %v1660, %v1661
      %v1663 = vrot.slane %v1656, 1
      %v1664 = vsel %vm1292, %v1661, %v1663
      %v1668 = vadd.f32 %v1651, %v1662
      %v1669 = vadd.f32 %v1652, %v1664
      %v1670 = vadd.f32 %v1653, %v1663
      %v1671 = vmul.f32 %v1645, %v1418
      %v1672 = vmul.f32 %v1646, %v1418
      %v1673 = vmul.f32 %v1647, %v1418
      %v1677 = vrot.slane %v1671, 2
      %v1678 = vrot.slane %v1672, 2
      %v1679 = vsel %vm1314, %v1677, %v1678
      %v1680 = vrot.slane %v1673, 2
      %v1681 = vsel %vm1314, %v1678, %v1680
      %v1685 = vadd.f32 %v1668, %v1679
      %v1686 = vadd.f32 %v1669, %v1681
      %v1687 = vadd.f32 %v1670, %v1680
      %v1688 = vadd.f32 %v1685, %v1440
      %v1689 = vadd.f32 %v1686, %v1440
      %v1690 = vadd.f32 %v1687, %v1440
      %v1691 = vmax.f32 %v1688, 0.0
      %v1692 = vmax.f32 %v1689, 0.0
      %v1693 = vmax.f32 %v1690, 0.0
      %v1694 = vmin.f32 %v1691, 6.0
      %v1695 = vmin.f32 %v1692, 6.0
      %v1696 = vmin.f32 %v1693, 6.0
      %v1698 = vsel %vm450, %v1694, 0
      %v1701 = vsel %vm450, %v1695, 0
      %v1704 = vsel %vm450, %v1696, 0
      %1706 = vmatprep.subr.mxu0 0.0
      %1707 = vmatpush1.msra.mxu0 0.0
      %1708 = vmatprep.subr.mxu0 0.0
      %1709 = vmatpush1.msra.mxu0 0.0
      %1710 = vmatprep.subr.mxu0 0.0
      %1711 = vmatpush1.msra.mxu0 0.0
      %1712 = vmatprep.subr.mxu0 0.0
      %1713 = vmatpush1.msra.mxu0 0.0
      %1714 = vmatprep.subr.mxu0 0.0
      %1715 = vmatpush1.msra.mxu0 0.0
      %1716 = vmatprep.subr.mxu0 0.0
      %1717 = vmatpush1.msra.mxu0 0.0
      %1718 = vmatprep.subr.mxu0 0.0
      %1719 = vmatpush1.msra.mxu0 0.0
      %1720 = vmatprep.subr.mxu0 0.0
      %1721 = vmatpush1.msra.mxu0 0.0
      %1722 = vmatprep.subr.mxu0 0.0
      %1723 = vmatpush1.msra.mxu0 0.0
      %1724 = vmatprep.subr.mxu0 0.0
      %1725 = vmatpush1.msra.mxu0 0.0
      %1726 = vmatprep.subr.mxu0 0.0
      %1727 = vmatpush1.msra.mxu0 0.0
      %1728 = vmatprep.subr.mxu0 0.0
      %1729 = vmatpush1.msra.mxu0 0.0
      %1730 = vmatprep.subr.mxu0 0.0
      %1731 = vmatpush1.msra.mxu0 0.0
      %1732 = vmatprep.subr.mxu0 0.0
      %1733 = vmatpush1.msra.mxu0 0.0
      %1734 = vmatprep.subr.mxu0 0.0
      %1735 = vmatpush1.msra.mxu0 0.0
      %1736 = vmatprep.subr.mxu0 0.0
      %1737 = vmatpush1.msra.mxu0 %v324
      %1738 = vmatprep.subr.mxu0 0.0
      %1739 = vmatpush2.msra.mxu0 0.0
      %1740 = vmatprep.subr.mxu0 0.0
      %1741 = vmatpush2.msra.mxu0 0.0
      %1742 = vmatprep.subr.mxu0 0.0
      %1743 = vmatpush2.msra.mxu0 0.0
      %1744 = vmatprep.subr.mxu0 0.0
      %1745 = vmatpush2.msra.mxu0 0.0
      %1746 = vmatprep.subr.mxu0 0.0
      %1747 = vmatpush2.msra.mxu0 0.0
      %1748 = vmatprep.subr.mxu0 0.0
      %1749 = vmatpush2.msra.mxu0 0.0
      %1750 = vmatprep.subr.mxu0 0.0
      %1751 = vmatpush2.msra.mxu0 0.0
      %1752 = vmatprep.subr.mxu0 0.0
      %1753 = vmatpush2.msra.mxu0 0.0
      %1754 = vmatprep.subr.mxu0 0.0
      %1755 = vmatpush2.msra.mxu0 0.0
      %1756 = vmatprep.subr.mxu0 0.0
      %1757 = vmatpush2.msra.mxu0 0.0
      %1758 = vmatprep.subr.mxu0 0.0
      %1759 = vmatpush2.msra.mxu0 0.0
      %1760 = vmatprep.subr.mxu0 0.0
      %1761 = vmatpush2.msra.mxu0 0.0
      %1762 = vmatprep.subr.mxu0 0.0
      %1763 = vmatpush2.msra.mxu0 0.0
      %1764 = vmatprep.subr.mxu0 0.0
      %1765 = vmatpush2.msra.mxu0 0.0
      %1766 = vmatprep.subr.mxu0 0.0
      %1767 = vmatpush2.msra.mxu0 0.0
      %1768 = vmatprep.subr.mxu0 0.0
      %1769 = vmatpush2.msra.mxu0 0.0
      %1770 = vmatprep.mubr.f32.mxu0 0.0
      %1771 = vmatmul.mubr.f32.gmra.mxu0 %v1698
      %v1772 = vpop.f32.mrf.mxu0
      %v1773 = vadd.f32 %v1455, %v1772
      %v1774 = vpop.f32.mrf.mxu0
      %1775 = vmatprep.mubr.f32.mxu0 0.0
      %1776 = vmatmul.mubr.f32.gmra.mxu0 %v1701
      %v1777 = vpop.f32.mrf.mxu0
      %v1778 = vadd.f32 %v1455, %v1777
      %v1779 = vpop.f32.mrf.mxu0
      %1780 = vmatprep.mubr.f32.mxu0 0.0
      %1781 = vmatmul.mubr.f32.gmra.mxu0 %v1704
      %v1782 = vpop.f32.mrf.mxu0
      %v1783 = vadd.f32 %v1455, %v1782
      %v1784 = vpop.f32.mrf.mxu0
      %1785 = vdwg.mxu0
      %v1786 = vmax.f32 %v1773, 0.0
      %v1787 = vmax.f32 %v1778, 0.0
      %v1788 = vmax.f32 %v1783, 0.0
      %v1789 = vmin.f32 %v1786, 6.0
      %v1790 = vmin.f32 %v1787, 6.0
      %v1791 = vmin.f32 %v1788, 6.0
      %s1792 = scalar_lea.vmem %s302, 24
      %1793 = vst.msk [vmem:[%s1792 + $0x1] sm:$0xff] %vm450, %v1789
      %1794 = vst.msk [vmem:[%s1792 + $0x9] sm:$0xff] %vm450, %v1790
      %1795 = vst.msk [vmem:[%s1792 + $0x11] sm:$0x3] %vm1554, %v1791
      %1796 = vst.msk [vmem:[%s1792] sm:$0x1] %vm1556, %v1268
      %1797 = vst.msk [vmem:[%s1792 + $0x13] sm:$0x1] %vm1556, %v1268
      %v1798 = vld [vmem:[%s683] sm:$0xff]
      %v1799 = vld [vmem:[%s683 + $0x8] sm:$0xff]
      %v1800 = vld [vmem:[%s683 + $0x10] sm:$0xf]
      %v1801 = vmul.f32 %v1798, %v1275
      %v1802 = vmul.f32 %v1799, %v1275
      %v1803 = vmul.f32 %v1800, %v1275
      %v1804 = vadd.f32 %v1801, 0.0
      %v1805 = vadd.f32 %v1802, 0.0
      %v1806 = vadd.f32 %v1803, 0.0
      %v1807 = vmul.f32 %v1798, %v1285
      %v1808 = vmul.f32 %v1799, %v1285
      %v1809 = vmul.f32 %v1800, %v1285
      %v1813 = vrot.slane %v1807, 1
      %v1814 = vrot.slane %v1808, 1
      %v1815 = vsel %vm1292, %v1813, %v1814
      %v1816 = vrot.slane %v1809, 1
      %v1817 = vsel %vm1292, %v1814, %v1816
      %v1821 = vadd.f32 %v1804, %v1815
      %v1822 = vadd.f32 %v1805, %v1817
      %v1823 = vadd.f32 %v1806, %v1816
      %v1824 = vmul.f32 %v1798, %v1307
      %v1825 = vmul.f32 %v1799, %v1307
      %v1826 = vmul.f32 %v1800, %v1307
      %v1830 = vrot.slane %v1824, 2
      %v1831 = vrot.slane %v1825, 2
      %v1832 = vsel %vm1314, %v1830, %v1831
      %v1833 = vrot.slane %v1826, 2
      %v1834 = vsel %vm1314, %v1831, %v1833
      %v1838 = vadd.f32 %v1821, %v1832
      %v1839 = vadd.f32 %v1822, %v1834
      %v1840 = vadd.f32 %v1823, %v1833
      %v1841 = vld [vmem:[%s799] sm:$0xff]
      %v1842 = vld [vmem:[%s799 + $0x8] sm:$0xff]
      %v1843 = vld [vmem:[%s799 + $0x10] sm:$0xf]
      %v1844 = vmul.f32 %v1841, %v1332
      %v1845 = vmul.f32 %v1842, %v1332
      %v1846 = vmul.f32 %v1843, %v1332
      %v1847 = vadd.f32 %v1838, %v1844
      %v1848 = vadd.f32 %v1839, %v1845
      %v1849 = vadd.f32 %v1840, %v1846
      %v1850 = vmul.f32 %v1841, %v1342
      %v1851 = vmul.f32 %v1842, %v1342
      %v1852 = vmul.f32 %v1843, %v1342
      %v1856 = vrot.slane %v1850, 1
      %v1857 = vrot.slane %v1851, 1
      %v1858 = vsel %vm1292, %v1856, %v1857
      %v1859 = vrot.slane %v1852, 1
      %v1860 = vsel %vm1292, %v1857, %v1859
      %v1864 = vadd.f32 %v1847, %v1858
      %v1865 = vadd.f32 %v1848, %v1860
      %v1866 = vadd.f32 %v1849, %v1859
      %v1867 = vmul.f32 %v1841, %v1363
      %v1868 = vmul.f32 %v1842, %v1363
      %v1869 = vmul.f32 %v1843, %v1363
      %v1873 = vrot.slane %v1867, 2
      %v1874 = vrot.slane %v1868, 2
      %v1875 = vsel %vm1314, %v1873, %v1874
      %v1876 = vrot.slane %v1869, 2
      %v1877 = vsel %vm1314, %v1874, %v1876
      %v1881 = vadd.f32 %v1864, %v1875
      %v1882 = vadd.f32 %v1865, %v1877
      %v1883 = vadd.f32 %v1866, %v1876
      %v1884 = vld [vmem:[%s915] sm:$0xff]
      %v1885 = vld [vmem:[%s915 + $0x8] sm:$0xff]
      %v1886 = vld [vmem:[%s915 + $0x10] sm:$0xf]
      %v1887 = vmul.f32 %v1884, %v1387
      %v1888 = vmul.f32 %v1885, %v1387
      %v1889 = vmul.f32 %v1886, %v1387
      %v1890 = vadd.f32 %v1881, %v1887
      %v1891 = vadd.f32 %v1882, %v1888
      %v1892 = vadd.f32 %v1883, %v1889
      %v1893 = vmul.f32 %v1884, %v1397
      %v1894 = vmul.f32 %v1885, %v1397
      %v1895 = vmul.f32 %v1886, %v1397
      %v1899 = vrot.slane %v1893, 1
      %v1900 = vrot.slane %v1894, 1
      %v1901 = vsel %vm1292, %v1899, %v1900
      %v1902 = vrot.slane %v1895, 1
      %v1903 = vsel %vm1292, %v1900, %v1902
      %v1907 = vadd.f32 %v1890, %v1901
      %v1908 = vadd.f32 %v1891, %v1903
      %v1909 = vadd.f32 %v1892, %v1902
      %v1910 = vmul.f32 %v1884, %v1418
      %v1911 = vmul.f32 %v1885, %v1418
      %v1912 = vmul.f32 %v1886, %v1418
      %v1916 = vrot.slane %v1910, 2
      %v1917 = vrot.slane %v1911, 2
      %v1918 = vsel %vm1314, %v1916, %v1917
      %v1919 = vrot.slane %v1912, 2
      %v1920 = vsel %vm1314, %v1917, %v1919
      %v1924 = vadd.f32 %v1907, %v1918
      %v1925 = vadd.f32 %v1908, %v1920
      %v1926 = vadd.f32 %v1909, %v1919
      %v1927 = vadd.f32 %v1924, %v1440
      %v1928 = vadd.f32 %v1925, %v1440
      %v1929 = vadd.f32 %v1926, %v1440
      %v1930 = vmax.f32 %v1927, 0.0
      %v1931 = vmax.f32 %v1928, 0.0
      %v1932 = vmax.f32 %v1929, 0.0
      %v1933 = vmin.f32 %v1930, 6.0
      %v1934 = vmin.f32 %v1931, 6.0
      %v1935 = vmin.f32 %v1932, 6.0
      %v1937 = vsel %vm450, %v1933, 0
      %v1940 = vsel %vm450, %v1934, 0
      %v1943 = vsel %vm450, %v1935, 0
      %1945 = vmatprep.subr.mxu0 0.0
      %1946 = vmatpush1.msra.mxu0 0.0
      %1947 = vmatprep.subr.mxu0 0.0
      %1948 = vmatpush1.msra.mxu0 0.0
      %1949 = vmatprep.subr.mxu0 0.0
      %1950 = vmatpush1.msra.mxu0 0.0
      %1951 = vmatprep.subr.mxu0 0.0
      %1952 = vmatpush1.msra.mxu0 0.0
      %1953 = vmatprep.subr.mxu0 0.0
      %1954 = vmatpush1.msra.mxu0 0.0
      %1955 = vmatprep.subr.mxu0 0.0
      %1956 = vmatpush1.msra.mxu0 0.0
      %1957 = vmatprep.subr.mxu0 0.0
      %1958 = vmatpush1.msra.mxu0 0.0
      %1959 = vmatprep.subr.mxu0 0.0
      %1960 = vmatpush1.msra.mxu0 0.0
      %1961 = vmatprep.subr.mxu0 0.0
      %1962 = vmatpush1.msra.mxu0 0.0
      %1963 = vmatprep.subr.mxu0 0.0
      %1964 = vmatpush1.msra.mxu0 0.0
      %1965 = vmatprep.subr.mxu0 0.0
      %1966 = vmatpush1.msra.mxu0 0.0
      %1967 = vmatprep.subr.mxu0 0.0
      %1968 = vmatpush1.msra.mxu0 0.0
      %1969 = vmatprep.subr.mxu0 0.0
      %1970 = vmatpush1.msra.mxu0 0.0
      %1971 = vmatprep.subr.mxu0 0.0
      %1972 = vmatpush1.msra.mxu0 0.0
      %1973 = vmatprep.subr.mxu0 0.0
      %1974 = vmatpush1.msra.mxu0 0.0
      %1975 = vmatprep.subr.mxu0 0.0
      %1976 = vmatpush1.msra.mxu0 %v324
      %1977 = vmatprep.subr.mxu0 0.0
      %1978 = vmatpush2.msra.mxu0 0.0
      %1979 = vmatprep.subr.mxu0 0.0
      %1980 = vmatpush2.msra.mxu0 0.0
      %1981 = vmatprep.subr.mxu0 0.0
      %1982 = vmatpush2.msra.mxu0 0.0
      %1983 = vmatprep.subr.mxu0 0.0
      %1984 = vmatpush2.msra.mxu0 0.0
      %1985 = vmatprep.subr.mxu0 0.0
      %1986 = vmatpush2.msra.mxu0 0.0
      %1987 = vmatprep.subr.mxu0 0.0
      %1988 = vmatpush2.msra.mxu0 0.0
      %1989 = vmatprep.subr.mxu0 0.0
      %1990 = vmatpush2.msra.mxu0 0.0
      %1991 = vmatprep.subr.mxu0 0.0
      %1992 = vmatpush2.msra.mxu0 0.0
      %1993 = vmatprep.subr.mxu0 0.0
      %1994 = vmatpush2.msra.mxu0 0.0
      %1995 = vmatprep.subr.mxu0 0.0
      %1996 = vmatpush2.msra.mxu0 0.0
      %1997 = vmatprep.subr.mxu0 0.0
      %1998 = vmatpush2.msra.mxu0 0.0
      %1999 = vmatprep.subr.mxu0 0.0
      %2000 = vmatpush2.msra.mxu0 0.0
      %2001 = vmatprep.subr.mxu0 0.0
      %2002 = vmatpush2.msra.mxu0 0.0
      %2003 = vmatprep.subr.mxu0 0.0
      %2004 = vmatpush2.msra.mxu0 0.0
      %2005 = vmatprep.subr.mxu0 0.0
      %2006 = vmatpush2.msra.mxu0 0.0
      %2007 = vmatprep.subr.mxu0 0.0
      %2008 = vmatpush2.msra.mxu0 0.0
      %2009 = vmatprep.mubr.f32.mxu0 0.0
      %2010 = vmatmul.mubr.f32.gmra.mxu0 %v1937
      %v2011 = vpop.f32.mrf.mxu0
      %v2012 = vadd.f32 %v1455, %v2011
      %v2013 = vpop.f32.mrf.mxu0
      %2014 = vmatprep.mubr.f32.mxu0 0.0
      %2015 = vmatmul.mubr.f32.gmra.mxu0 %v1940
      %v2016 = vpop.f32.mrf.mxu0
      %v2017 = vadd.f32 %v1455, %v2016
      %v2018 = vpop.f32.mrf.mxu0
      %2019 = vmatprep.mubr.f32.mxu0 0.0
      %2020 = vmatmul.mubr.f32.gmra.mxu0 %v1943
      %v2021 = vpop.f32.mrf.mxu0
      %v2022 = vadd.f32 %v1455, %v2021
      %v2023 = vpop.f32.mrf.mxu0
      %2024 = vdwg.mxu0
      %v2025 = vmax.f32 %v2012, 0.0
      %v2026 = vmax.f32 %v2017, 0.0
      %v2027 = vmax.f32 %v2022, 0.0
      %v2028 = vmin.f32 %v2025, 6.0
      %v2029 = vmin.f32 %v2026, 6.0
      %v2030 = vmin.f32 %v2027, 6.0
      %s2031 = scalar_lea.vmem %s302, 48
      %2032 = vst.msk [vmem:[%s2031 + $0x1] sm:$0xff] %vm450, %v2028
      %2033 = vst.msk [vmem:[%s2031 + $0x9] sm:$0xff] %vm450, %v2029
      %2034 = vst.msk [vmem:[%s2031 + $0x11] sm:$0x3] %vm1554, %v2030
      %2035 = vst.msk [vmem:[%s2031] sm:$0x1] %vm1556, %v1268
      %2036 = vst.msk [vmem:[%s2031 + $0x13] sm:$0x1] %vm1556, %v1268
      %v2037 = vld [vmem:[%s799] sm:$0xff]
      %v2038 = vld [vmem:[%s799 + $0x8] sm:$0xff]
      %v2039 = vld [vmem:[%s799 + $0x10] sm:$0xf]
      %v2040 = vmul.f32 %v2037, %v1275
      %v2041 = vmul.f32 %v2038, %v1275
      %v2042 = vmul.f32 %v2039, %v1275
      %v2043 = vadd.f32 %v2040, 0.0
      %v2044 = vadd.f32 %v2041, 0.0
      %v2045 = vadd.f32 %v2042, 0.0
      %v2046 = vmul.f32 %v2037, %v1285
      %v2047 = vmul.f32 %v2038, %v1285
      %v2048 = vmul.f32 %v2039, %v1285
      %v2052 = vrot.slane %v2046, 1
      %v2053 = vrot.slane %v2047, 1
      %v2054 = vsel %vm1292, %v2052, %v2053
      %v2055 = vrot.slane %v2048, 1
      %v2056 = vsel %vm1292, %v2053, %v2055
      %v2060 = vadd.f32 %v2043, %v2054
      %v2061 = vadd.f32 %v2044, %v2056
      %v2062 = vadd.f32 %v2045, %v2055
      %v2063 = vmul.f32 %v2037, %v1307
      %v2064 = vmul.f32 %v2038, %v1307
      %v2065 = vmul.f32 %v2039, %v1307
      %v2069 = vrot.slane %v2063, 2
      %v2070 = vrot.slane %v2064, 2
      %v2071 = vsel %vm1314, %v2069, %v2070
      %v2072 = vrot.slane %v2065, 2
      %v2073 = vsel %vm1314, %v2070, %v2072
      %v2077 = vadd.f32 %v2060, %v2071
      %v2078 = vadd.f32 %v2061, %v2073
      %v2079 = vadd.f32 %v2062, %v2072
      %v2080 = vld [vmem:[%s915] sm:$0xff]
      %v2081 = vld [vmem:[%s915 + $0x8] sm:$0xff]
      %v2082 = vld [vmem:[%s915 + $0x10] sm:$0xf]
      %v2083 = vmul.f32 %v2080, %v1332
      %v2084 = vmul.f32 %v2081, %v1332
      %v2085 = vmul.f32 %v2082, %v1332
      %v2086 = vadd.f32 %v2077, %v2083
      %v2087 = vadd.f32 %v2078, %v2084
      %v2088 = vadd.f32 %v2079, %v2085
      %v2089 = vmul.f32 %v2080, %v1342
      %v2090 = vmul.f32 %v2081, %v1342
      %v2091 = vmul.f32 %v2082, %v1342
      %v2095 = vrot.slane %v2089, 1
      %v2096 = vrot.slane %v2090, 1
      %v2097 = vsel %vm1292, %v2095, %v2096
      %v2098 = vrot.slane %v2091, 1
      %v2099 = vsel %vm1292, %v2096, %v2098
      %v2103 = vadd.f32 %v2086, %v2097
      %v2104 = vadd.f32 %v2087, %v2099
      %v2105 = vadd.f32 %v2088, %v2098
      %v2106 = vmul.f32 %v2080, %v1363
      %v2107 = vmul.f32 %v2081, %v1363
      %v2108 = vmul.f32 %v2082, %v1363
      %v2112 = vrot.slane %v2106, 2
      %v2113 = vrot.slane %v2107, 2
      %v2114 = vsel %vm1314, %v2112, %v2113
      %v2115 = vrot.slane %v2108, 2
      %v2116 = vsel %vm1314, %v2113, %v2115
      %v2120 = vadd.f32 %v2103, %v2114
      %v2121 = vadd.f32 %v2104, %v2116
      %v2122 = vadd.f32 %v2105, %v2115
      %v2123 = vld [vmem:[%s1031] sm:$0xff]
      %v2124 = vld [vmem:[%s1031 + $0x8] sm:$0xff]
      %v2125 = vld [vmem:[%s1031 + $0x10] sm:$0xf]
      %v2126 = vmul.f32 %v2123, %v1387
      %v2127 = vmul.f32 %v2124, %v1387
      %v2128 = vmul.f32 %v2125, %v1387
      %v2129 = vadd.f32 %v2120, %v2126
      %v2130 = vadd.f32 %v2121, %v2127
      %v2131 = vadd.f32 %v2122, %v2128
      %v2132 = vmul.f32 %v2123, %v1397
      %v2133 = vmul.f32 %v2124, %v1397
      %v2134 = vmul.f32 %v2125, %v1397
      %v2138 = vrot.slane %v2132, 1
      %v2139 = vrot.slane %v2133, 1
      %v2140 = vsel %vm1292, %v2138, %v2139
      %v2141 = vrot.slane %v2134, 1
      %v2142 = vsel %vm1292, %v2139, %v2141
      %v2146 = vadd.f32 %v2129, %v2140
      %v2147 = vadd.f32 %v2130, %v2142
      %v2148 = vadd.f32 %v2131, %v2141
      %v2149 = vmul.f32 %v2123, %v1418
      %v2150 = vmul.f32 %v2124, %v1418
      %v2151 = vmul.f32 %v2125, %v1418
      %v2155 = vrot.slane %v2149, 2
      %v2156 = vrot.slane %v2150, 2
      %v2157 = vsel %vm1314, %v2155, %v2156
      %v2158 = vrot.slane %v2151, 2
      %v2159 = vsel %vm1314, %v2156, %v2158
      %v2163 = vadd.f32 %v2146, %v2157
      %v2164 = vadd.f32 %v2147, %v2159
      %v2165 = vadd.f32 %v2148, %v2158
      %v2166 = vadd.f32 %v2163, %v1440
      %v2167 = vadd.f32 %v2164, %v1440
      %v2168 = vadd.f32 %v2165, %v1440
      %v2169 = vmax.f32 %v2166, 0.0
      %v2170 = vmax.f32 %v2167, 0.0
      %v2171 = vmax.f32 %v2168, 0.0
      %v2172 = vmin.f32 %v2169, 6.0
      %v2173 = vmin.f32 %v2170, 6.0
      %v2174 = vmin.f32 %v2171, 6.0
      %v2176 = vsel %vm450, %v2172, 0
      %v2179 = vsel %vm450, %v2173, 0
      %v2182 = vsel %vm450, %v2174, 0
      %2184 = vmatprep.subr.mxu0 0.0
      %2185 = vmatpush1.msra.mxu0 0.0
      %2186 = vmatprep.subr.mxu0 0.0
      %2187 = vmatpush1.msra.mxu0 0.0
      %2188 = vmatprep.subr.mxu0 0.0
      %2189 = vmatpush1.msra.mxu0 0.0
      %2190 = vmatprep.subr.mxu0 0.0
      %2191 = vmatpush1.msra.mxu0 0.0
      %2192 = vmatprep.subr.mxu0 0.0
      %2193 = vmatpush1.msra.mxu0 0.0
      %2194 = vmatprep.subr.mxu0 0.0
      %2195 = vmatpush1.msra.mxu0 0.0
      %2196 = vmatprep.subr.mxu0 0.0
      %2197 = vmatpush1.msra.mxu0 0.0
      %2198 = vmatprep.subr.mxu0 0.0
      %2199 = vmatpush1.msra.mxu0 0.0
      %2200 = vmatprep.subr.mxu0 0.0
      %2201 = vmatpush1.msra.mxu0 0.0
      %2202 = vmatprep.subr.mxu0 0.0
      %2203 = vmatpush1.msra.mxu0 0.0
      %2204 = vmatprep.subr.mxu0 0.0
      %2205 = vmatpush1.msra.mxu0 0.0
      %2206 = vmatprep.subr.mxu0 0.0
      %2207 = vmatpush1.msra.mxu0 0.0
      %2208 = vmatprep.subr.mxu0 0.0
      %2209 = vmatpush1.msra.mxu0 0.0
      %2210 = vmatprep.subr.mxu0 0.0
      %2211 = vmatpush1.msra.mxu0 0.0
      %2212 = vmatprep.subr.mxu0 0.0
      %2213 = vmatpush1.msra.mxu0 0.0
      %2214 = vmatprep.subr.mxu0 0.0
      %2215 = vmatpush1.msra.mxu0 %v324
      %2216 = vmatprep.subr.mxu0 0.0
      %2217 = vmatpush2.msra.mxu0 0.0
      %2218 = vmatprep.subr.mxu0 0.0
      %2219 = vmatpush2.msra.mxu0 0.0
      %2220 = vmatprep.subr.mxu0 0.0
      %2221 = vmatpush2.msra.mxu0 0.0
      %2222 = vmatprep.subr.mxu0 0.0
      %2223 = vmatpush2.msra.mxu0 0.0
      %2224 = vmatprep.subr.mxu0 0.0
      %2225 = vmatpush2.msra.mxu0 0.0
      %2226 = vmatprep.subr.mxu0 0.0
      %2227 = vmatpush2.msra.mxu0 0.0
      %2228 = vmatprep.subr.mxu0 0.0
      %2229 = vmatpush2.msra.mxu0 0.0
      %2230 = vmatprep.subr.mxu0 0.0
      %2231 = vmatpush2.msra.mxu0 0.0
      %2232 = vmatprep.subr.mxu0 0.0
      %2233 = vmatpush2.msra.mxu0 0.0
      %2234 = vmatprep.subr.mxu0 0.0
      %2235 = vmatpush2.msra.mxu0 0.0
      %2236 = vmatprep.subr.mxu0 0.0
      %2237 = vmatpush2.msra.mxu0 0.0
      %2238 = vmatprep.subr.mxu0 0.0
      %2239 = vmatpush2.msra.mxu0 0.0
      %2240 = vmatprep.subr.mxu0 0.0
      %2241 = vmatpush2.msra.mxu0 0.0
      %2242 = vmatprep.subr.mxu0 0.0
      %2243 = vmatpush2.msra.mxu0 0.0
      %2244 = vmatprep.subr.mxu0 0.0
      %2245 = vmatpush2.msra.mxu0 0.0
      %2246 = vmatprep.subr.mxu0 0.0
      %2247 = vmatpush2.msra.mxu0 0.0
      %2248 = vmatprep.mubr.f32.mxu0 0.0
      %2249 = vmatmul.mubr.f32.gmra.mxu0 %v2176
      %v2250 = vpop.f32.mrf.mxu0
      %v2251 = vadd.f32 %v1455, %v2250
      %v2252 = vpop.f32.mrf.mxu0
      %2253 = vmatprep.mubr.f32.mxu0 0.0
      %2254 = vmatmul.mubr.f32.gmra.mxu0 %v2179
      %v2255 = vpop.f32.mrf.mxu0
      %v2256 = vadd.f32 %v1455, %v2255
      %v2257 = vpop.f32.mrf.mxu0
      %2258 = vmatprep.mubr.f32.mxu0 0.0
      %2259 = vmatmul.mubr.f32.gmra.mxu0 %v2182
      %v2260 = vpop.f32.mrf.mxu0
      %v2261 = vadd.f32 %v1455, %v2260
      %v2262 = vpop.f32.mrf.mxu0
      %2263 = vdwg.mxu0
      %v2264 = vmax.f32 %v2251, 0.0
      %v2265 = vmax.f32 %v2256, 0.0
      %v2266 = vmax.f32 %v2261, 0.0
      %v2267 = vmin.f32 %v2264, 6.0
      %v2268 = vmin.f32 %v2265, 6.0
      %v2269 = vmin.f32 %v2266, 6.0
      %s2270 = scalar_lea.vmem %s302, 72
      %2271 = vst.msk [vmem:[%s2270 + $0x1] sm:$0xff] %vm450, %v2267
      %2272 = vst.msk [vmem:[%s2270 + $0x9] sm:$0xff] %vm450, %v2268
      %2273 = vst.msk [vmem:[%s2270 + $0x11] sm:$0x3] %vm1554, %v2269
      %2274 = vst.msk [vmem:[%s2270] sm:$0x1] %vm1556, %v1268
      %2275 = vst.msk [vmem:[%s2270 + $0x13] sm:$0x1] %vm1556, %v1268
      %v2276 = vld [vmem:[%s915] sm:$0xff]
      %v2277 = vld [vmem:[%s915 + $0x8] sm:$0xff]
      %v2278 = vld [vmem:[%s915 + $0x10] sm:$0xf]
      %v2279 = vmul.f32 %v2276, %v1275
      %v2280 = vmul.f32 %v2277, %v1275
      %v2281 = vmul.f32 %v2278, %v1275
      %v2282 = vadd.f32 %v2279, 0.0
      %v2283 = vadd.f32 %v2280, 0.0
      %v2284 = vadd.f32 %v2281, 0.0
      %v2285 = vmul.f32 %v2276, %v1285
      %v2286 = vmul.f32 %v2277, %v1285
      %v2287 = vmul.f32 %v2278, %v1285
      %v2291 = vrot.slane %v2285, 1
      %v2292 = vrot.slane %v2286, 1
      %v2293 = vsel %vm1292, %v2291, %v2292
      %v2294 = vrot.slane %v2287, 1
      %v2295 = vsel %vm1292, %v2292, %v2294
      %v2299 = vadd.f32 %v2282, %v2293
      %v2300 = vadd.f32 %v2283, %v2295
      %v2301 = vadd.f32 %v2284, %v2294
      %v2302 = vmul.f32 %v2276, %v1307
      %v2303 = vmul.f32 %v2277, %v1307
      %v2304 = vmul.f32 %v2278, %v1307
      %v2308 = vrot.slane %v2302, 2
      %v2309 = vrot.slane %v2303, 2
      %v2310 = vsel %vm1314, %v2308, %v2309
      %v2311 = vrot.slane %v2304, 2
      %v2312 = vsel %vm1314, %v2309, %v2311
      %v2316 = vadd.f32 %v2299, %v2310
      %v2317 = vadd.f32 %v2300, %v2312
      %v2318 = vadd.f32 %v2301, %v2311
      %v2319 = vld [vmem:[%s1031] sm:$0xff]
      %v2320 = vld [vmem:[%s1031 + $0x8] sm:$0xff]
      %v2321 = vld [vmem:[%s1031 + $0x10] sm:$0xf]
      %v2322 = vmul.f32 %v2319, %v1332
      %v2323 = vmul.f32 %v2320, %v1332
      %v2324 = vmul.f32 %v2321, %v1332
      %v2325 = vadd.f32 %v2316, %v2322
      %v2326 = vadd.f32 %v2317, %v2323
      %v2327 = vadd.f32 %v2318, %v2324
      %v2328 = vmul.f32 %v2319, %v1342
      %v2329 = vmul.f32 %v2320, %v1342
      %v2330 = vmul.f32 %v2321, %v1342
      %v2334 = vrot.slane %v2328, 1
      %v2335 = vrot.slane %v2329, 1
      %v2336 = vsel %vm1292, %v2334, %v2335
      %v2337 = vrot.slane %v2330, 1
      %v2338 = vsel %vm1292, %v2335, %v2337
      %v2342 = vadd.f32 %v2325, %v2336
      %v2343 = vadd.f32 %v2326, %v2338
      %v2344 = vadd.f32 %v2327, %v2337
      %v2345 = vmul.f32 %v2319, %v1363
      %v2346 = vmul.f32 %v2320, %v1363
      %v2347 = vmul.f32 %v2321, %v1363
      %v2351 = vrot.slane %v2345, 2
      %v2352 = vrot.slane %v2346, 2
      %v2353 = vsel %vm1314, %v2351, %v2352
      %v2354 = vrot.slane %v2347, 2
      %v2355 = vsel %vm1314, %v2352, %v2354
      %v2359 = vadd.f32 %v2342, %v2353
      %v2360 = vadd.f32 %v2343, %v2355
      %v2361 = vadd.f32 %v2344, %v2354
      %v2362 = vld [vmem:[%s1147] sm:$0xff]
      %v2363 = vld [vmem:[%s1147 + $0x8] sm:$0xff]
      %v2364 = vld [vmem:[%s1147 + $0x10] sm:$0xf]
      %v2365 = vmul.f32 %v2362, %v1387
      %v2366 = vmul.f32 %v2363, %v1387
      %v2367 = vmul.f32 %v2364, %v1387
      %v2368 = vadd.f32 %v2359, %v2365
      %v2369 = vadd.f32 %v2360, %v2366
      %v2370 = vadd.f32 %v2361, %v2367
      %v2371 = vmul.f32 %v2362, %v1397
      %v2372 = vmul.f32 %v2363, %v1397
      %v2373 = vmul.f32 %v2364, %v1397
      %v2377 = vrot.slane %v2371, 1
      %v2378 = vrot.slane %v2372, 1
      %v2379 = vsel %vm1292, %v2377, %v2378
      %v2380 = vrot.slane %v2373, 1
      %v2381 = vsel %vm1292, %v2378, %v2380
      %v2385 = vadd.f32 %v2368, %v2379
      %v2386 = vadd.f32 %v2369, %v2381
      %v2387 = vadd.f32 %v2370, %v2380
      %v2388 = vmul.f32 %v2362, %v1418
      %v2389 = vmul.f32 %v2363, %v1418
      %v2390 = vmul.f32 %v2364, %v1418
      %v2394 = vrot.slane %v2388, 2
      %v2395 = vrot.slane %v2389, 2
      %v2396 = vsel %vm1314, %v2394, %v2395
      %v2397 = vrot.slane %v2390, 2
      %v2398 = vsel %vm1314, %v2395, %v2397
      %v2402 = vadd.f32 %v2385, %v2396
      %v2403 = vadd.f32 %v2386, %v2398
      %v2404 = vadd.f32 %v2387, %v2397
      %v2405 = vadd.f32 %v2402, %v1440
      %v2406 = vadd.f32 %v2403, %v1440
      %v2407 = vadd.f32 %v2404, %v1440
      %v2408 = vmax.f32 %v2405, 0.0
      %v2409 = vmax.f32 %v2406, 0.0
      %v2410 = vmax.f32 %v2407, 0.0
      %v2411 = vmin.f32 %v2408, 6.0
      %v2412 = vmin.f32 %v2409, 6.0
      %v2413 = vmin.f32 %v2410, 6.0
      %v2415 = vsel %vm450, %v2411, 0
      %v2418 = vsel %vm450, %v2412, 0
      %v2421 = vsel %vm450, %v2413, 0
      %2423 = vmatprep.subr.mxu0 0.0
      %2424 = vmatpush1.msra.mxu0 0.0
      %2425 = vmatprep.subr.mxu0 0.0
      %2426 = vmatpush1.msra.mxu0 0.0
      %2427 = vmatprep.subr.mxu0 0.0
      %2428 = vmatpush1.msra.mxu0 0.0
      %2429 = vmatprep.subr.mxu0 0.0
      %2430 = vmatpush1.msra.mxu0 0.0
      %2431 = vmatprep.subr.mxu0 0.0
      %2432 = vmatpush1.msra.mxu0 0.0
      %2433 = vmatprep.subr.mxu0 0.0
      %2434 = vmatpush1.msra.mxu0 0.0
      %2435 = vmatprep.subr.mxu0 0.0
      %2436 = vmatpush1.msra.mxu0 0.0
      %2437 = vmatprep.subr.mxu0 0.0
      %2438 = vmatpush1.msra.mxu0 0.0
      %2439 = vmatprep.subr.mxu0 0.0
      %2440 = vmatpush1.msra.mxu0 0.0
      %2441 = vmatprep.subr.mxu0 0.0
      %2442 = vmatpush1.msra.mxu0 0.0
      %2443 = vmatprep.subr.mxu0 0.0
      %2444 = vmatpush1.msra.mxu0 0.0
      %2445 = vmatprep.subr.mxu0 0.0
      %2446 = vmatpush1.msra.mxu0 0.0
      %2447 = vmatprep.subr.mxu0 0.0
      %2448 = vmatpush1.msra.mxu0 0.0
      %2449 = vmatprep.subr.mxu0 0.0
      %2450 = vmatpush1.msra.mxu0 0.0
      %2451 = vmatprep.subr.mxu0 0.0
      %2452 = vmatpush1.msra.mxu0 0.0
      %2453 = vmatprep.subr.mxu0 0.0
      %2454 = vmatpush1.msra.mxu0 %v324
      %2455 = vmatprep.subr.mxu0 0.0
      %2456 = vmatpush2.msra.mxu0 0.0
      %2457 = vmatprep.subr.mxu0 0.0
      %2458 = vmatpush2.msra.mxu0 0.0
      %2459 = vmatprep.subr.mxu0 0.0
      %2460 = vmatpush2.msra.mxu0 0.0
      %2461 = vmatprep.subr.mxu0 0.0
      %2462 = vmatpush2.msra.mxu0 0.0
      %2463 = vmatprep.subr.mxu0 0.0
      %2464 = vmatpush2.msra.mxu0 0.0
      %2465 = vmatprep.subr.mxu0 0.0
      %2466 = vmatpush2.msra.mxu0 0.0
      %2467 = vmatprep.subr.mxu0 0.0
      %2468 = vmatpush2.msra.mxu0 0.0
      %2469 = vmatprep.subr.mxu0 0.0
      %2470 = vmatpush2.msra.mxu0 0.0
      %2471 = vmatprep.subr.mxu0 0.0
      %2472 = vmatpush2.msra.mxu0 0.0
      %2473 = vmatprep.subr.mxu0 0.0
      %2474 = vmatpush2.msra.mxu0 0.0
      %2475 = vmatprep.subr.mxu0 0.0
      %2476 = vmatpush2.msra.mxu0 0.0
      %2477 = vmatprep.subr.mxu0 0.0
      %2478 = vmatpush2.msra.mxu0 0.0
      %2479 = vmatprep.subr.mxu0 0.0
      %2480 = vmatpush2.msra.mxu0 0.0
      %2481 = vmatprep.subr.mxu0 0.0
      %2482 = vmatpush2.msra.mxu0 0.0
      %2483 = vmatprep.subr.mxu0 0.0
      %2484 = vmatpush2.msra.mxu0 0.0
      %2485 = vmatprep.subr.mxu0 0.0
      %2486 = vmatpush2.msra.mxu0 0.0
      %2487 = vmatprep.mubr.f32.mxu0 0.0
      %2488 = vmatmul.mubr.f32.gmra.mxu0 %v2415
      %v2489 = vpop.f32.mrf.mxu0
      %v2490 = vadd.f32 %v1455, %v2489
      %v2491 = vpop.f32.mrf.mxu0
      %2492 = vmatprep.mubr.f32.mxu0 0.0
      %2493 = vmatmul.mubr.f32.gmra.mxu0 %v2418
      %v2494 = vpop.f32.mrf.mxu0
      %v2495 = vadd.f32 %v1455, %v2494
      %v2496 = vpop.f32.mrf.mxu0
      %2497 = vmatprep.mubr.f32.mxu0 0.0
      %2498 = vmatmul.mubr.f32.gmra.mxu0 %v2421
      %v2499 = vpop.f32.mrf.mxu0
      %v2500 = vadd.f32 %v1455, %v2499
      %v2501 = vpop.f32.mrf.mxu0
      %2502 = vdwg.mxu0
      %v2503 = vmax.f32 %v2490, 0.0
      %v2504 = vmax.f32 %v2495, 0.0
      %v2505 = vmax.f32 %v2500, 0.0
      %v2506 = vmin.f32 %v2503, 6.0
      %v2507 = vmin.f32 %v2504, 6.0
      %v2508 = vmin.f32 %v2505, 6.0
      %s2509 = scalar_lea.vmem %s302, 96
      %2510 = vst.msk [vmem:[%s2509 + $0x1] sm:$0xff] %vm450, %v2506
      %2511 = vst.msk [vmem:[%s2509 + $0x9] sm:$0xff] %vm450, %v2507
      %2512 = vst.msk [vmem:[%s2509 + $0x11] sm:$0x3] %vm1554, %v2508
      %2513 = vst.msk [vmem:[%s2509] sm:$0x1] %vm1556, %v1268
      %2514 = vst.msk [vmem:[%s2509 + $0x13] sm:$0x1] %vm1556, %v1268
      %v2515 = vld [vmem:[%s1031] sm:$0xff]
      %v2516 = vld [vmem:[%s1031 + $0x8] sm:$0xff]
      %v2517 = vld [vmem:[%s1031 + $0x10] sm:$0xf]
      %v2518 = vmul.f32 %v2515, %v1275
      %v2519 = vmul.f32 %v2516, %v1275
      %v2520 = vmul.f32 %v2517, %v1275
      %v2521 = vadd.f32 %v2518, 0.0
      %v2522 = vadd.f32 %v2519, 0.0
      %v2523 = vadd.f32 %v2520, 0.0
      %v2524 = vmul.f32 %v2515, %v1285
      %v2525 = vmul.f32 %v2516, %v1285
      %v2526 = vmul.f32 %v2517, %v1285
      %v2530 = vrot.slane %v2524, 1
      %v2531 = vrot.slane %v2525, 1
      %v2532 = vsel %vm1292, %v2530, %v2531
      %v2533 = vrot.slane %v2526, 1
      %v2534 = vsel %vm1292, %v2531, %v2533
      %v2538 = vadd.f32 %v2521, %v2532
      %v2539 = vadd.f32 %v2522, %v2534
      %v2540 = vadd.f32 %v2523, %v2533
      %v2541 = vmul.f32 %v2515, %v1307
      %v2542 = vmul.f32 %v2516, %v1307
      %v2543 = vmul.f32 %v2517, %v1307
      %v2547 = vrot.slane %v2541, 2
      %v2548 = vrot.slane %v2542, 2
      %v2549 = vsel %vm1314, %v2547, %v2548
      %v2550 = vrot.slane %v2543, 2
      %v2551 = vsel %vm1314, %v2548, %v2550
      %v2555 = vadd.f32 %v2538, %v2549
      %v2556 = vadd.f32 %v2539, %v2551
      %v2557 = vadd.f32 %v2540, %v2550
      %v2558 = vld [vmem:[%s1147] sm:$0xff]
      %v2559 = vld [vmem:[%s1147 + $0x8] sm:$0xff]
      %v2560 = vld [vmem:[%s1147 + $0x10] sm:$0xf]
      %v2561 = vmul.f32 %v2558, %v1332
      %v2562 = vmul.f32 %v2559, %v1332
      %v2563 = vmul.f32 %v2560, %v1332
      %v2564 = vadd.f32 %v2555, %v2561
      %v2565 = vadd.f32 %v2556, %v2562
      %v2566 = vadd.f32 %v2557, %v2563
      %v2567 = vmul.f32 %v2558, %v1342
      %v2568 = vmul.f32 %v2559, %v1342
      %v2569 = vmul.f32 %v2560, %v1342
      %v2573 = vrot.slane %v2567, 1
      %v2574 = vrot.slane %v2568, 1
      %v2575 = vsel %vm1292, %v2573, %v2574
      %v2576 = vrot.slane %v2569, 1
      %v2577 = vsel %vm1292, %v2574, %v2576
      %v2581 = vadd.f32 %v2564, %v2575
      %v2582 = vadd.f32 %v2565, %v2577
      %v2583 = vadd.f32 %v2566, %v2576
      %v2584 = vmul.f32 %v2558, %v1363
      %v2585 = vmul.f32 %v2559, %v1363
      %v2586 = vmul.f32 %v2560, %v1363
      %v2590 = vrot.slane %v2584, 2
      %v2591 = vrot.slane %v2585, 2
      %v2592 = vsel %vm1314, %v2590, %v2591
      %v2593 = vrot.slane %v2586, 2
      %v2594 = vsel %vm1314, %v2591, %v2593
      %v2598 = vadd.f32 %v2581, %v2592
      %v2599 = vadd.f32 %v2582, %v2594
      %v2600 = vadd.f32 %v2583, %v2593
      %v2601 = vld [vmem:[%s1263] sm:$0xff]
      %v2602 = vld [vmem:[%s1263 + $0x8] sm:$0xff]
      %v2603 = vld [vmem:[%s1263 + $0x10] sm:$0xf]
      %v2604 = vmul.f32 %v2601, %v1387
      %v2605 = vmul.f32 %v2602, %v1387
      %v2606 = vmul.f32 %v2603, %v1387
      %v2607 = vadd.f32 %v2598, %v2604
      %v2608 = vadd.f32 %v2599, %v2605
      %v2609 = vadd.f32 %v2600, %v2606
      %v2610 = vmul.f32 %v2601, %v1397
      %v2611 = vmul.f32 %v2602, %v1397
      %v2612 = vmul.f32 %v2603, %v1397
      %v2616 = vrot.slane %v2610, 1
      %v2617 = vrot.slane %v2611, 1
      %v2618 = vsel %vm1292, %v2616, %v2617
      %v2619 = vrot.slane %v2612, 1
      %v2620 = vsel %vm1292, %v2617, %v2619
      %v2624 = vadd.f32 %v2607, %v2618
      %v2625 = vadd.f32 %v2608, %v2620
      %v2626 = vadd.f32 %v2609, %v2619
      %v2627 = vmul.f32 %v2601, %v1418
      %v2628 = vmul.f32 %v2602, %v1418
      %v2629 = vmul.f32 %v2603, %v1418
      %v2633 = vrot.slane %v2627, 2
      %v2634 = vrot.slane %v2628, 2
      %v2635 = vsel %vm1314, %v2633, %v2634
      %v2636 = vrot.slane %v2629, 2
      %v2637 = vsel %vm1314, %v2634, %v2636
      %v2641 = vadd.f32 %v2624, %v2635
      %v2642 = vadd.f32 %v2625, %v2637
      %v2643 = vadd.f32 %v2626, %v2636
      %v2644 = vadd.f32 %v2641, %v1440
      %v2645 = vadd.f32 %v2642, %v1440
      %v2646 = vadd.f32 %v2643, %v1440
      %v2647 = vmax.f32 %v2644, 0.0
      %v2648 = vmax.f32 %v2645, 0.0
      %v2649 = vmax.f32 %v2646, 0.0
      %v2650 = vmin.f32 %v2647, 6.0
      %v2651 = vmin.f32 %v2648, 6.0
      %v2652 = vmin.f32 %v2649, 6.0
      %v2654 = vsel %vm450, %v2650, 0
      %v2657 = vsel %vm450, %v2651, 0
      %v2660 = vsel %vm450, %v2652, 0
      %2662 = vmatprep.subr.mxu0 0.0
      %2663 = vmatpush1.msra.mxu0 0.0
      %2664 = vmatprep.subr.mxu0 0.0
      %2665 = vmatpush1.msra.mxu0 0.0
      %2666 = vmatprep.subr.mxu0 0.0
      %2667 = vmatpush1.msra.mxu0 0.0
      %2668 = vmatprep.subr.mxu0 0.0
      %2669 = vmatpush1.msra.mxu0 0.0
      %2670 = vmatprep.subr.mxu0 0.0
      %2671 = vmatpush1.msra.mxu0 0.0
      %2672 = vmatprep.subr.mxu0 0.0
      %2673 = vmatpush1.msra.mxu0 0.0
      %2674 = vmatprep.subr.mxu0 0.0
      %2675 = vmatpush1.msra.mxu0 0.0
      %2676 = vmatprep.subr.mxu0 0.0
      %2677 = vmatpush1.msra.mxu0 0.0
      %2678 = vmatprep.subr.mxu0 0.0
      %2679 = vmatpush1.msra.mxu0 0.0
      %2680 = vmatprep.subr.mxu0 0.0
      %2681 = vmatpush1.msra.mxu0 0.0
      %2682 = vmatprep.subr.mxu0 0.0
      %2683 = vmatpush1.msra.mxu0 0.0
      %2684 = vmatprep.subr.mxu0 0.0
      %2685 = vmatpush1.msra.mxu0 0.0
      %2686 = vmatprep.subr.mxu0 0.0
      %2687 = vmatpush1.msra.mxu0 0.0
      %2688 = vmatprep.subr.mxu0 0.0
      %2689 = vmatpush1.msra.mxu0 0.0
      %2690 = vmatprep.subr.mxu0 0.0
      %2691 = vmatpush1.msra.mxu0 0.0
      %2692 = vmatprep.subr.mxu0 0.0
      %2693 = vmatpush1.msra.mxu0 %v324
      %2694 = vmatprep.subr.mxu0 0.0
      %2695 = vmatpush2.msra.mxu0 0.0
      %2696 = vmatprep.subr.mxu0 0.0
      %2697 = vmatpush2.msra.mxu0 0.0
      %2698 = vmatprep.subr.mxu0 0.0
      %2699 = vmatpush2.msra.mxu0 0.0
      %2700 = vmatprep.subr.mxu0 0.0
      %2701 = vmatpush2.msra.mxu0 0.0
      %2702 = vmatprep.subr.mxu0 0.0
      %2703 = vmatpush2.msra.mxu0 0.0
      %2704 = vmatprep.subr.mxu0 0.0
      %2705 = vmatpush2.msra.mxu0 0.0
      %2706 = vmatprep.subr.mxu0 0.0
      %2707 = vmatpush2.msra.mxu0 0.0
      %2708 = vmatprep.subr.mxu0 0.0
      %2709 = vmatpush2.msra.mxu0 0.0
      %2710 = vmatprep.subr.mxu0 0.0
      %2711 = vmatpush2.msra.mxu0 0.0
      %2712 = vmatprep.subr.mxu0 0.0
      %2713 = vmatpush2.msra.mxu0 0.0
      %2714 = vmatprep.subr.mxu0 0.0
      %2715 = vmatpush2.msra.mxu0 0.0
      %2716 = vmatprep.subr.mxu0 0.0
      %2717 = vmatpush2.msra.mxu0 0.0
      %2718 = vmatprep.subr.mxu0 0.0
      %2719 = vmatpush2.msra.mxu0 0.0
      %2720 = vmatprep.subr.mxu0 0.0
      %2721 = vmatpush2.msra.mxu0 0.0
      %2722 = vmatprep.subr.mxu0 0.0
      %2723 = vmatpush2.msra.mxu0 0.0
      %2724 = vmatprep.subr.mxu0 0.0
      %2725 = vmatpush2.msra.mxu0 0.0
      %2726 = vmatprep.mubr.f32.mxu0 0.0
      %2727 = vmatmul.mubr.f32.gmra.mxu0 %v2654
      %v2728 = vpop.f32.mrf.mxu0
      %v2729 = vadd.f32 %v1455, %v2728
      %v2730 = vpop.f32.mrf.mxu0
      %2731 = vmatprep.mubr.f32.mxu0 0.0
      %2732 = vmatmul.mubr.f32.gmra.mxu0 %v2657
      %v2733 = vpop.f32.mrf.mxu0
      %v2734 = vadd.f32 %v1455, %v2733
      %v2735 = vpop.f32.mrf.mxu0
      %2736 = vmatprep.mubr.f32.mxu0 0.0
      %2737 = vmatmul.mubr.f32.gmra.mxu0 %v2660
      %v2738 = vpop.f32.mrf.mxu0
      %v2739 = vadd.f32 %v1455, %v2738
      %v2740 = vpop.f32.mrf.mxu0
      %2741 = vdwg.mxu0
      %v2742 = vmax.f32 %v2729, 0.0
      %v2743 = vmax.f32 %v2734, 0.0
      %v2744 = vmax.f32 %v2739, 0.0
      %v2745 = vmin.f32 %v2742, 6.0
      %v2746 = vmin.f32 %v2743, 6.0
      %v2747 = vmin.f32 %v2744, 6.0
      %s2748 = scalar_lea.vmem %s302, 120
      %2749 = vst.msk [vmem:[%s2748 + $0x1] sm:$0xff] %vm450, %v2745
      %2750 = vst.msk [vmem:[%s2748 + $0x9] sm:$0xff] %vm450, %v2746
      %2751 = vst.msk [vmem:[%s2748 + $0x11] sm:$0x3] %vm1554, %v2747
      %2752 = vst.msk [vmem:[%s2748] sm:$0x1] %vm1556, %v1268
      %2753 = vst.msk [vmem:[%s2748 + $0x13] sm:$0x1] %vm1556, %v1268
      %s2754 = smul.u32 6, %s23
      %p2755 = scmp.lt.s32.totalorder %s22, 1
      %s2756 = scalar_select %p2755, %s22, 1
      %p2757 = scmp.lt.s32.totalorder %s2754, 17
      %s2758 = scalar_select %p2757, %s2754, 17
      %s2759 = smul.addr %s2758, 3
      %s2760 = smul.addr %s2756, 54
      %s2761 = sadd.s32 %s2759, %s2760
      %s2762 = smul.addr %s2761, 8
      %s2763 = scalar_lea.vmem %s7, %s2762
      // Predicated region
      $region49: #{inverted_residual_forward.1} parent=47 // pred_check
        %p2764 = pneg %p202
      $region50: #{inverted_residual_forward.1} parent=47 // pred_check_branch
        %2766 = sbr.rel (%p2764) target = $region52
      $region51: #{inverted_residual_forward.1} parent=47 // pred_region
        %s2767 = smul.u32 6, %s23
      $region52: #{inverted_residual_forward.1} parent=47 // pred_fallthru
        _
    $region48: #{inverted_residual_forward.1} parent=5 // pred_fallthru
      _
    %p2768 = scmp.le.s32.totalorder 2, %s13
    // Predicated region
    $region53: #{inverted_residual_forward.1} parent=5 // pred_check
      %p2769 = pneg %p2768
    $region54: #{inverted_residual_forward.1} parent=5 // pred_check_branch
      %2771 = sbr.rel (%p2769) target = $region56
    $region55: #{inverted_residual_forward.1} parent=5 // pred_region
      %s2772 = ssub.s32 %s13, 2
      // Predicated region
      $region57: #{inverted_residual_forward.1} parent=55 // pred_check
        %p2773 = pneg %p208
      $region58: #{inverted_residual_forward.1} parent=55 // pred_check_branch
        %2775 = sbr.rel (%p2773) target = $region60
      $region59: #{inverted_residual_forward.1} parent=55 // pred_region
        %s2776 = smul.u32 6, %s25
        %p2777 = scmp.lt.s32.totalorder %s24, 1
        %s2778 = scalar_select %p2777, %s24, 1
        %p2779 = scmp.lt.s32.totalorder %s2776, 17
        %s2780 = scalar_select %p2779, %s2776, 17
        %s2781 = smul.addr %s2780, 3
        %s2782 = smul.addr %s2778, 54
        %s2783 = sadd.s32 %s2781, %s2782
        %s2784 = smul.addr %s2783, 8
        %s2785 = scalar_lea.vmem %s7, %s2784
      $region60: #{inverted_residual_forward.1} parent=55 // pred_fallthru
        _
    $region56: #{inverted_residual_forward.1} parent=5 // pred_fallthru
      _
  $region6: #{inverted_residual_forward.1} parent=0 // loop_footer
    %s17 = sadd.s32 1, %s13
  $region7: #{inverted_residual_forward.1} parent=0 // loop_footer_branch
    %12 = sbr.rel target = $region3
  $region8: #{inverted_residual_forward.1} parent=0 // loop_exit
    _

</llo_original>
